<compile_context>
chip_gen: v5e
topology: v5e:2x2
jax: 0.10.0
libtpu: 0.0.40
codegen_flags: <defaults>
</compile_context>

<pallas_src>
import functools

import jax
import jax.numpy as jnp
from jax.experimental import pallas as pl
from jax.experimental.pallas import tpu as pltpu


def _round_up(x, m):
    return ((x + m - 1) // m) * m


def _attn_decoder_kernel(
    s_valid,        # static: number of real (unpadded) encoder positions
    # activations (padded)
    emb_ref,        # (Bp, Ep)      bf16  embedded input tokens
    h_last_ref,     # (Bp, Hp)      f32   hidden[-1]
    enc_ref,        # (Bp, Sp, Hp)  bf16  encoder_outputs.permute(1,0,2)
    # Attention2 params (pre-transposed, padded; y = x @ W_t + b)
    w_dec_t_ref,    # (Hp, Hp)  bf16
    b_dec_ref,      # (1, Hp)   f32
    w_enc_t_ref,    # (Hp, Hp)  bf16
    b_enc_ref,      # (1, Hp)   f32
    w_e_ref,        # (1, Hp)   bf16   energy weight row
    b_e_ref,        # (1, 1)    f32
    # GRU params (input weights split into embed/context halves, gates packed r|z|n,
    # padded per-gate so each gate occupies an aligned 128-lane block)
    w_ih_e_t_ref,   # (Ep, 3Hp) bf16
    w_ih_c_t_ref,   # (Hp, 3Hp) bf16
    b_ih_ref,       # (1, 3Hp)  f32
    w_hh_t_ref,     # (Hp, 3Hp) bf16
    b_hh_ref,       # (1, 3Hp)  f32
    # output Linear(2H -> O), split into hidden/context halves
    w_out_h_t_ref,  # (Hp, Op)  bf16
    w_out_c_t_ref,  # (Hp, Op)  bf16
    b_out_ref,      # (1, Op)   f32  (padded vocab entries pre-filled with -1e30)
    # outputs
    logp_ref,       # (Bp, Op)  f32
    h_new_ref,      # (Bp, Hp)  f32  (aliases h_last_ref's buffer)
    attn_ref,       # (Bp, Sp)  f32
):
    B, _ = emb_ref.shape
    Hp = h_last_ref.shape[1]
    Sp = enc_ref.shape[1]

    emb = emb_ref[...]                                       # bf16
    h_last = h_last_ref[...]                                 # f32
    h_last_bf = h_last.astype(jnp.bfloat16)
    enc = enc_ref[...]                                       # (B, Sp, Hp) bf16

    # ---- Attention2 ----------------------------------------------------------
    dec_proj = (
        jnp.dot(h_last_bf, w_dec_t_ref[...], preferred_element_type=jnp.float32)
        + b_dec_ref[...]
    )                                                        # (B, Hp) f32

    # NOTE: in a decode loop enc_proj is loop-invariant across steps and should be
    # precomputed once per sequence outside this per-step kernel; kept inline here
    # because this is a single forward pass.
    enc_flat = enc.reshape(B * Sp, Hp)
    enc_proj = (
        jnp.dot(enc_flat, w_enc_t_ref[...], preferred_element_type=jnp.float32)
        + b_enc_ref[...]
    ).reshape(B, Sp, Hp)                                     # f32

    e = jnp.tanh(dec_proj[:, None, :] + enc_proj)            # (B, Sp, Hp) f32 (EUP)
    e_bf = e.astype(jnp.bfloat16)

    # scores[b, s] = w_e . e[b, s, :]  -- batched MXU matvec: (B,1,Hp)x(B,Sp,Hp)->(B,1,Sp)
    w_e3 = jnp.broadcast_to(w_e_ref[...].reshape(1, 1, Hp), (B, 1, Hp))
    scores = jnp.einsum(
        "bkh,bsh->bks", w_e3, e_bf, preferred_element_type=jnp.float32
    ).reshape(B, Sp) + b_e_ref[...]

    # mask padded sequence positions, then softmax over S (dim=1 in torch)
    col = jax.lax.broadcasted_iota(jnp.int32, (B, Sp), 1)
    scores = jnp.where(col < s_valid, scores, -1e30)
    scores = scores - jnp.max(scores, axis=1, keepdims=True)
    ex = jnp.exp(scores)
    denom = jnp.sum(ex, axis=1, keepdims=True)
    attn = ex * pl.reciprocal(denom, approx=True)            # (B, Sp)
    attn_ref[...] = attn

    # context = bmm(attn, encoder_projected) -- batched MXU: (B,1,Sp)x(B,Sp,Hp)->(B,1,Hp)
    attn3 = attn.astype(jnp.bfloat16).reshape(B, 1, Sp)
    context = jnp.einsum(
        "bqs,bsh->bqh", attn3, enc_proj.astype(jnp.bfloat16),
        preferred_element_type=jnp.float32,
    ).reshape(B, Hp)                                         # (B, Hp) f32
    context_bf = context.astype(jnp.bfloat16)

    # ---- GRU cell (single layer, single time step) ---------------------------
    # rnn_input = cat(embedded, context); the split matmul avoids the lane concat.
    gi = (
        jnp.dot(emb, w_ih_e_t_ref[...], preferred_element_type=jnp.float32)
        + jnp.dot(context_bf, w_ih_c_t_ref[...], preferred_element_type=jnp.float32)
        + b_ih_ref[...]
    )                                                        # (B, 3Hp), gates r|z|n
    gh = (
        jnp.dot(h_last_bf, w_hh_t_ref[...], preferred_element_type=jnp.float32)
        + b_hh_ref[...]
    )
    r = jax.nn.sigmoid(gi[:, 0 * Hp:1 * Hp] + gh[:, 0 * Hp:1 * Hp])
    z = jax.nn.sigmoid(gi[:, 1 * Hp:2 * Hp] + gh[:, 1 * Hp:2 * Hp])
    n = jnp.tanh(gi[:, 2 * Hp:3 * Hp] + r * gh[:, 2 * Hp:3 * Hp])
    h_new = (1.0 - z) * n + z * h_last                       # (B, Hp) f32
    h_new_ref[...] = h_new

    # ---- out(cat(output, context)) + log_softmax -----------------------------
    logits = (
        jnp.dot(h_new.astype(jnp.bfloat16), w_out_h_t_ref[...],
                preferred_element_type=jnp.float32)
        + jnp.dot(context_bf, w_out_c_t_ref[...], preferred_element_type=jnp.float32)
        + b_out_ref[...]
    )                                       # (B, Op); padded vocab lanes ~ -1e30 via bias
    m = jnp.max(logits, axis=1, keepdims=True)
    lse = jnp.log(jnp.sum(jnp.exp(logits - m), axis=1, keepdims=True)) + m
    logp_ref[...] = logits - lse


def init_params(key, output_dim, embed_dim, hidden_dim):
    """Deterministic synthetic parameters with the same shapes/layout as the PyTorch module."""
    ks = jax.random.split(key, 16)
    u = lambda k, shape, scale: jax.random.uniform(
        k, shape, jnp.float32, minval=-scale, maxval=scale
    )
    H, E, O = hidden_dim, embed_dim, output_dim
    s_h = 1.0 / jnp.sqrt(H)
    s_2h = 1.0 / jnp.sqrt(2 * H)
    return dict(
        embed=u(ks[0], (O, E), 1.0),
        # Attention2
        w_dec=u(ks[1], (H, H), s_h), b_dec=u(ks[2], (H,), s_h),
        w_enc=u(ks[3], (H, H), s_h), b_enc=u(ks[4], (H,), s_h),
        w_e=u(ks[5], (1, H), s_h),   b_e=u(ks[6], (1,), s_h),
        # GRU (torch layout: weight_ih (3H, E+H), weight_hh (3H, H), gate order r|z|n)
        w_ih=u(ks[7], (3 * H, E + H), s_h), b_ih=u(ks[8], (3 * H,), s_h),
        w_hh=u(ks[9], (3 * H, H), s_h),     b_hh=u(ks[10], (3 * H,), s_h),
        # out Linear(2H, O)
        w_out=u(ks[11], (O, 2 * H), s_2h),  b_out=u(ks[12], (O,), s_2h),
    )


def prepare_params(params):
    """One-time weight re-layout: transpose / per-gate split / pad to (8,128) tiles / bf16."""
    O, E = params["embed"].shape
    H = params["w_dec"].shape[0]
    Hp, Ep, Op = _round_up(H, 128), _round_up(E, 128), _round_up(O, 128)
    f32, bf16 = jnp.float32, jnp.bfloat16

    def pad2(a, r, c):
        return jnp.pad(a, ((0, r - a.shape[0]), (0, c - a.shape[1])))

    def vec_row(v, n, fill=0.0):
        return jnp.pad(v, (0, n - v.shape[0]),
                       constant_values=fill).reshape(1, n).astype(f32)

    # GRU: split per gate (r|z|n), split input weights into embed/context halves,
    # pad each gate to Hp, then re-pack so every gate sits on an aligned 128-lane block.
    w_ih, w_hh, b_ih, b_hh = params["w_ih"], params["w_hh"], params["b_ih"], params["b_hh"]
    wie, wic, whh, bi, bh = [], [], [], [], []
    for g in range(3):
        wg = w_ih[g * H:(g + 1) * H]                       # (H, E+H)
        wie.append(pad2(wg[:, :E].T, Ep, Hp))              # (Ep, Hp)
        wic.append(pad2(wg[:, E:].T, Hp, Hp))              # (Hp, Hp)
        whh.append(pad2(w_hh[g * H:(g + 1) * H].T, Hp, Hp))
        bi.append(jnp.pad(b_ih[g * H:(g + 1) * H], (0, Hp - H)))
        bh.append(jnp.pad(b_hh[g * H:(g + 1) * H], (0, Hp - H)))

    return dict(
        embed=pad2(params["embed"], O, Ep).astype(bf16),        # (O, Ep)
        w_dec_t=pad2(params["w_dec"].T, Hp, Hp).astype(bf16),
        b_dec=vec_row(params["b_dec"], Hp),
        w_enc_t=pad2(params["w_enc"].T, Hp, Hp).astype(bf16),
        b_enc=vec_row(params["b_enc"], Hp),
        w_e=pad2(params["w_e"], 1, Hp).astype(bf16),            # (1, Hp)
        b_e=params["b_e"].reshape(1, 1).astype(f32),
        w_ih_e_t=jnp.concatenate(wie, axis=1).astype(bf16),     # (Ep, 3Hp)
        w_ih_c_t=jnp.concatenate(wic, axis=1).astype(bf16),     # (Hp, 3Hp)
        b_ih=jnp.concatenate(bi).reshape(1, 3 * Hp).astype(f32),
        w_hh_t=jnp.concatenate(whh, axis=1).astype(bf16),       # (Hp, 3Hp)
        b_hh=jnp.concatenate(bh).reshape(1, 3 * Hp).astype(f32),
        w_out_h_t=pad2(params["w_out"][:, :H].T, Hp, Op).astype(bf16),
        w_out_c_t=pad2(params["w_out"][:, H:].T, Hp, Op).astype(bf16),
        # padded vocab entries get a large-negative bias so they vanish in log-softmax
        b_out=vec_row(params["b_out"], Op, fill=-1e30),
    )


@jax.jit
def attn_decoder_forward(prepped, token_ids, hidden, encoder_outputs):
    """Mirrors AttnDecoderRNN.forward (GRU, n_layers=1, dropout=0)."""
    O = prepped["embed"].shape[0]
    Hp = prepped["w_dec_t"].shape[0]
    Op = prepped["b_out"].shape[1]
    B = token_ids.shape[0]
    S, _, H = encoder_outputs.shape
    Bp = max(8, _round_up(B, 8))
    Sp = _round_up(S, 128)

    # glue: embedding gather + activation padding (dropout p=0 -> identity)
    emb = jnp.take(prepped["embed"], token_ids, axis=0)            # (B, Ep) bf16
    emb = jnp.pad(emb, ((0, Bp - B), (0, 0)))
    h_last = jnp.pad(hidden[-1].astype(jnp.float32), ((0, Bp - B), (0, Hp - H)))
    enc = jnp.transpose(encoder_outputs, (1, 0, 2)).astype(jnp.bfloat16)
    enc = jnp.pad(enc, ((0, Bp - B), (0, Sp - S), (0, Hp - H)))

    vmem = pl.BlockSpec(memory_space=pltpu.MemorySpace.VMEM)
    kernel = functools.partial(_attn_decoder_kernel, S)
    logp_p, h_new_p, attn_p = pl.pallas_call(
        kernel,
        out_shape=(
            jax.ShapeDtypeStruct((Bp, Op), jnp.float32),
            jax.ShapeDtypeStruct((Bp, Hp), jnp.float32),
            jax.ShapeDtypeStruct((Bp, Sp), jnp.float32),
        ),
        in_specs=[vmem] * 17,
        out_specs=(vmem, vmem, vmem),
        input_output_aliases={1: 1},   # reuse the h_last buffer for h_new
        compiler_params=pltpu.CompilerParams(vmem_limit_bytes=32 * 1024 * 1024),
    )(
        emb, h_last, enc,
        prepped["w_dec_t"], prepped["b_dec"],
        prepped["w_enc_t"], prepped["b_enc"],
        prepped["w_e"], prepped["b_e"],
        prepped["w_ih_e_t"], prepped["w_ih_c_t"], prepped["b_ih"],
        prepped["w_hh_t"], prepped["b_hh"],
        prepped["w_out_h_t"], prepped["w_out_c_t"], prepped["b_out"],
    )

    # TODO(synk): n_layers > 1 (stacked GRU) would need a per-layer loop; module default is 1.
    logp = logp_p[:B, :O]
    new_hidden = h_new_p[:B, :H][None, :, :]                       # (1, B, H)
    attn = attn_p[:B, :S]
    return logp, new_hidden, attn


if __name__ == "__main__":
    B, S = 2, 8
    output_dim, embed_dim, hidden_dim = 32, 16, 32

    key = jax.random.PRNGKey(0)
    k_par, k_tok, k_hid, k_enc = jax.random.split(key, 4)

    params = init_params(k_par, output_dim, embed_dim, hidden_dim)
    prepped = prepare_params(params)            # one-time weight re-layout (hoisted)

    token_ids = jax.random.randint(k_tok, (B,), 0, output_dim, dtype=jnp.int32)
    hidden = jax.random.normal(k_hid, (1, B, hidden_dim), dtype=jnp.float32)
    encoder_outputs = jax.random.normal(k_enc, (S, B, hidden_dim), dtype=jnp.float32)

    logp, new_hidden, attn = attn_decoder_forward(prepped, token_ids, hidden, encoder_outputs)
    jax.block_until_ready((logp, new_hidden, attn))

    assert logp.shape == (B, output_dim)
    assert new_hidden.shape == (1, B, hidden_dim)
    assert attn.shape == (B, S)
    assert bool(jnp.all(jnp.isfinite(logp)))
    assert bool(jnp.all(jnp.isfinite(attn)))
    print("KERNEL_OK")
</pallas_src>

<mosaic_0001>
module attributes {stable_mosaic.version = 11 : i64} {
  func.func @_attn_decoder_kernel(%arg0: memref<8x128xbf16, #tpu.memory_space<vmem>>, %arg1: memref<8x128xf32, #tpu.memory_space<vmem>>, %arg2: memref<8x128x128xbf16, #tpu.memory_space<vmem>>, %arg3: memref<128x128xbf16, #tpu.memory_space<vmem>>, %arg4: memref<1x128xf32, #tpu.memory_space<vmem>>, %arg5: memref<128x128xbf16, #tpu.memory_space<vmem>>, %arg6: memref<1x128xf32, #tpu.memory_space<vmem>>, %arg7: memref<1x128xbf16, #tpu.memory_space<vmem>>, %arg8: memref<1x1xf32, #tpu.memory_space<vmem>>, %arg9: memref<128x384xbf16, #tpu.memory_space<vmem>>, %arg10: memref<128x384xbf16, #tpu.memory_space<vmem>>, %arg11: memref<1x384xf32, #tpu.memory_space<vmem>>, %arg12: memref<128x384xbf16, #tpu.memory_space<vmem>>, %arg13: memref<1x384xf32, #tpu.memory_space<vmem>>, %arg14: memref<128x128xbf16, #tpu.memory_space<vmem>>, %arg15: memref<128x128xbf16, #tpu.memory_space<vmem>>, %arg16: memref<1x128xf32, #tpu.memory_space<vmem>>, %arg17: memref<8x128xf32, #tpu.memory_space<vmem>>, %arg18: memref<8x128xf32, #tpu.memory_space<vmem>>, %arg19: memref<8x128xf32, #tpu.memory_space<vmem>>) attributes {dimension_semantics = [], scalar_prefetch = 0 : i64, scratch_operands = 0 : i64, tpu.core_type = #tpu.core_type<tc>} {
    %c0 = arith.constant 0 : index
    %c0_0 = arith.constant 0 : index
    %0 = vector.load %arg0[%c0, %c0_0] : memref<8x128xbf16, #tpu.memory_space<vmem>>, vector<8x128xbf16>
    %c0_1 = arith.constant 0 : index
    %c0_2 = arith.constant 0 : index
    %1 = vector.load %arg1[%c0_1, %c0_2] : memref<8x128xf32, #tpu.memory_space<vmem>>, vector<8x128xf32>
    %2 = arith.truncf %1 : vector<8x128xf32> to vector<8x128xbf16>
    %c0_3 = arith.constant 0 : index
    %c0_4 = arith.constant 0 : index
    %c0_5 = arith.constant 0 : index
    %3 = vector.load %arg2[%c0_3, %c0_4, %c0_5] : memref<8x128x128xbf16, #tpu.memory_space<vmem>>, vector<8x128x128xbf16>
    %c0_6 = arith.constant 0 : index
    %c0_7 = arith.constant 0 : index
    %4 = vector.load %arg3[%c0_6, %c0_7] : memref<128x128xbf16, #tpu.memory_space<vmem>>, vector<128x128xbf16>
    %cst = arith.constant dense<0.000000e+00> : vector<8x128xf32>
    %5 = tpu.matmul %2, %4, %cst {dimension_numbers = #tpu.dot_dimension_numbers<[1], [0], [0], [1], [0, 0, 1, 1], [], []>} : vector<8x128xbf16>, vector<128x128xbf16>, vector<8x128xf32> -> vector<8x128xf32>
    %c0_8 = arith.constant 0 : index
    %c0_9 = arith.constant 0 : index
    %6 = vector.load %arg4[%c0_8, %c0_9] : memref<1x128xf32, #tpu.memory_space<vmem>>, vector<1x128xf32>
    %7 = vector.broadcast %6 : vector<1x128xf32> to vector<8x128xf32>
    %8 = arith.addf %5, %7 : vector<8x128xf32>
    %9 = vector.shape_cast %3 : vector<8x128x128xbf16> to vector<1024x128xbf16>
    %c0_10 = arith.constant 0 : index
    %c0_11 = arith.constant 0 : index
    %10 = vector.load %arg5[%c0_10, %c0_11] : memref<128x128xbf16, #tpu.memory_space<vmem>>, vector<128x128xbf16>
    %cst_12 = arith.constant dense<0.000000e+00> : vector<1024x128xf32>
    %11 = tpu.matmul %9, %10, %cst_12 {dimension_numbers = #tpu.dot_dimension_numbers<[1], [0], [0], [1], [0, 0, 1, 1], [], []>} : vector<1024x128xbf16>, vector<128x128xbf16>, vector<1024x128xf32> -> vector<1024x128xf32>
    %c0_13 = arith.constant 0 : index
    %c0_14 = arith.constant 0 : index
    %12 = vector.load %arg6[%c0_13, %c0_14] : memref<1x128xf32, #tpu.memory_space<vmem>>, vector<1x128xf32>
    %13 = vector.broadcast %12 : vector<1x128xf32> to vector<1024x128xf32>
    %14 = arith.addf %11, %13 : vector<1024x128xf32>
    %15 = vector.shape_cast %14 : vector<1024x128xf32> to vector<8x128x128xf32>
    %16 = vector.shape_cast %8 : vector<8x128xf32> to vector<8x1x128xf32>
    %17 = vector.broadcast %16 : vector<8x1x128xf32> to vector<8x128x128xf32>
    %18 = arith.addf %17, %15 : vector<8x128x128xf32>
    %19 = math.tanh %18 : vector<8x128x128xf32>
    %20 = arith.truncf %19 : vector<8x128x128xf32> to vector<8x128x128xbf16>
    %c0_15 = arith.constant 0 : index
    %c0_16 = arith.constant 0 : index
    %21 = vector.load %arg7[%c0_15, %c0_16] : memref<1x128xbf16, #tpu.memory_space<vmem>>, vector<1x128xbf16>
    %22 = vector.shape_cast %21 : vector<1x128xbf16> to vector<1x1x128xbf16>
    %23 = vector.shape_cast %22 : vector<1x1x128xbf16> to vector<1x1x128xbf16>
    %24 = vector.broadcast %23 : vector<1x1x128xbf16> to vector<8x1x128xbf16>
    "tpu.trace_start"() <{level = 10 : i32, message = "bkh,bsh->bks"}> : () -> ()
    %cst_17 = arith.constant dense<0.000000e+00> : vector<8x1x128xf32>
    %25 = tpu.matmul %24, %20, %cst_17 {dimension_numbers = #tpu.dot_dimension_numbers<[2], [2], [1], [1], [0, 0, 0, 1, 1, 1], [0], [0]>} : vector<8x1x128xbf16>, vector<8x128x128xbf16>, vector<8x1x128xf32> -> vector<8x1x128xf32>
    "tpu.trace_stop"() : () -> ()
    %26 = vector.shape_cast %25 : vector<8x1x128xf32> to vector<8x128xf32>
    %c0_18 = arith.constant 0 : index
    %c0_19 = arith.constant 0 : index
    %27 = vector.load %arg8[%c0_18, %c0_19] : memref<1x1xf32, #tpu.memory_space<vmem>>, vector<1x1xf32>
    %28 = vector.broadcast %27 : vector<1x1xf32> to vector<8x128xf32>
    %29 = arith.addf %26, %28 : vector<8x128xf32>
    %30 = tpu.iota {dimensions = array<i32: 1>} : vector<8x128xi32>
    %c8_i32 = arith.constant 8 : i32
    %31 = vector.broadcast %c8_i32 : i32 to vector<8x128xi32>
    %32 = arith.cmpi slt, %30, %31 : vector<8x128xi32>
    %cst_20 = arith.constant -1.000000e+30 : f32
    %33 = vector.broadcast %cst_20 : f32 to vector<8x128xf32>
    %34 = arith.select %32, %29, %33 : vector<8x128xi1>, vector<8x128xf32>
    %cst_21 = arith.constant dense<0xFF800000> : vector<8xf32>
    %35 = vector.multi_reduction <maximumf>, %34, %cst_21 [1] : vector<8x128xf32> to vector<8xf32>
    %36 = vector.shape_cast %35 : vector<8xf32> to vector<8x1xf32>
    %37 = vector.broadcast %36 : vector<8x1xf32> to vector<8x128xf32>
    %38 = arith.subf %34, %37 : vector<8x128xf32>
    %39 = math.exp %38 : vector<8x128xf32>
    %cst_22 = arith.constant dense<0.000000e+00> : vector<8xf32>
    %40 = vector.multi_reduction <add>, %39, %cst_22 [1] : vector<8x128xf32> to vector<8xf32>
    %41 = vector.shape_cast %40 : vector<8xf32> to vector<8x1xf32>
    %42 = tpu.reciprocal %41 {approx = true} : vector<8x1xf32> -> vector<8x1xf32>
    %43 = vector.broadcast %42 : vector<8x1xf32> to vector<8x128xf32>
    %44 = arith.mulf %39, %43 : vector<8x128xf32>
    %c0_23 = arith.constant 0 : index
    %c0_24 = arith.constant 0 : index
    %45 = vector.load %arg19[%c0_23, %c0_24] : memref<8x128xf32, #tpu.memory_space<vmem>>, vector<8x128xf32>
    tpu.vector_store %arg19[%c0_23, %c0_24], %44 {strides = array<i32>} : memref<8x128xf32, #tpu.memory_space<vmem>>, vector<8x128xf32>,
    %46 = arith.truncf %44 : vector<8x128xf32> to vector<8x128xbf16>
    %47 = vector.shape_cast %46 : vector<8x128xbf16> to vector<8x1x128xbf16>
    %48 = arith.truncf %15 : vector<8x128x128xf32> to vector<8x128x128xbf16>
    "tpu.trace_start"() <{level = 10 : i32, message = "bqs,bsh->bqh"}> : () -> ()
    %cst_25 = arith.constant dense<0.000000e+00> : vector<8x1x128xf32>
    %49 = tpu.matmul %47, %48, %cst_25 {dimension_numbers = #tpu.dot_dimension_numbers<[2], [1], [1], [2], [0, 0, 0, 1, 1, 2], [0], [0]>} : vector<8x1x128xbf16>, vector<8x128x128xbf16>, vector<8x1x128xf32> -> vector<8x1x128xf32>
    "tpu.trace_stop"() : () -> ()
    %50 = vector.shape_cast %49 : vector<8x1x128xf32> to vector<8x128xf32>
    %51 = arith.truncf %50 : vector<8x128xf32> to vector<8x128xbf16>
    %c0_26 = arith.constant 0 : index
    %c0_27 = arith.constant 0 : index
    %52 = vector.load %arg9[%c0_26, %c0_27] : memref<128x384xbf16, #tpu.memory_space<vmem>>, vector<128x384xbf16>
    %cst_28 = arith.constant dense<0.000000e+00> : vector<8x384xf32>
    %53 = tpu.matmul %0, %52, %cst_28 {dimension_numbers = #tpu.dot_dimension_numbers<[1], [0], [0], [1], [0, 0, 1, 1], [], []>} : vector<8x128xbf16>, vector<128x384xbf16>, vector<8x384xf32> -> vector<8x384xf32>
    %c0_29 = arith.constant 0 : index
    %c0_30 = arith.constant 0 : index
    %54 = vector.load %arg10[%c0_29, %c0_30] : memref<128x384xbf16, #tpu.memory_space<vmem>>, vector<128x384xbf16>
    %cst_31 = arith.constant dense<0.000000e+00> : vector<8x384xf32>
    %55 = tpu.matmul %51, %54, %cst_31 {dimension_numbers = #tpu.dot_dimension_numbers<[1], [0], [0], [1], [0, 0, 1, 1], [], []>} : vector<8x128xbf16>, vector<128x384xbf16>, vector<8x384xf32> -> vector<8x384xf32>
    %56 = arith.addf %53, %55 : vector<8x384xf32>
    %c0_32 = arith.constant 0 : index
    %c0_33 = arith.constant 0 : index
    %57 = vector.load %arg11[%c0_32, %c0_33] : memref<1x384xf32, #tpu.memory_space<vmem>>, vector<1x384xf32>
    %58 = vector.broadcast %57 : vector<1x384xf32> to vector<8x384xf32>
    %59 = arith.addf %56, %58 : vector<8x384xf32>
    %c0_34 = arith.constant 0 : index
    %c0_35 = arith.constant 0 : index
    %60 = vector.load %arg12[%c0_34, %c0_35] : memref<128x384xbf16, #tpu.memory_space<vmem>>, vector<128x384xbf16>
    %cst_36 = arith.constant dense<0.000000e+00> : vector<8x384xf32>
    %61 = tpu.matmul %2, %60, %cst_36 {dimension_numbers = #tpu.dot_dimension_numbers<[1], [0], [0], [1], [0, 0, 1, 1], [], []>} : vector<8x128xbf16>, vector<128x384xbf16>, vector<8x384xf32> -> vector<8x384xf32>
    %c0_37 = arith.constant 0 : index
    %c0_38 = arith.constant 0 : index
    %62 = vector.load %arg13[%c0_37, %c0_38] : memref<1x384xf32, #tpu.memory_space<vmem>>, vector<1x384xf32>
    %63 = vector.broadcast %62 : vector<1x384xf32> to vector<8x384xf32>
    %64 = arith.addf %61, %63 : vector<8x384xf32>
    %65 = vector.extract_strided_slice %59 {offsets = [0, 0], sizes = [8, 128], strides = [1, 1]} : vector<8x384xf32> to vector<8x128xf32>
    %66 = vector.extract_strided_slice %64 {offsets = [0, 0], sizes = [8, 128], strides = [1, 1]} : vector<8x384xf32> to vector<8x128xf32>
    %67 = arith.addf %65, %66 : vector<8x128xf32>
    %68 = arith.negf %67 : vector<8x128xf32>
    %69 = math.exp %68 : vector<8x128xf32>
    %cst_39 = arith.constant 1.000000e+00 : f32
    %70 = vector.broadcast %cst_39 : f32 to vector<8x128xf32>
    %71 = arith.addf %70, %69 : vector<8x128xf32>
    %72 = arith.divf %70, %71 : vector<8x128xf32>
    %73 = vector.extract_strided_slice %59 {offsets = [0, 128], sizes = [8, 128], strides = [1, 1]} : vector<8x384xf32> to vector<8x128xf32>
    %74 = vector.extract_strided_slice %64 {offsets = [0, 128], sizes = [8, 128], strides = [1, 1]} : vector<8x384xf32> to vector<8x128xf32>
    %75 = arith.addf %73, %74 : vector<8x128xf32>
    %76 = arith.negf %75 : vector<8x128xf32>
    %77 = math.exp %76 : vector<8x128xf32>
    %cst_40 = arith.constant 1.000000e+00 : f32
    %78 = vector.broadcast %cst_40 : f32 to vector<8x128xf32>
    %79 = arith.addf %78, %77 : vector<8x128xf32>
    %80 = arith.divf %78, %79 : vector<8x128xf32>
    %81 = vector.extract_strided_slice %59 {offsets = [0, 256], sizes = [8, 128], strides = [1, 1]} : vector<8x384xf32> to vector<8x128xf32>
    %82 = vector.extract_strided_slice %64 {offsets = [0, 256], sizes = [8, 128], strides = [1, 1]} : vector<8x384xf32> to vector<8x128xf32>
    %83 = arith.mulf %72, %82 : vector<8x128xf32>
    %84 = arith.addf %81, %83 : vector<8x128xf32>
    %85 = math.tanh %84 : vector<8x128xf32>
    %cst_41 = arith.constant 1.000000e+00 : f32
    %86 = vector.broadcast %cst_41 : f32 to vector<8x128xf32>
    %87 = arith.subf %86, %80 : vector<8x128xf32>
    %88 = arith.mulf %87, %85 : vector<8x128xf32>
    %89 = arith.mulf %80, %1 : vector<8x128xf32>
    %90 = arith.addf %88, %89 : vector<8x128xf32>
    %c0_42 = arith.constant 0 : index
    %c0_43 = arith.constant 0 : index
    %91 = vector.load %arg18[%c0_42, %c0_43] : memref<8x128xf32, #tpu.memory_space<vmem>>, vector<8x128xf32>
    tpu.vector_store %arg18[%c0_42, %c0_43], %90 {strides = array<i32>} : memref<8x128xf32, #tpu.memory_space<vmem>>, vector<8x128xf32>,
    %92 = arith.truncf %90 : vector<8x128xf32> to vector<8x128xbf16>
    %c0_44 = arith.constant 0 : index
    %c0_45 = arith.constant 0 : index
    %93 = vector.load %arg14[%c0_44, %c0_45] : memref<128x128xbf16, #tpu.memory_space<vmem>>, vector<128x128xbf16>
    %cst_46 = arith.constant dense<0.000000e+00> : vector<8x128xf32>
    %94 = tpu.matmul %92, %93, %cst_46 {dimension_numbers = #tpu.dot_dimension_numbers<[1], [0], [0], [1], [0, 0, 1, 1], [], []>} : vector<8x128xbf16>, vector<128x128xbf16>, vector<8x128xf32> -> vector<8x128xf32>
    %c0_47 = arith.constant 0 : index
    %c0_48 = arith.constant 0 : index
    %95 = vector.load %arg15[%c0_47, %c0_48] : memref<128x128xbf16, #tpu.memory_space<vmem>>, vector<128x128xbf16>
    %cst_49 = arith.constant dense<0.000000e+00> : vector<8x128xf32>
    %96 = tpu.matmul %51, %95, %cst_49 {dimension_numbers = #tpu.dot_dimension_numbers<[1], [0], [0], [1], [0, 0, 1, 1], [], []>} : vector<8x128xbf16>, vector<128x128xbf16>, vector<8x128xf32> -> vector<8x128xf32>
    %97 = arith.addf %94, %96 : vector<8x128xf32>
    %c0_50 = arith.constant 0 : index
    %c0_51 = arith.constant 0 : index
    %98 = vector.load %arg16[%c0_50, %c0_51] : memref<1x128xf32, #tpu.memory_space<vmem>>, vector<1x128xf32>
    %99 = vector.broadcast %98 : vector<1x128xf32> to vector<8x128xf32>
    %100 = arith.addf %97, %99 : vector<8x128xf32>
    %cst_52 = arith.constant dense<0xFF800000> : vector<8xf32>
    %101 = vector.multi_reduction <maximumf>, %100, %cst_52 [1] : vector<8x128xf32> to vector<8xf32>
    %102 = vector.shape_cast %101 : vector<8xf32> to vector<8x1xf32>
    %103 = vector.broadcast %102 : vector<8x1xf32> to vector<8x128xf32>
    %104 = arith.subf %100, %103 : vector<8x128xf32>
    %105 = math.exp %104 : vector<8x128xf32>
    %cst_53 = arith.constant dense<0.000000e+00> : vector<8xf32>
    %106 = vector.multi_reduction <add>, %105, %cst_53 [1] : vector<8x128xf32> to vector<8xf32>
    %107 = vector.shape_cast %106 : vector<8xf32> to vector<8x1xf32>
    %108 = math.log %107 : vector<8x1xf32>
    %109 = arith.addf %108, %102 : vector<8x1xf32>
    %110 = vector.broadcast %109 : vector<8x1xf32> to vector<8x128xf32>
    %111 = arith.subf %100, %110 : vector<8x128xf32>
    %c0_54 = arith.constant 0 : index
    %c0_55 = arith.constant 0 : index
    %112 = vector.load %arg17[%c0_54, %c0_55] : memref<8x128xf32, #tpu.memory_space<vmem>>, vector<8x128xf32>
    tpu.vector_store %arg17[%c0_54, %c0_55], %111 {strides = array<i32>} : memref<8x128xf32, #tpu.memory_space<vmem>>, vector<8x128xf32>,
    return
  }
}

</mosaic_0001>

<llo_original>
// kernel: attn_decoder_forward.1
$region0: #{attn_decoder_forward.1}
  #allocation0 [shape = 'u32[]', space=smem, size = 0x4, offset = 0x4, fixed_abs, tag = 'smem constant byte address 0x4 - core index']
  #allocation1 [shape = 'u32[72,128]{1,0:T(1,128)}', space=vmem, size = 0x9000, scoped, tag = 'internal scratch']
  #allocation2 [shape = 'f32[1,1]{1,0:T(1,128)S(1)}', space=vmem, size = 0x200, scoped, tag = 'scoped memory for attn_decoder_forward.1']
  %s0 = inlined_call_operand.vmem [shape: bf16[8,128], index: 0, kind: input, shape index: {}]
  %s1 = inlined_call_operand.vmem [shape: f32[8,128], index: 1, kind: input, shape index: {}, may-alias: {1,18}]
  %s2 = inlined_call_operand.vmem [shape: bf16[8,128,128], index: 2, kind: input, shape index: {}]
  %s3 = inlined_call_operand.vmem [shape: bf16[128,128], index: 3, kind: input, shape index: {}]
  %s4 = inlined_call_operand.vmem [shape: f32[1,128], index: 4, kind: input, shape index: {}]
  %s5 = inlined_call_operand.vmem [shape: bf16[128,128], index: 5, kind: input, shape index: {}]
  %s6 = inlined_call_operand.vmem [shape: f32[1,128], index: 6, kind: input, shape index: {}]
  %s7 = inlined_call_operand.vmem [shape: bf16[1,128], index: 7, kind: input, shape index: {}]
  %s8 = inlined_call_operand.<no memory space> [shape: f32[1,1], index: 8, kind: input, shape index: {}]
  %s9 = inlined_call_operand.vmem [shape: bf16[128,384], index: 9, kind: input, shape index: {}]
  %s10 = inlined_call_operand.vmem [shape: bf16[128,384], index: 10, kind: input, shape index: {}]
  %s11 = inlined_call_operand.vmem [shape: f32[1,384], index: 11, kind: input, shape index: {}]
  %s12 = inlined_call_operand.hbm [shape: bf16[128,384], index: 12, kind: input, shape index: {}]
  %s13 = inlined_call_operand.vmem [shape: f32[1,384], index: 13, kind: input, shape index: {}]
  %s14 = inlined_call_operand.hbm [shape: bf16[128,128], index: 14, kind: input, shape index: {}]
  %s15 = inlined_call_operand.hbm [shape: bf16[128,128], index: 15, kind: input, shape index: {}]
  %s16 = inlined_call_operand.vmem [shape: f32[1,128], index: 16, kind: input, shape index: {}]
  %s17 = inlined_call_operand.vmem [shape: f32[8,128], index: 17, kind: output, shape index: {0}]
  %s18 = inlined_call_operand.vmem [shape: f32[8,128], index: 18, kind: output, shape index: {1}, may-alias: {1,18}]
  %s19 = inlined_call_operand.vmem [shape: f32[8,128], index: 19, kind: output, shape index: {2}]
  %20 = xla_tuple %s17, %s18, %s19
  %s21 = sld [smem:[#allocation0]]
  $region106: #{attn_decoder_forward.1} parent=0
    _
  %s23 = ssub.s32 1, %s21
  %s24 = scalar_select 0, %s23, %s21
  %v25 = vstv %s8
  %26 = vst [vmem:[#allocation2] sm:$0x1] %v25
  $region1: #{attn_decoder_forward.1} parent=0
    #allocation3 [shape = 'u8[98304]{0}', space=vmem, size = 0x18000, scoped, tag = 'input window, operand 12, single buffered']
    #allocation4 [shape = 's32[1]{0}', space=sflag, size = 0x4, scoped, tag = 'scoped memory for attn_decoder_forward.1']
    #allocation5 [shape = 'u8[32768]{0}', space=vmem, size = 0x8000, scoped, tag = 'input window, operand 14, single buffered']
    #allocation6 [shape = 's32[1]{0}', space=sflag, size = 0x4, scoped, tag = 'scoped memory for attn_decoder_forward.1']
    #allocation7 [shape = 'u8[32768]{0}', space=vmem, size = 0x8000, scoped, tag = 'input window, operand 15, single buffered']
    %27 = vsyncpa [#allocation4], 0
    %28 = vsyncpa [#allocation6], 0
    // Predicated region
    $region2: #{attn_decoder_forward.1} parent=1 // pred_check
      _
    $region3: #{attn_decoder_forward.1} parent=1 // pred_check_branch
      %30 = sbr.rel (0) target = $region5
    $region4: #{attn_decoder_forward.1} parent=1 // pred_region
      _
    $region5: #{attn_decoder_forward.1} parent=1 // pred_fallthru
      _
    // Predicated region
    $region6: #{attn_decoder_forward.1} parent=1 // pred_check
      _
    $region7: #{attn_decoder_forward.1} parent=1 // pred_check_branch
      %32 = sbr.rel (0) target = $region9
    $region8: #{attn_decoder_forward.1} parent=1 // pred_region
      _
    $region9: #{attn_decoder_forward.1} parent=1 // pred_fallthru
      _
    // Predicated region
    $region10: #{attn_decoder_forward.1} parent=1 // pred_check
      _
    $region11: #{attn_decoder_forward.1} parent=1 // pred_check_branch
      %34 = sbr.rel (0) target = $region13
    $region12: #{attn_decoder_forward.1} parent=1 // pred_region
      _
    $region13: #{attn_decoder_forward.1} parent=1 // pred_fallthru
      _
    // Predicated region
    $region14: #{attn_decoder_forward.1} parent=1 // pred_check
      _
    $region15: #{attn_decoder_forward.1} parent=1 // pred_check_branch
      %36 = sbr.rel (0) target = $region17
    $region16: #{attn_decoder_forward.1} parent=1 // pred_region
      _
    $region17: #{attn_decoder_forward.1} parent=1 // pred_fallthru
      _
    // Predicated region
    $region18: #{attn_decoder_forward.1} parent=1 // pred_check
      _
    $region19: #{attn_decoder_forward.1} parent=1 // pred_check_branch
      %38 = sbr.rel (0) target = $region21
    $region20: #{attn_decoder_forward.1} parent=1 // pred_region
      _
    $region21: #{attn_decoder_forward.1} parent=1 // pred_fallthru
      _
    // Predicated region
    $region22: #{attn_decoder_forward.1} parent=1 // pred_check
      _
    $region23: #{attn_decoder_forward.1} parent=1 // pred_check_branch
      %40 = sbr.rel (0) target = $region25
    $region24: #{attn_decoder_forward.1} parent=1 // pred_region
      _
    $region25: #{attn_decoder_forward.1} parent=1 // pred_fallthru
      _
    // Predicated region
    $region26: #{attn_decoder_forward.1} parent=1 // pred_check
      _
    $region27: #{attn_decoder_forward.1} parent=1 // pred_check_branch
      %42 = sbr.rel (0) target = $region29
    $region28: #{attn_decoder_forward.1} parent=1 // pred_region
      _
    $region29: #{attn_decoder_forward.1} parent=1 // pred_fallthru
      _
    // Predicated region
    $region30: #{attn_decoder_forward.1} parent=1 // pred_check
      _
    $region31: #{attn_decoder_forward.1} parent=1 // pred_check_branch
      %44 = sbr.rel (0) target = $region33
    $region32: #{attn_decoder_forward.1} parent=1 // pred_region
      _
    $region33: #{attn_decoder_forward.1} parent=1 // pred_fallthru
      _
    // Predicated region
    $region34: #{attn_decoder_forward.1} parent=1 // pred_check
      _
    $region35: #{attn_decoder_forward.1} parent=1 // pred_check_branch
      %46 = sbr.rel (0) target = $region37
    $region36: #{attn_decoder_forward.1} parent=1 // pred_region
      _
    $region37: #{attn_decoder_forward.1} parent=1 // pred_fallthru
      _
    // Predicated region
    $region38: #{attn_decoder_forward.1} parent=1 // pred_check
      _
    $region39: #{attn_decoder_forward.1} parent=1 // pred_check_branch
      %48 = sbr.rel (0) target = $region41
    $region40: #{attn_decoder_forward.1} parent=1 // pred_region
      _
    $region41: #{attn_decoder_forward.1} parent=1 // pred_fallthru
      _
    // Predicated region
    $region42: #{attn_decoder_forward.1} parent=1 // pred_check
      _
    $region43: #{attn_decoder_forward.1} parent=1 // pred_check_branch
      %50 = sbr.rel (0) target = $region45
    $region44: #{attn_decoder_forward.1} parent=1 // pred_region
      _
    $region45: #{attn_decoder_forward.1} parent=1 // pred_fallthru
      _
    // Predicated region
    $region46: #{attn_decoder_forward.1} parent=1 // pred_check
      _
    $region47: #{attn_decoder_forward.1} parent=1 // pred_check_branch
      %52 = sbr.rel (0) target = $region49
    $region48: #{attn_decoder_forward.1} parent=1 // pred_region
      _
    $region49: #{attn_decoder_forward.1} parent=1 // pred_fallthru
      _
    // Predicated region
    $region50: #{attn_decoder_forward.1} parent=1 // pred_check
      _
    $region51: #{attn_decoder_forward.1} parent=1 // pred_check_branch
      %54 = sbr.rel (0) target = $region53
    $region52: #{attn_decoder_forward.1} parent=1 // pred_region
      %56 = vsyncadd [#allocation4], 0
      %s57 = sshll.u32 %s12, 4
      %s58 = int_to_ptr.hbm [resolvable:$true] %s57
      %s59 = sshll.u32 [#allocation3], 4
      %s60 = int_to_ptr.vmem [resolvable:$true] %s59
      %65 = dma.hbm_to_vmem [thread:$0]  %s58, 3072, %s60, [#allocation4], 192, 192, 12
    $region53: #{attn_decoder_forward.1} parent=1 // pred_fallthru
      _
    // Predicated region
    $region54: #{attn_decoder_forward.1} parent=1 // pred_check
      _
    $region55: #{attn_decoder_forward.1} parent=1 // pred_check_branch
      %67 = sbr.rel (0) target = $region57
    $region56: #{attn_decoder_forward.1} parent=1 // pred_region
      _
    $region57: #{attn_decoder_forward.1} parent=1 // pred_fallthru
      _
    // Predicated region
    $region58: #{attn_decoder_forward.1} parent=1 // pred_check
      _
    $region59: #{attn_decoder_forward.1} parent=1 // pred_check_branch
      %69 = sbr.rel (0) target = $region61
    $region60: #{attn_decoder_forward.1} parent=1 // pred_region
      %71 = vsyncadd [#allocation6], 0
      %s72 = sshll.u32 %s14, 4
      %s73 = int_to_ptr.hbm [resolvable:$true] %s72
      %s74 = sshll.u32 [#allocation5], 4
      %s75 = int_to_ptr.vmem [resolvable:$true] %s74
      %80 = dma.hbm_to_vmem [thread:$0]  %s73, 1024, %s75, [#allocation6], 64, 64, 4
    $region61: #{attn_decoder_forward.1} parent=1 // pred_fallthru
      _
    // Predicated region
    $region62: #{attn_decoder_forward.1} parent=1 // pred_check
      _
    $region63: #{attn_decoder_forward.1} parent=1 // pred_check_branch
      %82 = sbr.rel (0) target = $region65
    $region64: #{attn_decoder_forward.1} parent=1 // pred_region
      %84 = vsyncadd [#allocation6], 0
      %s85 = sshll.u32 %s15, 4
      %s86 = int_to_ptr.hbm [resolvable:$true] %s85
      %s87 = sshll.u32 [#allocation7], 4
      %s88 = int_to_ptr.vmem [resolvable:$true] %s87
      %93 = dma.hbm_to_vmem [thread:$0]  %s86, 1024, %s88, [#allocation6], 64, 64, 4
    $region65: #{attn_decoder_forward.1} parent=1 // pred_fallthru
      _
    // Predicated region
    $region66: #{attn_decoder_forward.1} parent=1 // pred_check
      _
    $region67: #{attn_decoder_forward.1} parent=1 // pred_check_branch
      %95 = sbr.rel (0) target = $region69
    $region68: #{attn_decoder_forward.1} parent=1 // pred_region
      _
    $region69: #{attn_decoder_forward.1} parent=1 // pred_fallthru
      _
    // Predicated region
    $region70: #{attn_decoder_forward.1} parent=1 // pred_check
      _
    $region71: #{attn_decoder_forward.1} parent=1 // pred_check_branch
      %97 = sbr.rel (0) target = $region73
    $region72: #{attn_decoder_forward.1} parent=1 // pred_region
      %99 = dma.done [#allocation4], 3072
    $region73: #{attn_decoder_forward.1} parent=1 // pred_fallthru
      _
    // Predicated region
    $region74: #{attn_decoder_forward.1} parent=1 // pred_check
      _
    $region75: #{attn_decoder_forward.1} parent=1 // pred_check_branch
      %101 = sbr.rel (0) target = $region77
    $region76: #{attn_decoder_forward.1} parent=1 // pred_region
      %103 = dma.done [#allocation6], 1024
    $region77: #{attn_decoder_forward.1} parent=1 // pred_fallthru
      _
    // Predicated region
    $region78: #{attn_decoder_forward.1} parent=1 // pred_check
      _
    $region79: #{attn_decoder_forward.1} parent=1 // pred_check_branch
      %105 = sbr.rel (0) target = $region81
    $region80: #{attn_decoder_forward.1} parent=1 // pred_region
      %107 = dma.done [#allocation6], 1024
    $region81: #{attn_decoder_forward.1} parent=1 // pred_fallthru
      _
    %v108 = vld [vmem:[%s0] sm:$0xf]
    %v109 = vld [vmem:[%s1] sm:$0xff]
    %v110 = vpack.c.bf16 %v109, %v109
    %v111 = vld [vmem:[%s2] sm:$0xf]
    %v112 = vld [vmem:[%s2 + $0x4] sm:$0xf]
    %v113 = vld [vmem:[%s2 + $0x8] sm:$0xf]
    %v114 = vld [vmem:[%s2 + $0xc] sm:$0xf]
    %v115 = vld [vmem:[%s2 + $0x10] sm:$0xf]
    %v116 = vld [vmem:[%s2 + $0x14] sm:$0xf]
    %v117 = vld [vmem:[%s2 + $0x18] sm:$0xf]
    %v118 = vld [vmem:[%s2 + $0x1c] sm:$0xf]
    %v119 = vld [vmem:[%s2 + $0x20] sm:$0xf]
    %v120 = vld [vmem:[%s2 + $0x24] sm:$0xf]
    %v121 = vld [vmem:[%s2 + $0x28] sm:$0xf]
    %v122 = vld [vmem:[%s2 + $0x2c] sm:$0xf]
    %v123 = vld [vmem:[%s2 + $0x30] sm:$0xf]
    %v124 = vld [vmem:[%s2 + $0x34] sm:$0xf]
    %v125 = vld [vmem:[%s2 + $0x38] sm:$0xf]
    %v126 = vld [vmem:[%s2 + $0x3c] sm:$0xf]
    %v127 = vld [vmem:[%s2 + $0x40] sm:$0xf]
    %v128 = vld [vmem:[%s2 + $0x44] sm:$0xf]
    %v129 = vld [vmem:[%s2 + $0x48] sm:$0xf]
    %v130 = vld [vmem:[%s2 + $0x4c] sm:$0xf]
    %v131 = vld [vmem:[%s2 + $0x50] sm:$0xf]
    %v132 = vld [vmem:[%s2 + $0x54] sm:$0xf]
    %v133 = vld [vmem:[%s2 + $0x58] sm:$0xf]
    %v134 = vld [vmem:[%s2 + $0x5c] sm:$0xf]
    %v135 = vld [vmem:[%s2 + $0x60] sm:$0xf]
    %v136 = vld [vmem:[%s2 + $0x64] sm:$0xf]
    %v137 = vld [vmem:[%s2 + $0x68] sm:$0xf]
    %v138 = vld [vmem:[%s2 + $0x6c] sm:$0xf]
    %v139 = vld [vmem:[%s2 + $0x70] sm:$0xf]
    %v140 = vld [vmem:[%s2 + $0x74] sm:$0xf]
    %v141 = vld [vmem:[%s2 + $0x78] sm:$0xf]
    %v142 = vld [vmem:[%s2 + $0x7c] sm:$0xf]
    %v143 = vld [vmem:[%s2 + $0x80] sm:$0xf]
    %v144 = vld [vmem:[%s2 + $0x84] sm:$0xf]
    %v145 = vld [vmem:[%s2 + $0x88] sm:$0xf]
    %v146 = vld [vmem:[%s2 + $0x8c] sm:$0xf]
    %v147 = vld [vmem:[%s2 + $0x90] sm:$0xf]
    %v148 = vld [vmem:[%s2 + $0x94] sm:$0xf]
    %v149 = vld [vmem:[%s2 + $0x98] sm:$0xf]
    %v150 = vld [vmem:[%s2 + $0x9c] sm:$0xf]
    %v151 = vld [vmem:[%s2 + $0xa0] sm:$0xf]
    %v152 = vld [vmem:[%s2 + $0xa4] sm:$0xf]
    %v153 = vld [vmem:[%s2 + $0xa8] sm:$0xf]
    %v154 = vld [vmem:[%s2 + $0xac] sm:$0xf]
    %v155 = vld [vmem:[%s2 + $0xb0] sm:$0xf]
    %v156 = vld [vmem:[%s2 + $0xb4] sm:$0xf]
    %v157 = vld [vmem:[%s2 + $0xb8] sm:$0xf]
    %v158 = vld [vmem:[%s2 + $0xbc] sm:$0xf]
    %v159 = vld [vmem:[%s2 + $0xc0] sm:$0xf]
    %v160 = vld [vmem:[%s2 + $0xc4] sm:$0xf]
    %v161 = vld [vmem:[%s2 + $0xc8] sm:$0xf]
    %v162 = vld [vmem:[%s2 + $0xcc] sm:$0xf]
    %v163 = vld [vmem:[%s2 + $0xd0] sm:$0xf]
    %v164 = vld [vmem:[%s2 + $0xd4] sm:$0xf]
    %v165 = vld [vmem:[%s2 + $0xd8] sm:$0xf]
    %v166 = vld [vmem:[%s2 + $0xdc] sm:$0xf]
    %v167 = vld [vmem:[%s2 + $0xe0] sm:$0xf]
    %v168 = vld [vmem:[%s2 + $0xe4] sm:$0xf]
    %v169 = vld [vmem:[%s2 + $0xe8] sm:$0xf]
    %v170 = vld [vmem:[%s2 + $0xec] sm:$0xf]
    %v171 = vld [vmem:[%s2 + $0xf0] sm:$0xf]
    %v172 = vld [vmem:[%s2 + $0xf4] sm:$0xf]
    %v173 = vld [vmem:[%s2 + $0xf8] sm:$0xf]
    %v174 = vld [vmem:[%s2 + $0xfc] sm:$0xf]
    %v175 = vld [vmem:[%s2 + $0x100] sm:$0xf]
    %v176 = vld [vmem:[%s2 + $0x104] sm:$0xf]
    %v177 = vld [vmem:[%s2 + $0x108] sm:$0xf]
    %v178 = vld [vmem:[%s2 + $0x10c] sm:$0xf]
    %v179 = vld [vmem:[%s2 + $0x110] sm:$0xf]
    %v180 = vld [vmem:[%s2 + $0x114] sm:$0xf]
    %v181 = vld [vmem:[%s2 + $0x118] sm:$0xf]
    %v182 = vld [vmem:[%s2 + $0x11c] sm:$0xf]
    %v183 = vld [vmem:[%s2 + $0x120] sm:$0xf]
    %v184 = vld [vmem:[%s2 + $0x124] sm:$0xf]
    %v185 = vld [vmem:[%s2 + $0x128] sm:$0xf]
    %v186 = vld [vmem:[%s2 + $0x12c] sm:$0xf]
    %v187 = vld [vmem:[%s2 + $0x130] sm:$0xf]
    %v188 = vld [vmem:[%s2 + $0x134] sm:$0xf]
    %v189 = vld [vmem:[%s2 + $0x138] sm:$0xf]
    %v190 = vld [vmem:[%s2 + $0x13c] sm:$0xf]
    %v191 = vld [vmem:[%s2 + $0x140] sm:$0xf]
    %v192 = vld [vmem:[%s2 + $0x144] sm:$0xf]
    %v193 = vld [vmem:[%s2 + $0x148] sm:$0xf]
    %v194 = vld [vmem:[%s2 + $0x14c] sm:$0xf]
    %v195 = vld [vmem:[%s2 + $0x150] sm:$0xf]
    %v196 = vld [vmem:[%s2 + $0x154] sm:$0xf]
    %v197 = vld [vmem:[%s2 + $0x158] sm:$0xf]
    %v198 = vld [vmem:[%s2 + $0x15c] sm:$0xf]
    %v199 = vld [vmem:[%s2 + $0x160] sm:$0xf]
    %v200 = vld [vmem:[%s2 + $0x164] sm:$0xf]
    %v201 = vld [vmem:[%s2 + $0x168] sm:$0xf]
    %v202 = vld [vmem:[%s2 + $0x16c] sm:$0xf]
    %v203 = vld [vmem:[%s2 + $0x170] sm:$0xf]
    %v204 = vld [vmem:[%s2 + $0x174] sm:$0xf]
    %v205 = vld [vmem:[%s2 + $0x178] sm:$0xf]
    %v206 = vld [vmem:[%s2 + $0x17c] sm:$0xf]
    %v207 = vld [vmem:[%s2 + $0x180] sm:$0xf]
    %v208 = vld [vmem:[%s2 + $0x184] sm:$0xf]
    %v209 = vld [vmem:[%s2 + $0x188] sm:$0xf]
    %v210 = vld [vmem:[%s2 + $0x18c] sm:$0xf]
    %v211 = vld [vmem:[%s2 + $0x190] sm:$0xf]
    %v212 = vld [vmem:[%s2 + $0x194] sm:$0xf]
    %v213 = vld [vmem:[%s2 + $0x198] sm:$0xf]
    %v214 = vld [vmem:[%s2 + $0x19c] sm:$0xf]
    %v215 = vld [vmem:[%s2 + $0x1a0] sm:$0xf]
    %v216 = vld [vmem:[%s2 + $0x1a4] sm:$0xf]
    %v217 = vld [vmem:[%s2 + $0x1a8] sm:$0xf]
    %v218 = vld [vmem:[%s2 + $0x1ac] sm:$0xf]
    %v219 = vld [vmem:[%s2 + $0x1b0] sm:$0xf]
    %v220 = vld [vmem:[%s2 + $0x1b4] sm:$0xf]
    %v221 = vld [vmem:[%s2 + $0x1b8] sm:$0xf]
    %v222 = vld [vmem:[%s2 + $0x1bc] sm:$0xf]
    %v223 = vld [vmem:[%s2 + $0x1c0] sm:$0xf]
    %v224 = vld [vmem:[%s2 + $0x1c4] sm:$0xf]
    %v225 = vld [vmem:[%s2 + $0x1c8] sm:$0xf]
    %v226 = vld [vmem:[%s2 + $0x1cc] sm:$0xf]
    %v227 = vld [vmem:[%s2 + $0x1d0] sm:$0xf]
    %v228 = vld [vmem:[%s2 + $0x1d4] sm:$0xf]
    %v229 = vld [vmem:[%s2 + $0x1d8] sm:$0xf]
    %v230 = vld [vmem:[%s2 + $0x1dc] sm:$0xf]
    %v231 = vld [vmem:[%s2 + $0x1e0] sm:$0xf]
    %v232 = vld [vmem:[%s2 + $0x1e4] sm:$0xf]
    %v233 = vld [vmem:[%s2 + $0x1e8] sm:$0xf]
    %v234 = vld [vmem:[%s2 + $0x1ec] sm:$0xf]
    %v235 = vld [vmem:[%s2 + $0x1f0] sm:$0xf]
    %v236 = vld [vmem:[%s2 + $0x1f4] sm:$0xf]
    %v237 = vld [vmem:[%s2 + $0x1f8] sm:$0xf]
    %v238 = vld [vmem:[%s2 + $0x1fc] sm:$0xf]
    %v239 = vld [vmem:[%s3] sm:$0xf]
    %v240 = vld [vmem:[%s3 + $0x4] sm:$0xf]
    %v241 = vld [vmem:[%s3 + $0x8] sm:$0xf]
    %v242 = vld [vmem:[%s3 + $0xc] sm:$0xf]
    %v243 = vld [vmem:[%s3 + $0x10] sm:$0xf]
    %v244 = vld [vmem:[%s3 + $0x14] sm:$0xf]
    %v245 = vld [vmem:[%s3 + $0x18] sm:$0xf]
    %v246 = vld [vmem:[%s3 + $0x1c] sm:$0xf]
    %v247 = vld [vmem:[%s3 + $0x20] sm:$0xf]
    %v248 = vld [vmem:[%s3 + $0x24] sm:$0xf]
    %v249 = vld [vmem:[%s3 + $0x28] sm:$0xf]
    %v250 = vld [vmem:[%s3 + $0x2c] sm:$0xf]
    %v251 = vld [vmem:[%s3 + $0x30] sm:$0xf]
    %v252 = vld [vmem:[%s3 + $0x34] sm:$0xf]
    %v253 = vld [vmem:[%s3 + $0x38] sm:$0xf]
    %v254 = vld [vmem:[%s3 + $0x3c] sm:$0xf]
    %v255 = vld [vmem:[%s4] sm:$0x1]
    %v257 = vperm.slane %v255, 0
    %v275 = vunpack.c.l.b16 %v239
    %v276 = vunpack.c.l.b16 %v240
    %v277 = vunpack.c.l.b16 %v241
    %v278 = vunpack.c.l.b16 %v242
    %v279 = vunpack.c.l.b16 %v243
    %v280 = vunpack.c.l.b16 %v244
    %v281 = vunpack.c.l.b16 %v245
    %v282 = vunpack.c.l.b16 %v246
    %v283 = vunpack.c.l.b16 %v247
    %v284 = vunpack.c.l.b16 %v248
    %v285 = vunpack.c.l.b16 %v249
    %v286 = vunpack.c.l.b16 %v250
    %v287 = vunpack.c.l.b16 %v251
    %v288 = vunpack.c.l.b16 %v252
    %v289 = vunpack.c.l.b16 %v253
    %v290 = vunpack.c.l.b16 %v254
    %v291 = vpack.c.b16 %v276, %v275
    %v292 = vpack.c.b16 %v278, %v277
    %v293 = vpack.c.b16 %v280, %v279
    %v294 = vpack.c.b16 %v282, %v281
    %v295 = vpack.c.b16 %v284, %v283
    %v296 = vpack.c.b16 %v286, %v285
    %v297 = vpack.c.b16 %v288, %v287
    %v298 = vpack.c.b16 %v290, %v289
    %307 = vmatpush.bf16.msra.mxu0 %v298
    %308 = vmatpush.bf16.msra.mxu0 %v297
    %309 = vmatpush.bf16.msra.mxu0 %v296
    %310 = vmatpush.bf16.msra.mxu0 %v295
    %311 = vmatpush.bf16.msra.mxu0 %v294
    %312 = vmatpush.bf16.msra.mxu0 %v293
    %313 = vmatpush.bf16.msra.mxu0 %v292
    %314 = vmatpush.bf16.msra.mxu0 %v291
    %315 = vmatmul.bf16.gmra.mxu0 %v110
    %v316 = vpop.f32.mrf.mxu0
    %v317 = vadd.f32 %v257, %v316
    %v318 = vpop.f32.mrf.mxu0
    %319 = vdwg.mxu0
    %v320 = vld [vmem:[%s5] sm:$0xf]
    %v321 = vld [vmem:[%s5 + $0x4] sm:$0xf]
    %v322 = vld [vmem:[%s5 + $0x8] sm:$0xf]
    %v323 = vld [vmem:[%s5 + $0xc] sm:$0xf]
    %v324 = vld [vmem:[%s5 + $0x10] sm:$0xf]
    %v325 = vld [vmem:[%s5 + $0x14] sm:$0xf]
    %v326 = vld [vmem:[%s5 + $0x18] sm:$0xf]
    %v327 = vld [vmem:[%s5 + $0x1c] sm:$0xf]
    %v328 = vld [vmem:[%s5 + $0x20] sm:$0xf]
    %v329 = vld [vmem:[%s5 + $0x24] sm:$0xf]
    %v330 = vld [vmem:[%s5 + $0x28] sm:$0xf]
    %v331 = vld [vmem:[%s5 + $0x2c] sm:$0xf]
    %v332 = vld [vmem:[%s5 + $0x30] sm:$0xf]
    %v333 = vld [vmem:[%s5 + $0x34] sm:$0xf]
    %v334 = vld [vmem:[%s5 + $0x38] sm:$0xf]
    %v335 = vld [vmem:[%s5 + $0x3c] sm:$0xf]
    %v336 = vld [vmem:[%s6] sm:$0x1]
    %v338 = vperm.slane %v336, 0
    %v468 = vunpack.c.l.b16 %v111
    %v469 = vunpack.c.l.b16 %v112
    %v470 = vunpack.c.l.b16 %v113
    %v471 = vunpack.c.l.b16 %v114
    %v472 = vunpack.c.l.b16 %v115
    %v473 = vunpack.c.l.b16 %v116
    %v474 = vunpack.c.l.b16 %v117
    %v475 = vunpack.c.l.b16 %v118
    %v476 = vunpack.c.l.b16 %v119
    %v477 = vunpack.c.l.b16 %v120
    %v478 = vunpack.c.l.b16 %v121
    %v479 = vunpack.c.l.b16 %v122
    %v480 = vunpack.c.l.b16 %v123
    %v481 = vunpack.c.l.b16 %v124
    %v482 = vunpack.c.l.b16 %v125
    %v483 = vunpack.c.l.b16 %v126
    %v484 = vunpack.c.l.b16 %v127
    %v485 = vunpack.c.l.b16 %v128
    %v486 = vunpack.c.l.b16 %v129
    %v487 = vunpack.c.l.b16 %v130
    %v488 = vunpack.c.l.b16 %v131
    %v489 = vunpack.c.l.b16 %v132
    %v490 = vunpack.c.l.b16 %v133
    %v491 = vunpack.c.l.b16 %v134
    %v492 = vunpack.c.l.b16 %v135
    %v493 = vunpack.c.l.b16 %v136
    %v494 = vunpack.c.l.b16 %v137
    %v495 = vunpack.c.l.b16 %v138
    %v496 = vunpack.c.l.b16 %v139
    %v497 = vunpack.c.l.b16 %v140
    %v498 = vunpack.c.l.b16 %v141
    %v499 = vunpack.c.l.b16 %v142
    %v500 = vunpack.c.l.b16 %v143
    %v501 = vunpack.c.l.b16 %v144
    %v502 = vunpack.c.l.b16 %v145
    %v503 = vunpack.c.l.b16 %v146
    %v504 = vunpack.c.l.b16 %v147
    %v505 = vunpack.c.l.b16 %v148
    %v506 = vunpack.c.l.b16 %v149
    %v507 = vunpack.c.l.b16 %v150
    %v508 = vunpack.c.l.b16 %v151
    %v509 = vunpack.c.l.b16 %v152
    %v510 = vunpack.c.l.b16 %v153
    %v511 = vunpack.c.l.b16 %v154
    %v512 = vunpack.c.l.b16 %v155
    %v513 = vunpack.c.l.b16 %v156
    %v514 = vunpack.c.l.b16 %v157
    %v515 = vunpack.c.l.b16 %v158
    %v516 = vunpack.c.l.b16 %v159
    %v517 = vunpack.c.l.b16 %v160
    %v518 = vunpack.c.l.b16 %v161
    %v519 = vunpack.c.l.b16 %v162
    %v520 = vunpack.c.l.b16 %v163
    %v521 = vunpack.c.l.b16 %v164
    %v522 = vunpack.c.l.b16 %v165
    %v523 = vunpack.c.l.b16 %v166
    %v524 = vunpack.c.l.b16 %v167
    %v525 = vunpack.c.l.b16 %v168
    %v526 = vunpack.c.l.b16 %v169
    %v527 = vunpack.c.l.b16 %v170
    %v528 = vunpack.c.l.b16 %v171
    %v529 = vunpack.c.l.b16 %v172
    %v530 = vunpack.c.l.b16 %v173
    %v531 = vunpack.c.l.b16 %v174
    %v532 = vunpack.c.l.b16 %v175
    %v533 = vunpack.c.l.b16 %v176
    %v534 = vunpack.c.l.b16 %v177
    %v535 = vunpack.c.l.b16 %v178
    %v536 = vunpack.c.l.b16 %v179
    %v537 = vunpack.c.l.b16 %v180
    %v538 = vunpack.c.l.b16 %v181
    %v539 = vunpack.c.l.b16 %v182
    %v540 = vunpack.c.l.b16 %v183
    %v541 = vunpack.c.l.b16 %v184
    %v542 = vunpack.c.l.b16 %v185
    %v543 = vunpack.c.l.b16 %v186
    %v544 = vunpack.c.l.b16 %v187
    %v545 = vunpack.c.l.b16 %v188
    %v546 = vunpack.c.l.b16 %v189
    %v547 = vunpack.c.l.b16 %v190
    %v548 = vunpack.c.l.b16 %v191
    %v549 = vunpack.c.l.b16 %v192
    %v550 = vunpack.c.l.b16 %v193
    %v551 = vunpack.c.l.b16 %v194
    %v552 = vunpack.c.l.b16 %v195
    %v553 = vunpack.c.l.b16 %v196
    %v554 = vunpack.c.l.b16 %v197
    %v555 = vunpack.c.l.b16 %v198
    %v556 = vunpack.c.l.b16 %v199
    %v557 = vunpack.c.l.b16 %v200
    %v558 = vunpack.c.l.b16 %v201
    %v559 = vunpack.c.l.b16 %v202
    %v560 = vunpack.c.l.b16 %v203
    %v561 = vunpack.c.l.b16 %v204
    %v562 = vunpack.c.l.b16 %v205
    %v563 = vunpack.c.l.b16 %v206
    %v564 = vunpack.c.l.b16 %v207
    %v565 = vunpack.c.l.b16 %v208
    %v566 = vunpack.c.l.b16 %v209
    %v567 = vunpack.c.l.b16 %v210
    %v568 = vunpack.c.l.b16 %v211
    %v569 = vunpack.c.l.b16 %v212
    %v570 = vunpack.c.l.b16 %v213
    %v571 = vunpack.c.l.b16 %v214
    %v572 = vunpack.c.l.b16 %v215
    %v573 = vunpack.c.l.b16 %v216
    %v574 = vunpack.c.l.b16 %v217
    %v575 = vunpack.c.l.b16 %v218
    %v576 = vunpack.c.l.b16 %v219
    %v577 = vunpack.c.l.b16 %v220
    %v578 = vunpack.c.l.b16 %v221
    %v579 = vunpack.c.l.b16 %v222
    %v580 = vunpack.c.l.b16 %v223
    %v581 = vunpack.c.l.b16 %v224
    %v582 = vunpack.c.l.b16 %v225
    %v583 = vunpack.c.l.b16 %v226
    %v584 = vunpack.c.l.b16 %v227
    %v585 = vunpack.c.l.b16 %v228
    %v586 = vunpack.c.l.b16 %v229
    %v587 = vunpack.c.l.b16 %v230
    %v588 = vunpack.c.l.b16 %v231
    %v589 = vunpack.c.l.b16 %v232
    %v590 = vunpack.c.l.b16 %v233
    %v591 = vunpack.c.l.b16 %v234
    %v592 = vunpack.c.l.b16 %v235
    %v593 = vunpack.c.l.b16 %v236
    %v594 = vunpack.c.l.b16 %v237
    %v595 = vunpack.c.l.b16 %v238
    %v596 = vpack.c.b16 %v469, %v468
    %v597 = vpack.c.b16 %v471, %v470
    %v598 = vpack.c.b16 %v473, %v472
    %v599 = vpack.c.b16 %v475, %v474
    %v600 = vpack.c.b16 %v477, %v476
    %v601 = vpack.c.b16 %v479, %v478
    %v602 = vpack.c.b16 %v481, %v480
    %v603 = vpack.c.b16 %v483, %v482
    %v604 = vpack.c.b16 %v485, %v484
    %v605 = vpack.c.b16 %v487, %v486
    %v606 = vpack.c.b16 %v489, %v488
    %v607 = vpack.c.b16 %v491, %v490
    %v608 = vpack.c.b16 %v493, %v492
    %v609 = vpack.c.b16 %v495, %v494
    %v610 = vpack.c.b16 %v497, %v496
    %v611 = vpack.c.b16 %v499, %v498
    %v612 = vpack.c.b16 %v501, %v500
    %v613 = vpack.c.b16 %v503, %v502
    %v614 = vpack.c.b16 %v505, %v504
    %v615 = vpack.c.b16 %v507, %v506
    %v616 = vpack.c.b16 %v509, %v508
    %v617 = vpack.c.b16 %v511, %v510
    %v618 = vpack.c.b16 %v513, %v512
    %v619 = vpack.c.b16 %v515, %v514
    %v620 = vpack.c.b16 %v517, %v516
    %v621 = vpack.c.b16 %v519, %v518
    %v622 = vpack.c.b16 %v521, %v520
    %v623 = vpack.c.b16 %v523, %v522
    %v624 = vpack.c.b16 %v525, %v524
    %v625 = vpack.c.b16 %v527, %v526
    %v626 = vpack.c.b16 %v529, %v528
    %v627 = vpack.c.b16 %v531, %v530
    %v628 = vpack.c.b16 %v533, %v532
    %v629 = vpack.c.b16 %v535, %v534
    %v630 = vpack.c.b16 %v537, %v536
    %v631 = vpack.c.b16 %v539, %v538
    %v632 = vpack.c.b16 %v541, %v540
    %v633 = vpack.c.b16 %v543, %v542
    %v634 = vpack.c.b16 %v545, %v544
    %v635 = vpack.c.b16 %v547, %v546
    %v636 = vpack.c.b16 %v549, %v548
    %v637 = vpack.c.b16 %v551, %v550
    %v638 = vpack.c.b16 %v553, %v552
    %v639 = vpack.c.b16 %v555, %v554
    %v640 = vpack.c.b16 %v557, %v556
    %v641 = vpack.c.b16 %v559, %v558
    %v642 = vpack.c.b16 %v561, %v560
    %v643 = vpack.c.b16 %v563, %v562
    %v644 = vpack.c.b16 %v565, %v564
    %v645 = vpack.c.b16 %v567, %v566
    %v646 = vpack.c.b16 %v569, %v568
    %v647 = vpack.c.b16 %v571, %v570
    %v648 = vpack.c.b16 %v573, %v572
    %v649 = vpack.c.b16 %v575, %v574
    %v650 = vpack.c.b16 %v577, %v576
    %v651 = vpack.c.b16 %v579, %v578
    %v652 = vpack.c.b16 %v581, %v580
    %v653 = vpack.c.b16 %v583, %v582
    %v654 = vpack.c.b16 %v585, %v584
    %v655 = vpack.c.b16 %v587, %v586
    %v656 = vpack.c.b16 %v589, %v588
    %v657 = vpack.c.b16 %v591, %v590
    %v658 = vpack.c.b16 %v593, %v592
    %v659 = vpack.c.b16 %v595, %v594
    %v740 = vunpack.c.l.b16 %v320
    %v741 = vunpack.c.l.b16 %v321
    %v742 = vunpack.c.l.b16 %v322
    %v743 = vunpack.c.l.b16 %v323
    %v744 = vunpack.c.l.b16 %v324
    %v745 = vunpack.c.l.b16 %v325
    %v746 = vunpack.c.l.b16 %v326
    %v747 = vunpack.c.l.b16 %v327
    %v748 = vunpack.c.l.b16 %v328
    %v749 = vunpack.c.l.b16 %v329
    %v750 = vunpack.c.l.b16 %v330
    %v751 = vunpack.c.l.b16 %v331
    %v752 = vunpack.c.l.b16 %v332
    %v753 = vunpack.c.l.b16 %v333
    %v754 = vunpack.c.l.b16 %v334
    %v755 = vunpack.c.l.b16 %v335
    %v756 = vpack.c.b16 %v741, %v740
    %v757 = vpack.c.b16 %v743, %v742
    %v758 = vpack.c.b16 %v745, %v744
    %v759 = vpack.c.b16 %v747, %v746
    %v760 = vpack.c.b16 %v749, %v748
    %v761 = vpack.c.b16 %v751, %v750
    %v762 = vpack.c.b16 %v753, %v752
    %v763 = vpack.c.b16 %v755, %v754
    %772 = vmatpush.bf16.msra.mxu0 %v763
    %773 = vmatpush.bf16.msra.mxu0 %v762
    %774 = vmatpush.bf16.msra.mxu0 %v761
    %775 = vmatpush.bf16.msra.mxu0 %v760
    %776 = vmatpush.bf16.msra.mxu0 %v759
    %777 = vmatpush.bf16.msra.mxu0 %v758
    %778 = vmatpush.bf16.msra.mxu0 %v757
    %779 = vmatpush.bf16.msra.mxu0 %v756
    %780 = vmatmul.bf16.gmra.mxu0 %v596
    %v781 = vpop.f32.mrf.mxu0
    %v782 = vadd.f32 %v338, %v781
    %v783 = vpop.f32.mrf.mxu0
    %v784 = vadd.f32 %v338, %v783
    %785 = vmatmul.bf16.gmra.mxu0 %v597
    %v786 = vpop.f32.mrf.mxu0
    %v787 = vadd.f32 %v338, %v786
    %v788 = vpop.f32.mrf.mxu0
    %v789 = vadd.f32 %v338, %v788
    %790 = vmatmul.bf16.gmra.mxu0 %v598
    %v791 = vpop.f32.mrf.mxu0
    %v792 = vadd.f32 %v338, %v791
    %v793 = vpop.f32.mrf.mxu0
    %v794 = vadd.f32 %v338, %v793
    %795 = vmatmul.bf16.gmra.mxu0 %v599
    %v796 = vpop.f32.mrf.mxu0
    %v797 = vadd.f32 %v338, %v796
    %v798 = vpop.f32.mrf.mxu0
    %v799 = vadd.f32 %v338, %v798
    %800 = vmatmul.bf16.gmra.mxu0 %v600
    %v801 = vpop.f32.mrf.mxu0
    %v802 = vadd.f32 %v338, %v801
    %v803 = vpop.f32.mrf.mxu0
    %v804 = vadd.f32 %v338, %v803
    %805 = vmatmul.bf16.gmra.mxu0 %v601
    %v806 = vpop.f32.mrf.mxu0
    %v807 = vadd.f32 %v338, %v806
    %v808 = vpop.f32.mrf.mxu0
    %v809 = vadd.f32 %v338, %v808
    %810 = vmatmul.bf16.gmra.mxu0 %v602
    %v811 = vpop.f32.mrf.mxu0
    %v812 = vadd.f32 %v338, %v811
    %v813 = vpop.f32.mrf.mxu0
    %v814 = vadd.f32 %v338, %v813
    %815 = vmatmul.bf16.gmra.mxu0 %v603
    %v816 = vpop.f32.mrf.mxu0
    %v817 = vadd.f32 %v338, %v816
    %v818 = vpop.f32.mrf.mxu0
    %v819 = vadd.f32 %v338, %v818
    %820 = vmatmul.bf16.gmra.mxu0 %v604
    %v821 = vpop.f32.mrf.mxu0
    %v822 = vadd.f32 %v338, %v821
    %v823 = vpop.f32.mrf.mxu0
    %v824 = vadd.f32 %v338, %v823
    %825 = vmatmul.bf16.gmra.mxu0 %v605
    %v826 = vpop.f32.mrf.mxu0
    %v827 = vadd.f32 %v338, %v826
    %v828 = vpop.f32.mrf.mxu0
    %v829 = vadd.f32 %v338, %v828
    %830 = vmatmul.bf16.gmra.mxu0 %v606
    %v831 = vpop.f32.mrf.mxu0
    %v832 = vadd.f32 %v338, %v831
    %v833 = vpop.f32.mrf.mxu0
    %v834 = vadd.f32 %v338, %v833
    %835 = vmatmul.bf16.gmra.mxu0 %v607
    %v836 = vpop.f32.mrf.mxu0
    %v837 = vadd.f32 %v338, %v836
    %v838 = vpop.f32.mrf.mxu0
    %v839 = vadd.f32 %v338, %v838
    %840 = vmatmul.bf16.gmra.mxu0 %v608
    %v841 = vpop.f32.mrf.mxu0
    %v842 = vadd.f32 %v338, %v841
    %v843 = vpop.f32.mrf.mxu0
    %v844 = vadd.f32 %v338, %v843
    %845 = vmatmul.bf16.gmra.mxu0 %v609
    %v846 = vpop.f32.mrf.mxu0
    %v847 = vadd.f32 %v338, %v846
    %v848 = vpop.f32.mrf.mxu0
    %v849 = vadd.f32 %v338, %v848
    %850 = vmatmul.bf16.gmra.mxu0 %v610
    %v851 = vpop.f32.mrf.mxu0
    %v852 = vadd.f32 %v338, %v851
    %v853 = vpop.f32.mrf.mxu0
    %v854 = vadd.f32 %v338, %v853
    %855 = vmatmul.bf16.gmra.mxu0 %v611
    %v856 = vpop.f32.mrf.mxu0
    %v857 = vadd.f32 %v338, %v856
    %v858 = vpop.f32.mrf.mxu0
    %v859 = vadd.f32 %v338, %v858
    %860 = vmatmul.bf16.gmra.mxu0 %v612
    %v861 = vpop.f32.mrf.mxu0
    %v862 = vadd.f32 %v338, %v861
    %v863 = vpop.f32.mrf.mxu0
    %v864 = vadd.f32 %v338, %v863
    %865 = vmatmul.bf16.gmra.mxu0 %v613
    %v866 = vpop.f32.mrf.mxu0
    %v867 = vadd.f32 %v338, %v866
    %v868 = vpop.f32.mrf.mxu0
    %v869 = vadd.f32 %v338, %v868
    %870 = vmatmul.bf16.gmra.mxu0 %v614
    %v871 = vpop.f32.mrf.mxu0
    %v872 = vadd.f32 %v338, %v871
    %v873 = vpop.f32.mrf.mxu0
    %v874 = vadd.f32 %v338, %v873
    %875 = vmatmul.bf16.gmra.mxu0 %v615
    %v876 = vpop.f32.mrf.mxu0
    %v877 = vadd.f32 %v338, %v876
    %v878 = vpop.f32.mrf.mxu0
    %v879 = vadd.f32 %v338, %v878
    %880 = vmatmul.bf16.gmra.mxu0 %v616
    %v881 = vpop.f32.mrf.mxu0
    %v882 = vadd.f32 %v338, %v881
    %v883 = vpop.f32.mrf.mxu0
    %v884 = vadd.f32 %v338, %v883
    %885 = vmatmul.bf16.gmra.mxu0 %v617
    %v886 = vpop.f32.mrf.mxu0
    %v887 = vadd.f32 %v338, %v886
    %v888 = vpop.f32.mrf.mxu0
    %v889 = vadd.f32 %v338, %v888
    %890 = vmatmul.bf16.gmra.mxu0 %v618
    %v891 = vpop.f32.mrf.mxu0
    %v892 = vadd.f32 %v338, %v891
    %v893 = vpop.f32.mrf.mxu0
    %v894 = vadd.f32 %v338, %v893
    %895 = vmatmul.bf16.gmra.mxu0 %v619
    %v896 = vpop.f32.mrf.mxu0
    %v897 = vadd.f32 %v338, %v896
    %v898 = vpop.f32.mrf.mxu0
    %v899 = vadd.f32 %v338, %v898
    %900 = vmatmul.bf16.gmra.mxu0 %v620
    %v901 = vpop.f32.mrf.mxu0
    %v902 = vadd.f32 %v338, %v901
    %v903 = vpop.f32.mrf.mxu0
    %v904 = vadd.f32 %v338, %v903
    %905 = vmatmul.bf16.gmra.mxu0 %v621
    %v906 = vpop.f32.mrf.mxu0
    %v907 = vadd.f32 %v338, %v906
    %v908 = vpop.f32.mrf.mxu0
    %v909 = vadd.f32 %v338, %v908
    %910 = vmatmul.bf16.gmra.mxu0 %v622
    %v911 = vpop.f32.mrf.mxu0
    %v912 = vadd.f32 %v338, %v911
    %v913 = vpop.f32.mrf.mxu0
    %v914 = vadd.f32 %v338, %v913
    %915 = vmatmul.bf16.gmra.mxu0 %v623
    %v916 = vpop.f32.mrf.mxu0
    %v917 = vadd.f32 %v338, %v916
    %v918 = vpop.f32.mrf.mxu0
    %v919 = vadd.f32 %v338, %v918
    %920 = vmatmul.bf16.gmra.mxu0 %v624
    %v921 = vpop.f32.mrf.mxu0
    %v922 = vadd.f32 %v338, %v921
    %v923 = vpop.f32.mrf.mxu0
    %v924 = vadd.f32 %v338, %v923
    %925 = vmatmul.bf16.gmra.mxu0 %v625
    %v926 = vpop.f32.mrf.mxu0
    %v927 = vadd.f32 %v338, %v926
    %v928 = vpop.f32.mrf.mxu0
    %v929 = vadd.f32 %v338, %v928
    %930 = vmatmul.bf16.gmra.mxu0 %v626
    %v931 = vpop.f32.mrf.mxu0
    %v932 = vadd.f32 %v338, %v931
    %v933 = vpop.f32.mrf.mxu0
    %v934 = vadd.f32 %v338, %v933
    %935 = vmatmul.bf16.gmra.mxu0 %v627
    %v936 = vpop.f32.mrf.mxu0
    %v937 = vadd.f32 %v338, %v936
    %v938 = vpop.f32.mrf.mxu0
    %v939 = vadd.f32 %v338, %v938
    %940 = vmatmul.bf16.gmra.mxu0 %v628
    %v941 = vpop.f32.mrf.mxu0
    %v942 = vadd.f32 %v338, %v941
    %v943 = vpop.f32.mrf.mxu0
    %v944 = vadd.f32 %v338, %v943
    %945 = vmatmul.bf16.gmra.mxu0 %v629
    %v946 = vpop.f32.mrf.mxu0
    %v947 = vadd.f32 %v338, %v946
    %v948 = vpop.f32.mrf.mxu0
    %v949 = vadd.f32 %v338, %v948
    %950 = vmatmul.bf16.gmra.mxu0 %v630
    %v951 = vpop.f32.mrf.mxu0
    %v952 = vadd.f32 %v338, %v951
    %v953 = vpop.f32.mrf.mxu0
    %v954 = vadd.f32 %v338, %v953
    %955 = vmatmul.bf16.gmra.mxu0 %v631
    %v956 = vpop.f32.mrf.mxu0
    %v957 = vadd.f32 %v338, %v956
    %v958 = vpop.f32.mrf.mxu0
    %v959 = vadd.f32 %v338, %v958
    %960 = vmatmul.bf16.gmra.mxu0 %v632
    %v961 = vpop.f32.mrf.mxu0
    %v962 = vadd.f32 %v338, %v961
    %v963 = vpop.f32.mrf.mxu0
    %v964 = vadd.f32 %v338, %v963
    %965 = vmatmul.bf16.gmra.mxu0 %v633
    %v966 = vpop.f32.mrf.mxu0
    %v967 = vadd.f32 %v338, %v966
    %v968 = vpop.f32.mrf.mxu0
    %v969 = vadd.f32 %v338, %v968
    %970 = vmatmul.bf16.gmra.mxu0 %v634
    %v971 = vpop.f32.mrf.mxu0
    %v972 = vadd.f32 %v338, %v971
    %v973 = vpop.f32.mrf.mxu0
    %v974 = vadd.f32 %v338, %v973
    %975 = vmatmul.bf16.gmra.mxu0 %v635
    %v976 = vpop.f32.mrf.mxu0
    %v977 = vadd.f32 %v338, %v976
    %v978 = vpop.f32.mrf.mxu0
    %v979 = vadd.f32 %v338, %v978
    %980 = vmatmul.bf16.gmra.mxu0 %v636
    %v981 = vpop.f32.mrf.mxu0
    %v982 = vadd.f32 %v338, %v981
    %v983 = vpop.f32.mrf.mxu0
    %v984 = vadd.f32 %v338, %v983
    %985 = vmatmul.bf16.gmra.mxu0 %v637
    %v986 = vpop.f32.mrf.mxu0
    %v987 = vadd.f32 %v338, %v986
    %v988 = vpop.f32.mrf.mxu0
    %v989 = vadd.f32 %v338, %v988
    %990 = vmatmul.bf16.gmra.mxu0 %v638
    %v991 = vpop.f32.mrf.mxu0
    %v992 = vadd.f32 %v338, %v991
    %v993 = vpop.f32.mrf.mxu0
    %v994 = vadd.f32 %v338, %v993
    %995 = vmatmul.bf16.gmra.mxu0 %v639
    %v996 = vpop.f32.mrf.mxu0
    %v997 = vadd.f32 %v338, %v996
    %v998 = vpop.f32.mrf.mxu0
    %v999 = vadd.f32 %v338, %v998
    %1000 = vmatmul.bf16.gmra.mxu0 %v640
    %v1001 = vpop.f32.mrf.mxu0
    %v1002 = vadd.f32 %v338, %v1001
    %v1003 = vpop.f32.mrf.mxu0
    %v1004 = vadd.f32 %v338, %v1003
    %1005 = vmatmul.bf16.gmra.mxu0 %v641
    %v1006 = vpop.f32.mrf.mxu0
    %v1007 = vadd.f32 %v338, %v1006
    %v1008 = vpop.f32.mrf.mxu0
    %v1009 = vadd.f32 %v338, %v1008
    %1010 = vmatmul.bf16.gmra.mxu0 %v642
    %v1011 = vpop.f32.mrf.mxu0
    %v1012 = vadd.f32 %v338, %v1011
    %v1013 = vpop.f32.mrf.mxu0
    %v1014 = vadd.f32 %v338, %v1013
    %1015 = vmatmul.bf16.gmra.mxu0 %v643
    %v1016 = vpop.f32.mrf.mxu0
    %v1017 = vadd.f32 %v338, %v1016
    %v1018 = vpop.f32.mrf.mxu0
    %v1019 = vadd.f32 %v338, %v1018
    %1020 = vmatmul.bf16.gmra.mxu0 %v644
    %v1021 = vpop.f32.mrf.mxu0
    %v1022 = vadd.f32 %v338, %v1021
    %v1023 = vpop.f32.mrf.mxu0
    %v1024 = vadd.f32 %v338, %v1023
    %1025 = vmatmul.bf16.gmra.mxu0 %v645
    %v1026 = vpop.f32.mrf.mxu0
    %v1027 = vadd.f32 %v338, %v1026
    %v1028 = vpop.f32.mrf.mxu0
    %v1029 = vadd.f32 %v338, %v1028
    %1030 = vmatmul.bf16.gmra.mxu0 %v646
    %v1031 = vpop.f32.mrf.mxu0
    %v1032 = vadd.f32 %v338, %v1031
    %v1033 = vpop.f32.mrf.mxu0
    %v1034 = vadd.f32 %v338, %v1033
    %1035 = vmatmul.bf16.gmra.mxu0 %v647
    %v1036 = vpop.f32.mrf.mxu0
    %v1037 = vadd.f32 %v338, %v1036
    %v1038 = vpop.f32.mrf.mxu0
    %v1039 = vadd.f32 %v338, %v1038
    %1040 = vmatmul.bf16.gmra.mxu0 %v648
    %v1041 = vpop.f32.mrf.mxu0
    %v1042 = vadd.f32 %v338, %v1041
    %v1043 = vpop.f32.mrf.mxu0
    %v1044 = vadd.f32 %v338, %v1043
    %1045 = vmatmul.bf16.gmra.mxu0 %v649
    %v1046 = vpop.f32.mrf.mxu0
    %v1047 = vadd.f32 %v338, %v1046
    %v1048 = vpop.f32.mrf.mxu0
    %v1049 = vadd.f32 %v338, %v1048
    %1050 = vmatmul.bf16.gmra.mxu0 %v650
    %v1051 = vpop.f32.mrf.mxu0
    %v1052 = vadd.f32 %v338, %v1051
    %v1053 = vpop.f32.mrf.mxu0
    %v1054 = vadd.f32 %v338, %v1053
    %1055 = vmatmul.bf16.gmra.mxu0 %v651
    %v1056 = vpop.f32.mrf.mxu0
    %v1057 = vadd.f32 %v338, %v1056
    %v1058 = vpop.f32.mrf.mxu0
    %v1059 = vadd.f32 %v338, %v1058
    %1060 = vmatmul.bf16.gmra.mxu0 %v652
    %v1061 = vpop.f32.mrf.mxu0
    %v1062 = vadd.f32 %v338, %v1061
    %v1063 = vpop.f32.mrf.mxu0
    %v1064 = vadd.f32 %v338, %v1063
    %1065 = vmatmul.bf16.gmra.mxu0 %v653
    %v1066 = vpop.f32.mrf.mxu0
    %v1067 = vadd.f32 %v338, %v1066
    %v1068 = vpop.f32.mrf.mxu0
    %v1069 = vadd.f32 %v338, %v1068
    %1070 = vmatmul.bf16.gmra.mxu0 %v654
    %v1071 = vpop.f32.mrf.mxu0
    %v1072 = vadd.f32 %v338, %v1071
    %v1073 = vpop.f32.mrf.mxu0
    %v1074 = vadd.f32 %v338, %v1073
    %1075 = vmatmul.bf16.gmra.mxu0 %v655
    %v1076 = vpop.f32.mrf.mxu0
    %v1077 = vadd.f32 %v338, %v1076
    %v1078 = vpop.f32.mrf.mxu0
    %v1079 = vadd.f32 %v338, %v1078
    %1080 = vmatmul.bf16.gmra.mxu0 %v656
    %v1081 = vpop.f32.mrf.mxu0
    %v1082 = vadd.f32 %v338, %v1081
    %v1083 = vpop.f32.mrf.mxu0
    %v1084 = vadd.f32 %v338, %v1083
    %1085 = vmatmul.bf16.gmra.mxu0 %v657
    %v1086 = vpop.f32.mrf.mxu0
    %v1087 = vadd.f32 %v338, %v1086
    %v1088 = vpop.f32.mrf.mxu0
    %v1089 = vadd.f32 %v338, %v1088
    %1090 = vmatmul.bf16.gmra.mxu0 %v658
    %v1091 = vpop.f32.mrf.mxu0
    %v1092 = vadd.f32 %v338, %v1091
    %v1093 = vpop.f32.mrf.mxu0
    %v1094 = vadd.f32 %v338, %v1093
    %1095 = vmatmul.bf16.gmra.mxu0 %v659
    %v1096 = vpop.f32.mrf.mxu0
    %v1097 = vadd.f32 %v338, %v1096
    %v1098 = vpop.f32.mrf.mxu0
    %v1099 = vadd.f32 %v338, %v1098
    %1100 = vdwg.mxu0
    %v1102 = vrot.slane %v317, 1
    %v1103 = vrot.slane %v317, 2
    %v1104 = vrot.slane %v317, 3
    %v1105 = vrot.slane %v317, 4
    %v1106 = vrot.slane %v317, 5
    %v1107 = vrot.slane %v317, 6
    %v1108 = vrot.slane %v317, 7
    %v1109 = vperm.slane %v317, 0
    %v1110 = vperm.slane %v1102, 0
    %v1111 = vperm.slane %v1103, 0
    %v1112 = vperm.slane %v1104, 0
    %v1113 = vperm.slane %v1105, 0
    %v1114 = vperm.slane %v1106, 0
    %v1115 = vperm.slane %v1107, 0
    %v1116 = vperm.slane %v1108, 0
    %v1125 = vadd.f32 %v1109, %v782
    %v1126 = vadd.f32 %v1109, %v784
    %v1127 = vadd.f32 %v1109, %v787
    %v1128 = vadd.f32 %v1109, %v789
    %v1129 = vadd.f32 %v1109, %v792
    %v1130 = vadd.f32 %v1109, %v794
    %v1131 = vadd.f32 %v1109, %v797
    %v1132 = vadd.f32 %v1109, %v799
    %v1133 = vadd.f32 %v1109, %v802
    %v1134 = vadd.f32 %v1109, %v804
    %v1135 = vadd.f32 %v1109, %v807
    %v1136 = vadd.f32 %v1109, %v809
    %v1137 = vadd.f32 %v1109, %v812
    %v1138 = vadd.f32 %v1109, %v814
    %v1139 = vadd.f32 %v1109, %v817
    %v1140 = vadd.f32 %v1109, %v819
    %v1141 = vadd.f32 %v1110, %v822
    %v1142 = vadd.f32 %v1110, %v824
    %v1143 = vadd.f32 %v1110, %v827
    %v1144 = vadd.f32 %v1110, %v829
    %v1145 = vadd.f32 %v1110, %v832
    %v1146 = vadd.f32 %v1110, %v834
    %v1147 = vadd.f32 %v1110, %v837
    %v1148 = vadd.f32 %v1110, %v839
    %v1149 = vadd.f32 %v1110, %v842
    %v1150 = vadd.f32 %v1110, %v844
    %v1151 = vadd.f32 %v1110, %v847
    %v1152 = vadd.f32 %v1110, %v849
    %v1153 = vadd.f32 %v1110, %v852
    %v1154 = vadd.f32 %v1110, %v854
    %v1155 = vadd.f32 %v1110, %v857
    %v1156 = vadd.f32 %v1110, %v859
    %v1157 = vadd.f32 %v1111, %v862
    %v1158 = vadd.f32 %v1111, %v864
    %v1159 = vadd.f32 %v1111, %v867
    %v1160 = vadd.f32 %v1111, %v869
    %v1161 = vadd.f32 %v1111, %v872
    %v1162 = vadd.f32 %v1111, %v874
    %v1163 = vadd.f32 %v1111, %v877
    %v1164 = vadd.f32 %v1111, %v879
    %v1165 = vadd.f32 %v1111, %v882
    %v1166 = vadd.f32 %v1111, %v884
    %v1167 = vadd.f32 %v1111, %v887
    %v1168 = vadd.f32 %v1111, %v889
    %v1169 = vadd.f32 %v1111, %v892
    %v1170 = vadd.f32 %v1111, %v894
    %v1171 = vadd.f32 %v1111, %v897
    %v1172 = vadd.f32 %v1111, %v899
    %v1173 = vadd.f32 %v1112, %v902
    %v1174 = vadd.f32 %v1112, %v904
    %v1175 = vadd.f32 %v1112, %v907
    %v1176 = vadd.f32 %v1112, %v909
    %v1177 = vadd.f32 %v1112, %v912
    %v1178 = vadd.f32 %v1112, %v914
    %v1179 = vadd.f32 %v1112, %v917
    %v1180 = vadd.f32 %v1112, %v919
    %v1181 = vadd.f32 %v1112, %v922
    %v1182 = vadd.f32 %v1112, %v924
    %v1183 = vadd.f32 %v1112, %v927
    %v1184 = vadd.f32 %v1112, %v929
    %v1185 = vadd.f32 %v1112, %v932
    %v1186 = vadd.f32 %v1112, %v934
    %v1187 = vadd.f32 %v1112, %v937
    %v1188 = vadd.f32 %v1112, %v939
    %v1189 = vadd.f32 %v1113, %v942
    %v1190 = vadd.f32 %v1113, %v944
    %v1191 = vadd.f32 %v1113, %v947
    %v1192 = vadd.f32 %v1113, %v949
    %v1193 = vadd.f32 %v1113, %v952
    %v1194 = vadd.f32 %v1113, %v954
    %v1195 = vadd.f32 %v1113, %v957
    %v1196 = vadd.f32 %v1113, %v959
    %v1197 = vadd.f32 %v1113, %v962
    %v1198 = vadd.f32 %v1113, %v964
    %v1199 = vadd.f32 %v1113, %v967
    %v1200 = vadd.f32 %v1113, %v969
    %v1201 = vadd.f32 %v1113, %v972
    %v1202 = vadd.f32 %v1113, %v974
    %v1203 = vadd.f32 %v1113, %v977
    %v1204 = vadd.f32 %v1113, %v979
    %v1205 = vadd.f32 %v1114, %v982
    %v1206 = vadd.f32 %v1114, %v984
    %v1207 = vadd.f32 %v1114, %v987
    %v1208 = vadd.f32 %v1114, %v989
    %v1209 = vadd.f32 %v1114, %v992
    %v1210 = vadd.f32 %v1114, %v994
    %v1211 = vadd.f32 %v1114, %v997
    %v1212 = vadd.f32 %v1114, %v999
    %v1213 = vadd.f32 %v1114, %v1002
    %v1214 = vadd.f32 %v1114, %v1004
    %v1215 = vadd.f32 %v1114, %v1007
    %v1216 = vadd.f32 %v1114, %v1009
    %v1217 = vadd.f32 %v1114, %v1012
    %v1218 = vadd.f32 %v1114, %v1014
    %v1219 = vadd.f32 %v1114, %v1017
    %v1220 = vadd.f32 %v1114, %v1019
    %v1221 = vadd.f32 %v1115, %v1022
    %v1222 = vadd.f32 %v1115, %v1024
    %v1223 = vadd.f32 %v1115, %v1027
    %v1224 = vadd.f32 %v1115, %v1029
    %v1225 = vadd.f32 %v1115, %v1032
    %v1226 = vadd.f32 %v1115, %v1034
    %v1227 = vadd.f32 %v1115, %v1037
    %v1228 = vadd.f32 %v1115, %v1039
    %v1229 = vadd.f32 %v1115, %v1042
    %v1230 = vadd.f32 %v1115, %v1044
    %v1231 = vadd.f32 %v1115, %v1047
    %v1232 = vadd.f32 %v1115, %v1049
    %v1233 = vadd.f32 %v1115, %v1052
    %v1234 = vadd.f32 %v1115, %v1054
    %v1235 = vadd.f32 %v1115, %v1057
    %v1236 = vadd.f32 %v1115, %v1059
    %v1237 = vadd.f32 %v1116, %v1062
    %v1238 = vadd.f32 %v1116, %v1064
    %v1239 = vadd.f32 %v1116, %v1067
    %v1240 = vadd.f32 %v1116, %v1069
    %v1241 = vadd.f32 %v1116, %v1072
    %v1242 = vadd.f32 %v1116, %v1074
    %v1243 = vadd.f32 %v1116, %v1077
    %v1244 = vadd.f32 %v1116, %v1079
    %v1245 = vadd.f32 %v1116, %v1082
    %v1246 = vadd.f32 %v1116, %v1084
    %v1247 = vadd.f32 %v1116, %v1087
    %v1248 = vadd.f32 %v1116, %v1089
    %v1249 = vadd.f32 %v1116, %v1092
    %v1250 = vadd.f32 %v1116, %v1094
    %v1251 = vadd.f32 %v1116, %v1097
    %v1252 = vadd.f32 %v1116, %v1099
    %v1253 = vtanh.pop %v1125
    %v1254 = vtanh.pop %v1126
    %v1255 = vtanh.pop %v1127
    %v1256 = vtanh.pop %v1128
    %v1257 = vtanh.pop %v1129
    %v1258 = vtanh.pop %v1130
    %v1259 = vtanh.pop %v1131
    %v1260 = vtanh.pop %v1132
    %v1261 = vtanh.pop %v1133
    %v1262 = vtanh.pop %v1134
    %v1263 = vtanh.pop %v1135
    %v1264 = vtanh.pop %v1136
    %v1265 = vtanh.pop %v1137
    %v1266 = vtanh.pop %v1138
    %v1267 = vtanh.pop %v1139
    %v1268 = vtanh.pop %v1140
    %v1269 = vtanh.pop %v1141
    %v1270 = vtanh.pop %v1142
    %v1271 = vtanh.pop %v1143
    %v1272 = vtanh.pop %v1144
    %v1273 = vtanh.pop %v1145
    %v1274 = vtanh.pop %v1146
    %v1275 = vtanh.pop %v1147
    %v1276 = vtanh.pop %v1148
    %v1277 = vtanh.pop %v1149
    %v1278 = vtanh.pop %v1150
    %v1279 = vtanh.pop %v1151
    %v1280 = vtanh.pop %v1152
    %v1281 = vtanh.pop %v1153
    %v1282 = vtanh.pop %v1154
    %v1283 = vtanh.pop %v1155
    %v1284 = vtanh.pop %v1156
    %v1285 = vtanh.pop %v1157
    %v1286 = vtanh.pop %v1158
    %v1287 = vtanh.pop %v1159
    %v1288 = vtanh.pop %v1160
    %v1289 = vtanh.pop %v1161
    %v1290 = vtanh.pop %v1162
    %v1291 = vtanh.pop %v1163
    %v1292 = vtanh.pop %v1164
    %v1293 = vtanh.pop %v1165
    %v1294 = vtanh.pop %v1166
    %v1295 = vtanh.pop %v1167
    %v1296 = vtanh.pop %v1168
    %v1297 = vtanh.pop %v1169
    %v1298 = vtanh.pop %v1170
    %v1299 = vtanh.pop %v1171
    %v1300 = vtanh.pop %v1172
    %v1301 = vtanh.pop %v1173
    %v1302 = vtanh.pop %v1174
    %v1303 = vtanh.pop %v1175
    %v1304 = vtanh.pop %v1176
    %v1305 = vtanh.pop %v1177
    %v1306 = vtanh.pop %v1178
    %v1307 = vtanh.pop %v1179
    %v1308 = vtanh.pop %v1180
    %v1309 = vtanh.pop %v1181
    %v1310 = vtanh.pop %v1182
    %v1311 = vtanh.pop %v1183
    %v1312 = vtanh.pop %v1184
    %v1313 = vtanh.pop %v1185
    %v1314 = vtanh.pop %v1186
    %v1315 = vtanh.pop %v1187
    %v1316 = vtanh.pop %v1188
    %v1317 = vtanh.pop %v1189
    %v1318 = vtanh.pop %v1190
    %v1319 = vtanh.pop %v1191
    %v1320 = vtanh.pop %v1192
    %v1321 = vtanh.pop %v1193
    %v1322 = vtanh.pop %v1194
    %v1323 = vtanh.pop %v1195
    %v1324 = vtanh.pop %v1196
    %v1325 = vtanh.pop %v1197
    %v1326 = vtanh.pop %v1198
    %v1327 = vtanh.pop %v1199
    %v1328 = vtanh.pop %v1200
    %v1329 = vtanh.pop %v1201
    %v1330 = vtanh.pop %v1202
    %v1331 = vtanh.pop %v1203
    %v1332 = vtanh.pop %v1204
    %v1333 = vtanh.pop %v1205
    %v1334 = vtanh.pop %v1206
    %v1335 = vtanh.pop %v1207
    %v1336 = vtanh.pop %v1208
    %v1337 = vtanh.pop %v1209
    %v1338 = vtanh.pop %v1210
    %v1339 = vtanh.pop %v1211
    %v1340 = vtanh.pop %v1212
    %v1341 = vtanh.pop %v1213
    %v1342 = vtanh.pop %v1214
    %v1343 = vtanh.pop %v1215
    %v1344 = vtanh.pop %v1216
    %v1345 = vtanh.pop %v1217
    %v1346 = vtanh.pop %v1218
    %v1347 = vtanh.pop %v1219
    %v1348 = vtanh.pop %v1220
    %v1349 = vtanh.pop %v1221
    %v1350 = vtanh.pop %v1222
    %v1351 = vtanh.pop %v1223
    %v1352 = vtanh.pop %v1224
    %v1353 = vtanh.pop %v1225
    %v1354 = vtanh.pop %v1226
    %v1355 = vtanh.pop %v1227
    %v1356 = vtanh.pop %v1228
    %v1357 = vtanh.pop %v1229
    %v1358 = vtanh.pop %v1230
    %v1359 = vtanh.pop %v1231
    %v1360 = vtanh.pop %v1232
    %v1361 = vtanh.pop %v1233
    %v1362 = vtanh.pop %v1234
    %v1363 = vtanh.pop %v1235
    %v1364 = vtanh.pop %v1236
    %v1365 = vtanh.pop %v1237
    %v1366 = vtanh.pop %v1238
    %v1367 = vtanh.pop %v1239
    %v1368 = vtanh.pop %v1240
    %v1369 = vtanh.pop %v1241
    %v1370 = vtanh.pop %v1242
    %v1371 = vtanh.pop %v1243
    %v1372 = vtanh.pop %v1244
    %v1373 = vtanh.pop %v1245
    %v1374 = vtanh.pop %v1246
    %v1375 = vtanh.pop %v1247
    %v1376 = vtanh.pop %v1248
    %v1377 = vtanh.pop %v1249
    %v1378 = vtanh.pop %v1250
    %v1379 = vtanh.pop %v1251
    %v1380 = vtanh.pop %v1252
    %v1381 = vpack.c.bf16 %v1253, %v1253
    %v1382 = vpack.c.bf16 %v1254, %v1254
    %v1383 = vpack.c.bf16 %v1255, %v1255
    %v1384 = vpack.c.bf16 %v1256, %v1256
    %v1385 = vpack.c.bf16 %v1257, %v1257
    %v1386 = vpack.c.bf16 %v1258, %v1258
    %v1387 = vpack.c.bf16 %v1259, %v1259
    %v1388 = vpack.c.bf16 %v1260, %v1260
    %v1389 = vpack.c.bf16 %v1261, %v1261
    %v1390 = vpack.c.bf16 %v1262, %v1262
    %v1391 = vpack.c.bf16 %v1263, %v1263
    %v1392 = vpack.c.bf16 %v1264, %v1264
    %v1393 = vpack.c.bf16 %v1265, %v1265
    %v1394 = vpack.c.bf16 %v1266, %v1266
    %v1395 = vpack.c.bf16 %v1267, %v1267
    %v1396 = vpack.c.bf16 %v1268, %v1268
    %v1397 = vpack.c.bf16 %v1269, %v1269
    %v1398 = vpack.c.bf16 %v1270, %v1270
    %v1399 = vpack.c.bf16 %v1271, %v1271
    %v1400 = vpack.c.bf16 %v1272, %v1272
    %v1401 = vpack.c.bf16 %v1273, %v1273
    %v1402 = vpack.c.bf16 %v1274, %v1274
    %v1403 = vpack.c.bf16 %v1275, %v1275
    %v1404 = vpack.c.bf16 %v1276, %v1276
    %v1405 = vpack.c.bf16 %v1277, %v1277
    %v1406 = vpack.c.bf16 %v1278, %v1278
    %v1407 = vpack.c.bf16 %v1279, %v1279
    %v1408 = vpack.c.bf16 %v1280, %v1280
    %v1409 = vpack.c.bf16 %v1281, %v1281
    %v1410 = vpack.c.bf16 %v1282, %v1282
    %v1411 = vpack.c.bf16 %v1283, %v1283
    %v1412 = vpack.c.bf16 %v1284, %v1284
    %v1413 = vpack.c.bf16 %v1285, %v1285
    %v1414 = vpack.c.bf16 %v1286, %v1286
    %v1415 = vpack.c.bf16 %v1287, %v1287
    %v1416 = vpack.c.bf16 %v1288, %v1288
    %v1417 = vpack.c.bf16 %v1289, %v1289
    %v1418 = vpack.c.bf16 %v1290, %v1290
    %v1419 = vpack.c.bf16 %v1291, %v1291
    %v1420 = vpack.c.bf16 %v1292, %v1292
    %v1421 = vpack.c.bf16 %v1293, %v1293
    %v1422 = vpack.c.bf16 %v1294, %v1294
    %v1423 = vpack.c.bf16 %v1295, %v1295
    %v1424 = vpack.c.bf16 %v1296, %v1296
    %v1425 = vpack.c.bf16 %v1297, %v1297
    %v1426 = vpack.c.bf16 %v1298, %v1298
    %v1427 = vpack.c.bf16 %v1299, %v1299
    %v1428 = vpack.c.bf16 %v1300, %v1300
    %v1429 = vpack.c.bf16 %v1301, %v1301
    %v1430 = vpack.c.bf16 %v1302, %v1302
    %v1431 = vpack.c.bf16 %v1303, %v1303
    %v1432 = vpack.c.bf16 %v1304, %v1304
    %v1433 = vpack.c.bf16 %v1305, %v1305
    %v1434 = vpack.c.bf16 %v1306, %v1306
    %v1435 = vpack.c.bf16 %v1307, %v1307
    %v1436 = vpack.c.bf16 %v1308, %v1308
    %v1437 = vpack.c.bf16 %v1309, %v1309
    %v1438 = vpack.c.bf16 %v1310, %v1310
    %v1439 = vpack.c.bf16 %v1311, %v1311
    %v1440 = vpack.c.bf16 %v1312, %v1312
    %v1441 = vpack.c.bf16 %v1313, %v1313
    %v1442 = vpack.c.bf16 %v1314, %v1314
    %v1443 = vpack.c.bf16 %v1315, %v1315
    %v1444 = vpack.c.bf16 %v1316, %v1316
    %v1445 = vpack.c.bf16 %v1317, %v1317
    %v1446 = vpack.c.bf16 %v1318, %v1318
    %v1447 = vpack.c.bf16 %v1319, %v1319
    %v1448 = vpack.c.bf16 %v1320, %v1320
    %v1449 = vpack.c.bf16 %v1321, %v1321
    %v1450 = vpack.c.bf16 %v1322, %v1322
    %v1451 = vpack.c.bf16 %v1323, %v1323
    %v1452 = vpack.c.bf16 %v1324, %v1324
    %v1453 = vpack.c.bf16 %v1325, %v1325
    %v1454 = vpack.c.bf16 %v1326, %v1326
    %v1455 = vpack.c.bf16 %v1327, %v1327
    %v1456 = vpack.c.bf16 %v1328, %v1328
    %v1457 = vpack.c.bf16 %v1329, %v1329
    %v1458 = vpack.c.bf16 %v1330, %v1330
    %v1459 = vpack.c.bf16 %v1331, %v1331
    %v1460 = vpack.c.bf16 %v1332, %v1332
    %v1461 = vpack.c.bf16 %v1333, %v1333
    %v1462 = vpack.c.bf16 %v1334, %v1334
    %v1463 = vpack.c.bf16 %v1335, %v1335
    %v1464 = vpack.c.bf16 %v1336, %v1336
    %v1465 = vpack.c.bf16 %v1337, %v1337
    %v1466 = vpack.c.bf16 %v1338, %v1338
    %v1467 = vpack.c.bf16 %v1339, %v1339
    %v1468 = vpack.c.bf16 %v1340, %v1340
    %v1469 = vpack.c.bf16 %v1341, %v1341
    %v1470 = vpack.c.bf16 %v1342, %v1342
    %v1471 = vpack.c.bf16 %v1343, %v1343
    %v1472 = vpack.c.bf16 %v1344, %v1344
    %v1473 = vpack.c.bf16 %v1345, %v1345
    %v1474 = vpack.c.bf16 %v1346, %v1346
    %v1475 = vpack.c.bf16 %v1347, %v1347
    %v1476 = vpack.c.bf16 %v1348, %v1348
    %v1477 = vpack.c.bf16 %v1349, %v1349
    %v1478 = vpack.c.bf16 %v1350, %v1350
    %v1479 = vpack.c.bf16 %v1351, %v1351
    %v1480 = vpack.c.bf16 %v1352, %v1352
    %v1481 = vpack.c.bf16 %v1353, %v1353
    %v1482 = vpack.c.bf16 %v1354, %v1354
    %v1483 = vpack.c.bf16 %v1355, %v1355
    %v1484 = vpack.c.bf16 %v1356, %v1356
    %v1485 = vpack.c.bf16 %v1357, %v1357
    %v1486 = vpack.c.bf16 %v1358, %v1358
    %v1487 = vpack.c.bf16 %v1359, %v1359
    %v1488 = vpack.c.bf16 %v1360, %v1360
    %v1489 = vpack.c.bf16 %v1361, %v1361
    %v1490 = vpack.c.bf16 %v1362, %v1362
    %v1491 = vpack.c.bf16 %v1363, %v1363
    %v1492 = vpack.c.bf16 %v1364, %v1364
    %v1493 = vpack.c.bf16 %v1365, %v1365
    %v1494 = vpack.c.bf16 %v1366, %v1366
    %v1495 = vpack.c.bf16 %v1367, %v1367
    %v1496 = vpack.c.bf16 %v1368, %v1368
    %v1497 = vpack.c.bf16 %v1369, %v1369
    %v1498 = vpack.c.bf16 %v1370, %v1370
    %v1499 = vpack.c.bf16 %v1371, %v1371
    %v1500 = vpack.c.bf16 %v1372, %v1372
    %v1501 = vpack.c.bf16 %v1373, %v1373
    %v1502 = vpack.c.bf16 %v1374, %v1374
    %v1503 = vpack.c.bf16 %v1375, %v1375
    %v1504 = vpack.c.bf16 %v1376, %v1376
    %v1505 = vpack.c.bf16 %v1377, %v1377
    %v1506 = vpack.c.bf16 %v1378, %v1378
    %v1507 = vpack.c.bf16 %v1379, %v1379
    %v1508 = vpack.c.bf16 %v1380, %v1380
    %v1509 = vld [vmem:[%s7] sm:$0x1]
    %v1526 = vunpack.c.l.b16 %v1381
    %v1527 = vunpack.c.l.b16 %v1382
    %v1528 = vunpack.c.l.b16 %v1383
    %v1529 = vunpack.c.l.b16 %v1384
    %v1530 = vunpack.c.l.b16 %v1385
    %v1531 = vunpack.c.l.b16 %v1386
    %v1532 = vunpack.c.l.b16 %v1387
    %v1533 = vunpack.c.l.b16 %v1388
    %v1534 = vunpack.c.l.b16 %v1389
    %v1535 = vunpack.c.l.b16 %v1390
    %v1536 = vunpack.c.l.b16 %v1391
    %v1537 = vunpack.c.l.b16 %v1392
    %v1538 = vunpack.c.l.b16 %v1393
    %v1539 = vunpack.c.l.b16 %v1394
    %v1540 = vunpack.c.l.b16 %v1395
    %v1541 = vunpack.c.l.b16 %v1396
    %v1542 = vpack.c.b16 %v1527, %v1526
    %v1543 = vpack.c.b16 %v1529, %v1528
    %v1544 = vpack.c.b16 %v1531, %v1530
    %v1545 = vpack.c.b16 %v1533, %v1532
    %v1546 = vpack.c.b16 %v1535, %v1534
    %v1547 = vpack.c.b16 %v1537, %v1536
    %v1548 = vpack.c.b16 %v1539, %v1538
    %v1549 = vpack.c.b16 %v1541, %v1540
    %1558 = vmatpush.bf16.xpose.msra.mxu0 %v1549
    %1559 = vmatpush.bf16.xpose.msra.mxu0 %v1548
    %1560 = vmatpush.bf16.xpose.msra.mxu0 %v1547
    %1561 = vmatpush.bf16.xpose.msra.mxu0 %v1546
    %1562 = vmatpush.bf16.xpose.msra.mxu0 %v1545
    %1563 = vmatpush.bf16.xpose.msra.mxu0 %v1544
    %1564 = vmatpush.bf16.xpose.msra.mxu0 %v1543
    %1565 = vmatpush.bf16.xpose.msra.mxu0 %v1542
    %1566 = vmatmul.bf16.gmra.mxu0 %v1509
    %v1567 = vpop.f32.mrf.mxu0
    %v1568 = vadd.f32 0.0, %v1567
    %v1569 = vpop.f32.mrf.mxu0
    %1570 = vdwg.mxu0
    %v1587 = vunpack.c.l.b16 %v1397
    %v1588 = vunpack.c.l.b16 %v1398
    %v1589 = vunpack.c.l.b16 %v1399
    %v1590 = vunpack.c.l.b16 %v1400
    %v1591 = vunpack.c.l.b16 %v1401
    %v1592 = vunpack.c.l.b16 %v1402
    %v1593 = vunpack.c.l.b16 %v1403
    %v1594 = vunpack.c.l.b16 %v1404
    %v1595 = vunpack.c.l.b16 %v1405
    %v1596 = vunpack.c.l.b16 %v1406
    %v1597 = vunpack.c.l.b16 %v1407
    %v1598 = vunpack.c.l.b16 %v1408
    %v1599 = vunpack.c.l.b16 %v1409
    %v1600 = vunpack.c.l.b16 %v1410
    %v1601 = vunpack.c.l.b16 %v1411
    %v1602 = vunpack.c.l.b16 %v1412
    %v1603 = vpack.c.b16 %v1588, %v1587
    %v1604 = vpack.c.b16 %v1590, %v1589
    %v1605 = vpack.c.b16 %v1592, %v1591
    %v1606 = vpack.c.b16 %v1594, %v1593
    %v1607 = vpack.c.b16 %v1596, %v1595
    %v1608 = vpack.c.b16 %v1598, %v1597
    %v1609 = vpack.c.b16 %v1600, %v1599
    %v1610 = vpack.c.b16 %v1602, %v1601
    %1619 = vmatpush.bf16.xpose.msra.mxu0 %v1610
    %1620 = vmatpush.bf16.xpose.msra.mxu0 %v1609
    %1621 = vmatpush.bf16.xpose.msra.mxu0 %v1608
    %1622 = vmatpush.bf16.xpose.msra.mxu0 %v1607
    %1623 = vmatpush.bf16.xpose.msra.mxu0 %v1606
    %1624 = vmatpush.bf16.xpose.msra.mxu0 %v1605
    %1625 = vmatpush.bf16.xpose.msra.mxu0 %v1604
    %1626 = vmatpush.bf16.xpose.msra.mxu0 %v1603
    %1627 = vmatmul.bf16.gmra.mxu0 %v1509
    %v1628 = vpop.f32.mrf.mxu0
    %v1629 = vadd.f32 0.0, %v1628
    %v1630 = vpop.f32.mrf.mxu0
    %1631 = vdwg.mxu0
    %v1648 = vunpack.c.l.b16 %v1413
    %v1649 = vunpack.c.l.b16 %v1414
    %v1650 = vunpack.c.l.b16 %v1415
    %v1651 = vunpack.c.l.b16 %v1416
    %v1652 = vunpack.c.l.b16 %v1417
    %v1653 = vunpack.c.l.b16 %v1418
    %v1654 = vunpack.c.l.b16 %v1419
    %v1655 = vunpack.c.l.b16 %v1420
    %v1656 = vunpack.c.l.b16 %v1421
    %v1657 = vunpack.c.l.b16 %v1422
    %v1658 = vunpack.c.l.b16 %v1423
    %v1659 = vunpack.c.l.b16 %v1424
    %v1660 = vunpack.c.l.b16 %v1425
    %v1661 = vunpack.c.l.b16 %v1426
    %v1662 = vunpack.c.l.b16 %v1427
    %v1663 = vunpack.c.l.b16 %v1428
    %v1664 = vpack.c.b16 %v1649, %v1648
    %v1665 = vpack.c.b16 %v1651, %v1650
    %v1666 = vpack.c.b16 %v1653, %v1652
    %v1667 = vpack.c.b16 %v1655, %v1654
    %v1668 = vpack.c.b16 %v1657, %v1656
    %v1669 = vpack.c.b16 %v1659, %v1658
    %v1670 = vpack.c.b16 %v1661, %v1660
    %v1671 = vpack.c.b16 %v1663, %v1662
    %1680 = vmatpush.bf16.xpose.msra.mxu0 %v1671
    %1681 = vmatpush.bf16.xpose.msra.mxu0 %v1670
    %1682 = vmatpush.bf16.xpose.msra.mxu0 %v1669
    %1683 = vmatpush.bf16.xpose.msra.mxu0 %v1668
    %1684 = vmatpush.bf16.xpose.msra.mxu0 %v1667
    %1685 = vmatpush.bf16.xpose.msra.mxu0 %v1666
    %1686 = vmatpush.bf16.xpose.msra.mxu0 %v1665
    %1687 = vmatpush.bf16.xpose.msra.mxu0 %v1664
    %1688 = vmatmul.bf16.gmra.mxu0 %v1509
    %v1689 = vpop.f32.mrf.mxu0
    %v1690 = vadd.f32 0.0, %v1689
    %v1691 = vpop.f32.mrf.mxu0
    %1692 = vdwg.mxu0
    %v1709 = vunpack.c.l.b16 %v1429
    %v1710 = vunpack.c.l.b16 %v1430
    %v1711 = vunpack.c.l.b16 %v1431
    %v1712 = vunpack.c.l.b16 %v1432
    %v1713 = vunpack.c.l.b16 %v1433
    %v1714 = vunpack.c.l.b16 %v1434
    %v1715 = vunpack.c.l.b16 %v1435
    %v1716 = vunpack.c.l.b16 %v1436
    %v1717 = vunpack.c.l.b16 %v1437
    %v1718 = vunpack.c.l.b16 %v1438
    %v1719 = vunpack.c.l.b16 %v1439
    %v1720 = vunpack.c.l.b16 %v1440
    %v1721 = vunpack.c.l.b16 %v1441
    %v1722 = vunpack.c.l.b16 %v1442
    %v1723 = vunpack.c.l.b16 %v1443
    %v1724 = vunpack.c.l.b16 %v1444
    %v1725 = vpack.c.b16 %v1710, %v1709
    %v1726 = vpack.c.b16 %v1712, %v1711
    %v1727 = vpack.c.b16 %v1714, %v1713
    %v1728 = vpack.c.b16 %v1716, %v1715
    %v1729 = vpack.c.b16 %v1718, %v1717
    %v1730 = vpack.c.b16 %v1720, %v1719
    %v1731 = vpack.c.b16 %v1722, %v1721
    %v1732 = vpack.c.b16 %v1724, %v1723
    %1741 = vmatpush.bf16.xpose.msra.mxu0 %v1732
    %1742 = vmatpush.bf16.xpose.msra.mxu0 %v1731
    %1743 = vmatpush.bf16.xpose.msra.mxu0 %v1730
    %1744 = vmatpush.bf16.xpose.msra.mxu0 %v1729
    %1745 = vmatpush.bf16.xpose.msra.mxu0 %v1728
    %1746 = vmatpush.bf16.xpose.msra.mxu0 %v1727
    %1747 = vmatpush.bf16.xpose.msra.mxu0 %v1726
    %1748 = vmatpush.bf16.xpose.msra.mxu0 %v1725
    %1749 = vmatmul.bf16.gmra.mxu0 %v1509
    %v1750 = vpop.f32.mrf.mxu0
    %v1751 = vadd.f32 0.0, %v1750
    %v1752 = vpop.f32.mrf.mxu0
    %1753 = vdwg.mxu0
    %v1770 = vunpack.c.l.b16 %v1445
    %v1771 = vunpack.c.l.b16 %v1446
    %v1772 = vunpack.c.l.b16 %v1447
    %v1773 = vunpack.c.l.b16 %v1448
    %v1774 = vunpack.c.l.b16 %v1449
    %v1775 = vunpack.c.l.b16 %v1450
    %v1776 = vunpack.c.l.b16 %v1451
    %v1777 = vunpack.c.l.b16 %v1452
    %v1778 = vunpack.c.l.b16 %v1453
    %v1779 = vunpack.c.l.b16 %v1454
    %v1780 = vunpack.c.l.b16 %v1455
    %v1781 = vunpack.c.l.b16 %v1456
    %v1782 = vunpack.c.l.b16 %v1457
    %v1783 = vunpack.c.l.b16 %v1458
    %v1784 = vunpack.c.l.b16 %v1459
    %v1785 = vunpack.c.l.b16 %v1460
    %v1786 = vpack.c.b16 %v1771, %v1770
    %v1787 = vpack.c.b16 %v1773, %v1772
    %v1788 = vpack.c.b16 %v1775, %v1774
    %v1789 = vpack.c.b16 %v1777, %v1776
    %v1790 = vpack.c.b16 %v1779, %v1778
    %v1791 = vpack.c.b16 %v1781, %v1780
    %v1792 = vpack.c.b16 %v1783, %v1782
    %v1793 = vpack.c.b16 %v1785, %v1784
    %1802 = vmatpush.bf16.xpose.msra.mxu0 %v1793
    %1803 = vmatpush.bf16.xpose.msra.mxu0 %v1792
    %1804 = vmatpush.bf16.xpose.msra.mxu0 %v1791
    %1805 = vmatpush.bf16.xpose.msra.mxu0 %v1790
    %1806 = vmatpush.bf16.xpose.msra.mxu0 %v1789
    %1807 = vmatpush.bf16.xpose.msra.mxu0 %v1788
    %1808 = vmatpush.bf16.xpose.msra.mxu0 %v1787
    %1809 = vmatpush.bf16.xpose.msra.mxu0 %v1786
    %1810 = vmatmul.bf16.gmra.mxu0 %v1509
    %v1811 = vpop.f32.mrf.mxu0
    %v1812 = vadd.f32 0.0, %v1811
    %v1813 = vpop.f32.mrf.mxu0
    %1814 = vdwg.mxu0
    %v1831 = vunpack.c.l.b16 %v1461
    %v1832 = vunpack.c.l.b16 %v1462
    %v1833 = vunpack.c.l.b16 %v1463
    %v1834 = vunpack.c.l.b16 %v1464
    %v1835 = vunpack.c.l.b16 %v1465
    %v1836 = vunpack.c.l.b16 %v1466
    %v1837 = vunpack.c.l.b16 %v1467
    %v1838 = vunpack.c.l.b16 %v1468
    %v1839 = vunpack.c.l.b16 %v1469
    %v1840 = vunpack.c.l.b16 %v1470
    %v1841 = vunpack.c.l.b16 %v1471
    %v1842 = vunpack.c.l.b16 %v1472
    %v1843 = vunpack.c.l.b16 %v1473
    %v1844 = vunpack.c.l.b16 %v1474
    %v1845 = vunpack.c.l.b16 %v1475
    %v1846 = vunpack.c.l.b16 %v1476
    %v1847 = vpack.c.b16 %v1832, %v1831
    %v1848 = vpack.c.b16 %v1834, %v1833
    %v1849 = vpack.c.b16 %v1836, %v1835
    %v1850 = vpack.c.b16 %v1838, %v1837
    %v1851 = vpack.c.b16 %v1840, %v1839
    %v1852 = vpack.c.b16 %v1842, %v1841
    %v1853 = vpack.c.b16 %v1844, %v1843
    %v1854 = vpack.c.b16 %v1846, %v1845
    %1863 = vmatpush.bf16.xpose.msra.mxu0 %v1854
    %1864 = vmatpush.bf16.xpose.msra.mxu0 %v1853
    %1865 = vmatpush.bf16.xpose.msra.mxu0 %v1852
    %1866 = vmatpush.bf16.xpose.msra.mxu0 %v1851
    %1867 = vmatpush.bf16.xpose.msra.mxu0 %v1850
    %1868 = vmatpush.bf16.xpose.msra.mxu0 %v1849
    %1869 = vmatpush.bf16.xpose.msra.mxu0 %v1848
    %1870 = vmatpush.bf16.xpose.msra.mxu0 %v1847
    %1871 = vmatmul.bf16.gmra.mxu0 %v1509
    %v1872 = vpop.f32.mrf.mxu0
    %v1873 = vadd.f32 0.0, %v1872
    %v1874 = vpop.f32.mrf.mxu0
    %1875 = vdwg.mxu0
    %v1892 = vunpack.c.l.b16 %v1477
    %v1893 = vunpack.c.l.b16 %v1478
    %v1894 = vunpack.c.l.b16 %v1479
    %v1895 = vunpack.c.l.b16 %v1480
    %v1896 = vunpack.c.l.b16 %v1481
    %v1897 = vunpack.c.l.b16 %v1482
    %v1898 = vunpack.c.l.b16 %v1483
    %v1899 = vunpack.c.l.b16 %v1484
    %v1900 = vunpack.c.l.b16 %v1485
    %v1901 = vunpack.c.l.b16 %v1486
    %v1902 = vunpack.c.l.b16 %v1487
    %v1903 = vunpack.c.l.b16 %v1488
    %v1904 = vunpack.c.l.b16 %v1489
    %v1905 = vunpack.c.l.b16 %v1490
    %v1906 = vunpack.c.l.b16 %v1491
    %v1907 = vunpack.c.l.b16 %v1492
    %v1908 = vpack.c.b16 %v1893, %v1892
    %v1909 = vpack.c.b16 %v1895, %v1894
    %v1910 = vpack.c.b16 %v1897, %v1896
    %v1911 = vpack.c.b16 %v1899, %v1898
    %v1912 = vpack.c.b16 %v1901, %v1900
    %v1913 = vpack.c.b16 %v1903, %v1902
    %v1914 = vpack.c.b16 %v1905, %v1904
    %v1915 = vpack.c.b16 %v1907, %v1906
    %1924 = vmatpush.bf16.xpose.msra.mxu0 %v1915
    %1925 = vmatpush.bf16.xpose.msra.mxu0 %v1914
    %1926 = vmatpush.bf16.xpose.msra.mxu0 %v1913
    %1927 = vmatpush.bf16.xpose.msra.mxu0 %v1912
    %1928 = vmatpush.bf16.xpose.msra.mxu0 %v1911
    %1929 = vmatpush.bf16.xpose.msra.mxu0 %v1910
    %1930 = vmatpush.bf16.xpose.msra.mxu0 %v1909
    %1931 = vmatpush.bf16.xpose.msra.mxu0 %v1908
    %1932 = vmatmul.bf16.gmra.mxu0 %v1509
    %v1933 = vpop.f32.mrf.mxu0
    %v1934 = vadd.f32 0.0, %v1933
    %v1935 = vpop.f32.mrf.mxu0
    %1936 = vdwg.mxu0
    %v1953 = vunpack.c.l.b16 %v1493
    %v1954 = vunpack.c.l.b16 %v1494
    %v1955 = vunpack.c.l.b16 %v1495
    %v1956 = vunpack.c.l.b16 %v1496
    %v1957 = vunpack.c.l.b16 %v1497
    %v1958 = vunpack.c.l.b16 %v1498
    %v1959 = vunpack.c.l.b16 %v1499
    %v1960 = vunpack.c.l.b16 %v1500
    %v1961 = vunpack.c.l.b16 %v1501
    %v1962 = vunpack.c.l.b16 %v1502
    %v1963 = vunpack.c.l.b16 %v1503
    %v1964 = vunpack.c.l.b16 %v1504
    %v1965 = vunpack.c.l.b16 %v1505
    %v1966 = vunpack.c.l.b16 %v1506
    %v1967 = vunpack.c.l.b16 %v1507
    %v1968 = vunpack.c.l.b16 %v1508
    %v1969 = vpack.c.b16 %v1954, %v1953
    %v1970 = vpack.c.b16 %v1956, %v1955
    %v1971 = vpack.c.b16 %v1958, %v1957
    %v1972 = vpack.c.b16 %v1960, %v1959
    %v1973 = vpack.c.b16 %v1962, %v1961
    %v1974 = vpack.c.b16 %v1964, %v1963
    %v1975 = vpack.c.b16 %v1966, %v1965
    %v1976 = vpack.c.b16 %v1968, %v1967
    %1985 = vmatpush.bf16.xpose.msra.mxu0 %v1976
    %1986 = vmatpush.bf16.xpose.msra.mxu0 %v1975
    %1987 = vmatpush.bf16.xpose.msra.mxu0 %v1974
    %1988 = vmatpush.bf16.xpose.msra.mxu0 %v1973
    %1989 = vmatpush.bf16.xpose.msra.mxu0 %v1972
    %1990 = vmatpush.bf16.xpose.msra.mxu0 %v1971
    %1991 = vmatpush.bf16.xpose.msra.mxu0 %v1970
    %1992 = vmatpush.bf16.xpose.msra.mxu0 %v1969
    %1993 = vmatmul.bf16.gmra.mxu0 %v1509
    %v1994 = vpop.f32.mrf.mxu0
    %v1995 = vadd.f32 0.0, %v1994
    %v1996 = vpop.f32.mrf.mxu0
    %1997 = vdwg.mxu0
    %v1998 = vld [vmem:[#allocation2] sm:$0x1]
    %v2000 = vperm.slane %v1998, 0
    %2001 = vset.pattern.permute.xlu0 0
    %2002 = vperm.xlu0 %2001, %v2000
    %v2003 = vpop.permute.xlu0 %2002
    %v2005 = vadd.f32 %v1568, %v2003
    %v2006 = vadd.f32 %v1629, %v2003
    %v2007 = vadd.f32 %v1690, %v2003
    %v2008 = vadd.f32 %v1751, %v2003
    %v2009 = vadd.f32 %v1812, %v2003
    %v2010 = vadd.f32 %v1873, %v2003
    %v2011 = vadd.f32 %v1934, %v2003
    %v2012 = vadd.f32 %v1995, %v2003
    %v2013 = vlaneseq
    %v2014 = vand.u32 %v2013, 127
    %vm2015 = vcmp.lt.s32.totalorder %v2014, 8
    %v2024 = vrot.slane %v2006, 7
    %vm2025 = vcmask 1041409
    %v2026 = vsel %vm2025, %v2024, %v2005
    %v2027 = vrot.slane %v2007, 6
    %vm2028 = vcmask 1042434
    %v2029 = vsel %vm2028, %v2027, %v2026
    %v2030 = vrot.slane %v2008, 5
    %vm2031 = vcmask 1043459
    %v2032 = vsel %vm2031, %v2030, %v2029
    %v2033 = vrot.slane %v2009, 4
    %vm2034 = vcmask 1044484
    %v2035 = vsel %vm2034, %v2033, %v2032
    %v2036 = vrot.slane %v2010, 3
    %vm2037 = vcmask 1045509
    %v2038 = vsel %vm2037, %v2036, %v2035
    %v2039 = vrot.slane %v2011, 2
    %vm2040 = vcmask 1046534
    %v2041 = vsel %vm2040, %v2039, %v2038
    %v2042 = vrot.slane %v2012, 1
    %vm2043 = vcmask 1047559
    %v2044 = vsel %vm2043, %v2042, %v2041
    %v2046 = vsel %vm2015, %v2044, -1e+30
    %2047 = vmax.xlane.f32.xlu0 %v2046
    %v2048 = vpop.xlane.xlu0 %2047
    %v2049 = vsub.f32 %v2046, %v2048
    %v2050 = vmul.f32 %v2049, 1.442695
    %v2051 = vpow.pop %v2050
    %2052 = vadd.xlane.f32.xlu0 %v2051
    %v2053 = vpop.xlane.xlu0 %2052
    %v2054 = vrcp.pop %v2053
    %v2055 = vmul.f32 %v2051, %v2054
    %2056 = vst [vmem:[%s19] sm:$0xff] %v2055
    %v2057 = vpack.c.bf16 %v2055, %v2055
    %v2059 = vrot.slane %v2057, 3
    %vm2060 = vcmask 1040384
    %v2063 = vsel %vm2060, %v2057, %v2059
    %v2065 = vsel %vm2025, %v2057, %v2059
    %v2067 = vrot.slane %v2065, 1
    %v2068 = vsel %vm2028, %v2057, %v2059
    %v2070 = vrot.slane %v2068, 2
    %v2071 = vsel %vm2031, %v2057, %v2059
    %v2073 = vrot.slane %v2071, 3
    %v2074 = vunpack.i.l.s16 %v2063
    %v2075 = vunpack.i.h.s16 %v2063
    %v2076 = vunpack.i.l.s16 %v2067
    %v2077 = vunpack.i.h.s16 %v2067
    %v2078 = vunpack.i.l.s16 %v2070
    %v2079 = vunpack.i.h.s16 %v2070
    %v2080 = vunpack.i.l.s16 %v2073
    %v2081 = vunpack.i.h.s16 %v2073
    %v2082 = vpack.c.bf16 %v782, %v782
    %v2083 = vpack.c.bf16 %v784, %v784
    %v2084 = vpack.c.bf16 %v787, %v787
    %v2085 = vpack.c.bf16 %v789, %v789
    %v2086 = vpack.c.bf16 %v792, %v792
    %v2087 = vpack.c.bf16 %v794, %v794
    %v2088 = vpack.c.bf16 %v797, %v797
    %v2089 = vpack.c.bf16 %v799, %v799
    %v2090 = vpack.c.bf16 %v802, %v802
    %v2091 = vpack.c.bf16 %v804, %v804
    %v2092 = vpack.c.bf16 %v807, %v807
    %v2093 = vpack.c.bf16 %v809, %v809
    %v2094 = vpack.c.bf16 %v812, %v812
    %v2095 = vpack.c.bf16 %v814, %v814
    %v2096 = vpack.c.bf16 %v817, %v817
    %v2097 = vpack.c.bf16 %v819, %v819
    %v2098 = vpack.c.bf16 %v822, %v822
    %v2099 = vpack.c.bf16 %v824, %v824
    %v2100 = vpack.c.bf16 %v827, %v827
    %v2101 = vpack.c.bf16 %v829, %v829
    %v2102 = vpack.c.bf16 %v832, %v832
    %v2103 = vpack.c.bf16 %v834, %v834
    %v2104 = vpack.c.bf16 %v837, %v837
    %v2105 = vpack.c.bf16 %v839, %v839
    %v2106 = vpack.c.bf16 %v842, %v842
    %v2107 = vpack.c.bf16 %v844, %v844
    %v2108 = vpack.c.bf16 %v847, %v847
    %v2109 = vpack.c.bf16 %v849, %v849
    %v2110 = vpack.c.bf16 %v852, %v852
    %v2111 = vpack.c.bf16 %v854, %v854
    %v2112 = vpack.c.bf16 %v857, %v857
    %v2113 = vpack.c.bf16 %v859, %v859
    %v2114 = vpack.c.bf16 %v862, %v862
    %v2115 = vpack.c.bf16 %v864, %v864
    %v2116 = vpack.c.bf16 %v867, %v867
    %v2117 = vpack.c.bf16 %v869, %v869
    %v2118 = vpack.c.bf16 %v872, %v872
    %v2119 = vpack.c.bf16 %v874, %v874
    %v2120 = vpack.c.bf16 %v877, %v877
    %v2121 = vpack.c.bf16 %v879, %v879
    %v2122 = vpack.c.bf16 %v882, %v882
    %v2123 = vpack.c.bf16 %v884, %v884
    %v2124 = vpack.c.bf16 %v887, %v887
    %v2125 = vpack.c.bf16 %v889, %v889
    %v2126 = vpack.c.bf16 %v892, %v892
    %v2127 = vpack.c.bf16 %v894, %v894
    %v2128 = vpack.c.bf16 %v897, %v897
    %v2129 = vpack.c.bf16 %v899, %v899
    %v2130 = vpack.c.bf16 %v902, %v902
    %v2131 = vpack.c.bf16 %v904, %v904
    %v2132 = vpack.c.bf16 %v907, %v907
    %v2133 = vpack.c.bf16 %v909, %v909
    %v2134 = vpack.c.bf16 %v912, %v912
    %v2135 = vpack.c.bf16 %v914, %v914
    %v2136 = vpack.c.bf16 %v917, %v917
    %v2137 = vpack.c.bf16 %v919, %v919
    %v2138 = vpack.c.bf16 %v922, %v922
    %v2139 = vpack.c.bf16 %v924, %v924
    %v2140 = vpack.c.bf16 %v927, %v927
    %v2141 = vpack.c.bf16 %v929, %v929
    %v2142 = vpack.c.bf16 %v932, %v932
    %v2143 = vpack.c.bf16 %v934, %v934
    %v2144 = vpack.c.bf16 %v937, %v937
    %v2145 = vpack.c.bf16 %v939, %v939
    %v2146 = vpack.c.bf16 %v942, %v942
    %v2147 = vpack.c.bf16 %v944, %v944
    %v2148 = vpack.c.bf16 %v947, %v947
    %v2149 = vpack.c.bf16 %v949, %v949
    %v2150 = vpack.c.bf16 %v952, %v952
    %v2151 = vpack.c.bf16 %v954, %v954
    %v2152 = vpack.c.bf16 %v957, %v957
    %v2153 = vpack.c.bf16 %v959, %v959
    %v2154 = vpack.c.bf16 %v962, %v962
    %v2155 = vpack.c.bf16 %v964, %v964
    %v2156 = vpack.c.bf16 %v967, %v967
    %v2157 = vpack.c.bf16 %v969, %v969
    %v2158 = vpack.c.bf16 %v972, %v972
    %v2159 = vpack.c.bf16 %v974, %v974
    %v2160 = vpack.c.bf16 %v977, %v977
    %v2161 = vpack.c.bf16 %v979, %v979
    %v2162 = vpack.c.bf16 %v982, %v982
    %v2163 = vpack.c.bf16 %v984, %v984
    %v2164 = vpack.c.bf16 %v987, %v987
    %v2165 = vpack.c.bf16 %v989, %v989
    %v2166 = vpack.c.bf16 %v992, %v992
    %v2167 = vpack.c.bf16 %v994, %v994
    %v2168 = vpack.c.bf16 %v997, %v997
    %v2169 = vpack.c.bf16 %v999, %v999
    %v2170 = vpack.c.bf16 %v1002, %v1002
    %v2171 = vpack.c.bf16 %v1004, %v1004
    %v2172 = vpack.c.bf16 %v1007, %v1007
    %v2173 = vpack.c.bf16 %v1009, %v1009
    %v2174 = vpack.c.bf16 %v1012, %v1012
    %v2175 = vpack.c.bf16 %v1014, %v1014
    %v2176 = vpack.c.bf16 %v1017, %v1017
    %v2177 = vpack.c.bf16 %v1019, %v1019
    %v2178 = vpack.c.bf16 %v1022, %v1022
    %v2179 = vpack.c.bf16 %v1024, %v1024
    %v2180 = vpack.c.bf16 %v1027, %v1027
    %v2181 = vpack.c.bf16 %v1029, %v1029
    %v2182 = vpack.c.bf16 %v1032, %v1032
    %v2183 = vpack.c.bf16 %v1034, %v1034
    %v2184 = vpack.c.bf16 %v1037, %v1037
    %v2185 = vpack.c.bf16 %v1039, %v1039
    %v2186 = vpack.c.bf16 %v1042, %v1042
    %v2187 = vpack.c.bf16 %v1044, %v1044
    %v2188 = vpack.c.bf16 %v1047, %v1047
    %v2189 = vpack.c.bf16 %v1049, %v1049
    %v2190 = vpack.c.bf16 %v1052, %v1052
    %v2191 = vpack.c.bf16 %v1054, %v1054
    %v2192 = vpack.c.bf16 %v1057, %v1057
    %v2193 = vpack.c.bf16 %v1059, %v1059
    %v2194 = vpack.c.bf16 %v1062, %v1062
    %v2195 = vpack.c.bf16 %v1064, %v1064
    %v2196 = vpack.c.bf16 %v1067, %v1067
    %v2197 = vpack.c.bf16 %v1069, %v1069
    %v2198 = vpack.c.bf16 %v1072, %v1072
    %v2199 = vpack.c.bf16 %v1074, %v1074
    %v2200 = vpack.c.bf16 %v1077, %v1077
    %v2201 = vpack.c.bf16 %v1079, %v1079
    %v2202 = vpack.c.bf16 %v1082, %v1082
    %v2203 = vpack.c.bf16 %v1084, %v1084
    %v2204 = vpack.c.bf16 %v1087, %v1087
    %v2205 = vpack.c.bf16 %v1089, %v1089
    %v2206 = vpack.c.bf16 %v1092, %v1092
    %v2207 = vpack.c.bf16 %v1094, %v1094
    %v2208 = vpack.c.bf16 %v1097, %v1097
    %v2209 = vpack.c.bf16 %v1099, %v1099
    %v2210 = vpack.i.b16 %v2074, %v2074
    %v2211 = vperm.slane %v2210, 0
    %v2229 = vunpack.c.l.b16 %v2082
    %v2230 = vunpack.c.l.b16 %v2083
    %v2231 = vunpack.c.l.b16 %v2084
    %v2232 = vunpack.c.l.b16 %v2085
    %v2233 = vunpack.c.l.b16 %v2086
    %v2234 = vunpack.c.l.b16 %v2087
    %v2235 = vunpack.c.l.b16 %v2088
    %v2236 = vunpack.c.l.b16 %v2089
    %v2237 = vunpack.c.l.b16 %v2090
    %v2238 = vunpack.c.l.b16 %v2091
    %v2239 = vunpack.c.l.b16 %v2092
    %v2240 = vunpack.c.l.b16 %v2093
    %v2241 = vunpack.c.l.b16 %v2094
    %v2242 = vunpack.c.l.b16 %v2095
    %v2243 = vunpack.c.l.b16 %v2096
    %v2244 = vunpack.c.l.b16 %v2097
    %v2245 = vpack.c.b16 %v2230, %v2229
    %v2246 = vpack.c.b16 %v2232, %v2231
    %v2247 = vpack.c.b16 %v2234, %v2233
    %v2248 = vpack.c.b16 %v2236, %v2235
    %v2249 = vpack.c.b16 %v2238, %v2237
    %v2250 = vpack.c.b16 %v2240, %v2239
    %v2251 = vpack.c.b16 %v2242, %v2241
    %v2252 = vpack.c.b16 %v2244, %v2243
    %2261 = vmatpush.bf16.msra.mxu0 %v2252
    %2262 = vmatpush.bf16.msra.mxu0 %v2251
    %2263 = vmatpush.bf16.msra.mxu0 %v2250
    %2264 = vmatpush.bf16.msra.mxu0 %v2249
    %2265 = vmatpush.bf16.msra.mxu0 %v2248
    %2266 = vmatpush.bf16.msra.mxu0 %v2247
    %2267 = vmatpush.bf16.msra.mxu0 %v2246
    %2268 = vmatpush.bf16.msra.mxu0 %v2245
    %2269 = vmatmul.bf16.gmra.mxu0 %v2211
    %v2270 = vpop.f32.mrf.mxu0
    %v2271 = vadd.f32 0.0, %v2270
    %v2272 = vpop.f32.mrf.mxu0
    %2273 = vdwg.mxu0
    %v2274 = vpack.i.b16 %v2075, %v2075
    %v2275 = vperm.slane %v2274, 0
    %v2293 = vunpack.c.l.b16 %v2098
    %v2294 = vunpack.c.l.b16 %v2099
    %v2295 = vunpack.c.l.b16 %v2100
    %v2296 = vunpack.c.l.b16 %v2101
    %v2297 = vunpack.c.l.b16 %v2102
    %v2298 = vunpack.c.l.b16 %v2103
    %v2299 = vunpack.c.l.b16 %v2104
    %v2300 = vunpack.c.l.b16 %v2105
    %v2301 = vunpack.c.l.b16 %v2106
    %v2302 = vunpack.c.l.b16 %v2107
    %v2303 = vunpack.c.l.b16 %v2108
    %v2304 = vunpack.c.l.b16 %v2109
    %v2305 = vunpack.c.l.b16 %v2110
    %v2306 = vunpack.c.l.b16 %v2111
    %v2307 = vunpack.c.l.b16 %v2112
    %v2308 = vunpack.c.l.b16 %v2113
    %v2309 = vpack.c.b16 %v2294, %v2293
    %v2310 = vpack.c.b16 %v2296, %v2295
    %v2311 = vpack.c.b16 %v2298, %v2297
    %v2312 = vpack.c.b16 %v2300, %v2299
    %v2313 = vpack.c.b16 %v2302, %v2301
    %v2314 = vpack.c.b16 %v2304, %v2303
    %v2315 = vpack.c.b16 %v2306, %v2305
    %v2316 = vpack.c.b16 %v2308, %v2307
    %2325 = vmatpush.bf16.msra.mxu0 %v2316
    %2326 = vmatpush.bf16.msra.mxu0 %v2315
    %2327 = vmatpush.bf16.msra.mxu0 %v2314
    %2328 = vmatpush.bf16.msra.mxu0 %v2313
    %2329 = vmatpush.bf16.msra.mxu0 %v2312
    %2330 = vmatpush.bf16.msra.mxu0 %v2311
    %2331 = vmatpush.bf16.msra.mxu0 %v2310
    %2332 = vmatpush.bf16.msra.mxu0 %v2309
    %2333 = vmatmul.bf16.gmra.mxu0 %v2275
    %v2334 = vpop.f32.mrf.mxu0
    %v2335 = vadd.f32 0.0, %v2334
    %v2336 = vpop.f32.mrf.mxu0
    %2337 = vdwg.mxu0
    %v2338 = vpack.i.b16 %v2076, %v2076
    %v2339 = vperm.slane %v2338, 0
    %v2357 = vunpack.c.l.b16 %v2114
    %v2358 = vunpack.c.l.b16 %v2115
    %v2359 = vunpack.c.l.b16 %v2116
    %v2360 = vunpack.c.l.b16 %v2117
    %v2361 = vunpack.c.l.b16 %v2118
    %v2362 = vunpack.c.l.b16 %v2119
    %v2363 = vunpack.c.l.b16 %v2120
    %v2364 = vunpack.c.l.b16 %v2121
    %v2365 = vunpack.c.l.b16 %v2122
    %v2366 = vunpack.c.l.b16 %v2123
    %v2367 = vunpack.c.l.b16 %v2124
    %v2368 = vunpack.c.l.b16 %v2125
    %v2369 = vunpack.c.l.b16 %v2126
    %v2370 = vunpack.c.l.b16 %v2127
    %v2371 = vunpack.c.l.b16 %v2128
    %v2372 = vunpack.c.l.b16 %v2129
    %v2373 = vpack.c.b16 %v2358, %v2357
    %v2374 = vpack.c.b16 %v2360, %v2359
    %v2375 = vpack.c.b16 %v2362, %v2361
    %v2376 = vpack.c.b16 %v2364, %v2363
    %v2377 = vpack.c.b16 %v2366, %v2365
    %v2378 = vpack.c.b16 %v2368, %v2367
    %v2379 = vpack.c.b16 %v2370, %v2369
    %v2380 = vpack.c.b16 %v2372, %v2371
    %2389 = vmatpush.bf16.msra.mxu0 %v2380
    %2390 = vmatpush.bf16.msra.mxu0 %v2379
    %2391 = vmatpush.bf16.msra.mxu0 %v2378
    %2392 = vmatpush.bf16.msra.mxu0 %v2377
    %2393 = vmatpush.bf16.msra.mxu0 %v2376
    %2394 = vmatpush.bf16.msra.mxu0 %v2375
    %2395 = vmatpush.bf16.msra.mxu0 %v2374
    %2396 = vmatpush.bf16.msra.mxu0 %v2373
    %2397 = vmatmul.bf16.gmra.mxu0 %v2339
    %v2398 = vpop.f32.mrf.mxu0
    %v2399 = vadd.f32 0.0, %v2398
    %v2400 = vpop.f32.mrf.mxu0
    %2401 = vdwg.mxu0
    %v2402 = vpack.i.b16 %v2077, %v2077
    %v2403 = vperm.slane %v2402, 0
    %v2421 = vunpack.c.l.b16 %v2130
    %v2422 = vunpack.c.l.b16 %v2131
    %v2423 = vunpack.c.l.b16 %v2132
    %v2424 = vunpack.c.l.b16 %v2133
    %v2425 = vunpack.c.l.b16 %v2134
    %v2426 = vunpack.c.l.b16 %v2135
    %v2427 = vunpack.c.l.b16 %v2136
    %v2428 = vunpack.c.l.b16 %v2137
    %v2429 = vunpack.c.l.b16 %v2138
    %v2430 = vunpack.c.l.b16 %v2139
    %v2431 = vunpack.c.l.b16 %v2140
    %v2432 = vunpack.c.l.b16 %v2141
    %v2433 = vunpack.c.l.b16 %v2142
    %v2434 = vunpack.c.l.b16 %v2143
    %v2435 = vunpack.c.l.b16 %v2144
    %v2436 = vunpack.c.l.b16 %v2145
    %v2437 = vpack.c.b16 %v2422, %v2421
    %v2438 = vpack.c.b16 %v2424, %v2423
    %v2439 = vpack.c.b16 %v2426, %v2425
    %v2440 = vpack.c.b16 %v2428, %v2427
    %v2441 = vpack.c.b16 %v2430, %v2429
    %v2442 = vpack.c.b16 %v2432, %v2431
    %v2443 = vpack.c.b16 %v2434, %v2433
    %v2444 = vpack.c.b16 %v2436, %v2435
    %2453 = vmatpush.bf16.msra.mxu0 %v2444
    %2454 = vmatpush.bf16.msra.mxu0 %v2443
    %2455 = vmatpush.bf16.msra.mxu0 %v2442
    %2456 = vmatpush.bf16.msra.mxu0 %v2441
    %2457 = vmatpush.bf16.msra.mxu0 %v2440
    %2458 = vmatpush.bf16.msra.mxu0 %v2439
    %2459 = vmatpush.bf16.msra.mxu0 %v2438
    %2460 = vmatpush.bf16.msra.mxu0 %v2437
    %2461 = vmatmul.bf16.gmra.mxu0 %v2403
    %v2462 = vpop.f32.mrf.mxu0
    %v2463 = vadd.f32 0.0, %v2462
    %v2464 = vpop.f32.mrf.mxu0
    %2465 = vdwg.mxu0
    %v2466 = vpack.i.b16 %v2078, %v2078
    %v2467 = vperm.slane %v2466, 0
    %v2485 = vunpack.c.l.b16 %v2146
    %v2486 = vunpack.c.l.b16 %v2147
    %v2487 = vunpack.c.l.b16 %v2148
    %v2488 = vunpack.c.l.b16 %v2149
    %v2489 = vunpack.c.l.b16 %v2150
    %v2490 = vunpack.c.l.b16 %v2151
    %v2491 = vunpack.c.l.b16 %v2152
    %v2492 = vunpack.c.l.b16 %v2153
    %v2493 = vunpack.c.l.b16 %v2154
    %v2494 = vunpack.c.l.b16 %v2155
    %v2495 = vunpack.c.l.b16 %v2156
    %v2496 = vunpack.c.l.b16 %v2157
    %v2497 = vunpack.c.l.b16 %v2158
    %v2498 = vunpack.c.l.b16 %v2159
    %v2499 = vunpack.c.l.b16 %v2160
    %v2500 = vunpack.c.l.b16 %v2161
    %v2501 = vpack.c.b16 %v2486, %v2485
    %v2502 = vpack.c.b16 %v2488, %v2487
    %v2503 = vpack.c.b16 %v2490, %v2489
    %v2504 = vpack.c.b16 %v2492, %v2491
    %v2505 = vpack.c.b16 %v2494, %v2493
    %v2506 = vpack.c.b16 %v2496, %v2495
    %v2507 = vpack.c.b16 %v2498, %v2497
    %v2508 = vpack.c.b16 %v2500, %v2499
    %2517 = vmatpush.bf16.msra.mxu0 %v2508
    %2518 = vmatpush.bf16.msra.mxu0 %v2507
    %2519 = vmatpush.bf16.msra.mxu0 %v2506
    %2520 = vmatpush.bf16.msra.mxu0 %v2505
    %2521 = vmatpush.bf16.msra.mxu0 %v2504
    %2522 = vmatpush.bf16.msra.mxu0 %v2503
    %2523 = vmatpush.bf16.msra.mxu0 %v2502
    %2524 = vmatpush.bf16.msra.mxu0 %v2501
    %2525 = vmatmul.bf16.gmra.mxu0 %v2467
    %v2526 = vpop.f32.mrf.mxu0
    %v2527 = vadd.f32 0.0, %v2526
    %v2528 = vpop.f32.mrf.mxu0
    %2529 = vdwg.mxu0
    %v2530 = vpack.i.b16 %v2079, %v2079
    %v2531 = vperm.slane %v2530, 0
    %v2549 = vunpack.c.l.b16 %v2162
    %v2550 = vunpack.c.l.b16 %v2163
    %v2551 = vunpack.c.l.b16 %v2164
    %v2552 = vunpack.c.l.b16 %v2165
    %v2553 = vunpack.c.l.b16 %v2166
    %v2554 = vunpack.c.l.b16 %v2167
    %v2555 = vunpack.c.l.b16 %v2168
    %v2556 = vunpack.c.l.b16 %v2169
    %v2557 = vunpack.c.l.b16 %v2170
    %v2558 = vunpack.c.l.b16 %v2171
    %v2559 = vunpack.c.l.b16 %v2172
    %v2560 = vunpack.c.l.b16 %v2173
    %v2561 = vunpack.c.l.b16 %v2174
    %v2562 = vunpack.c.l.b16 %v2175
    %v2563 = vunpack.c.l.b16 %v2176
    %v2564 = vunpack.c.l.b16 %v2177
    %v2565 = vpack.c.b16 %v2550, %v2549
    %v2566 = vpack.c.b16 %v2552, %v2551
    %v2567 = vpack.c.b16 %v2554, %v2553
    %v2568 = vpack.c.b16 %v2556, %v2555
    %v2569 = vpack.c.b16 %v2558, %v2557
    %v2570 = vpack.c.b16 %v2560, %v2559
    %v2571 = vpack.c.b16 %v2562, %v2561
    %v2572 = vpack.c.b16 %v2564, %v2563
    %2581 = vmatpush.bf16.msra.mxu0 %v2572
    %2582 = vmatpush.bf16.msra.mxu0 %v2571
    %2583 = vmatpush.bf16.msra.mxu0 %v2570
    %2584 = vmatpush.bf16.msra.mxu0 %v2569
    %2585 = vmatpush.bf16.msra.mxu0 %v2568
    %2586 = vmatpush.bf16.msra.mxu0 %v2567
    %2587 = vmatpush.bf16.msra.mxu0 %v2566
    %2588 = vmatpush.bf16.msra.mxu0 %v2565
    %2589 = vmatmul.bf16.gmra.mxu0 %v2531
    %v2590 = vpop.f32.mrf.mxu0
    %v2591 = vadd.f32 0.0, %v2590
    %v2592 = vpop.f32.mrf.mxu0
    %2593 = vdwg.mxu0
    %v2594 = vpack.i.b16 %v2080, %v2080
    %v2595 = vperm.slane %v2594, 0
    %v2613 = vunpack.c.l.b16 %v2178
    %v2614 = vunpack.c.l.b16 %v2179
    %v2615 = vunpack.c.l.b16 %v2180
    %v2616 = vunpack.c.l.b16 %v2181
    %v2617 = vunpack.c.l.b16 %v2182
    %v2618 = vunpack.c.l.b16 %v2183
    %v2619 = vunpack.c.l.b16 %v2184
    %v2620 = vunpack.c.l.b16 %v2185
    %v2621 = vunpack.c.l.b16 %v2186
    %v2622 = vunpack.c.l.b16 %v2187
    %v2623 = vunpack.c.l.b16 %v2188
    %v2624 = vunpack.c.l.b16 %v2189
    %v2625 = vunpack.c.l.b16 %v2190
    %v2626 = vunpack.c.l.b16 %v2191
    %v2627 = vunpack.c.l.b16 %v2192
    %v2628 = vunpack.c.l.b16 %v2193
    %v2629 = vpack.c.b16 %v2614, %v2613
    %v2630 = vpack.c.b16 %v2616, %v2615
    %v2631 = vpack.c.b16 %v2618, %v2617
    %v2632 = vpack.c.b16 %v2620, %v2619
    %v2633 = vpack.c.b16 %v2622, %v2621
    %v2634 = vpack.c.b16 %v2624, %v2623
    %v2635 = vpack.c.b16 %v2626, %v2625
    %v2636 = vpack.c.b16 %v2628, %v2627
    %2645 = vmatpush.bf16.msra.mxu0 %v2636
    %2646 = vmatpush.bf16.msra.mxu0 %v2635
    %2647 = vmatpush.bf16.msra.mxu0 %v2634
    %2648 = vmatpush.bf16.msra.mxu0 %v2633
    %2649 = vmatpush.bf16.msra.mxu0 %v2632
    %2650 = vmatpush.bf16.msra.mxu0 %v2631
    %2651 = vmatpush.bf16.msra.mxu0 %v2630
    %2652 = vmatpush.bf16.msra.mxu0 %v2629
    %2653 = vmatmul.bf16.gmra.mxu0 %v2595
    %v2654 = vpop.f32.mrf.mxu0
    %v2655 = vadd.f32 0.0, %v2654
    %v2656 = vpop.f32.mrf.mxu0
    %2657 = vdwg.mxu0
    %v2658 = vpack.i.b16 %v2081, %v2081
    %v2659 = vperm.slane %v2658, 0
    %v2677 = vunpack.c.l.b16 %v2194
    %v2678 = vunpack.c.l.b16 %v2195
    %v2679 = vunpack.c.l.b16 %v2196
    %v2680 = vunpack.c.l.b16 %v2197
    %v2681 = vunpack.c.l.b16 %v2198
    %v2682 = vunpack.c.l.b16 %v2199
    %v2683 = vunpack.c.l.b16 %v2200
    %v2684 = vunpack.c.l.b16 %v2201
    %v2685 = vunpack.c.l.b16 %v2202
    %v2686 = vunpack.c.l.b16 %v2203
    %v2687 = vunpack.c.l.b16 %v2204
    %v2688 = vunpack.c.l.b16 %v2205
    %v2689 = vunpack.c.l.b16 %v2206
    %v2690 = vunpack.c.l.b16 %v2207
    %v2691 = vunpack.c.l.b16 %v2208
    %v2692 = vunpack.c.l.b16 %v2209
    %v2693 = vpack.c.b16 %v2678, %v2677
    %v2694 = vpack.c.b16 %v2680, %v2679
    %v2695 = vpack.c.b16 %v2682, %v2681
    %v2696 = vpack.c.b16 %v2684, %v2683
    %v2697 = vpack.c.b16 %v2686, %v2685
    %v2698 = vpack.c.b16 %v2688, %v2687
    %v2699 = vpack.c.b16 %v2690, %v2689
    %v2700 = vpack.c.b16 %v2692, %v2691
    %2709 = vmatpush.bf16.msra.mxu0 %v2700
    %2710 = vmatpush.bf16.msra.mxu0 %v2699
    %2711 = vmatpush.bf16.msra.mxu0 %v2698
    %2712 = vmatpush.bf16.msra.mxu0 %v2697
    %2713 = vmatpush.bf16.msra.mxu0 %v2696
    %2714 = vmatpush.bf16.msra.mxu0 %v2695
    %2715 = vmatpush.bf16.msra.mxu0 %v2694
    %2716 = vmatpush.bf16.msra.mxu0 %v2693
    %2717 = vmatmul.bf16.gmra.mxu0 %v2659
    %v2718 = vpop.f32.mrf.mxu0
    %v2719 = vadd.f32 0.0, %v2718
    %v2720 = vpop.f32.mrf.mxu0
    %2721 = vdwg.mxu0
    %v2722 = vpack.c.bf16 %v2271, %v2271
    %v2723 = vpack.c.bf16 %v2335, %v2335
    %v2724 = vpack.c.bf16 %v2399, %v2399
    %v2725 = vpack.c.bf16 %v2463, %v2463
    %v2726 = vpack.c.bf16 %v2527, %v2527
    %v2727 = vpack.c.bf16 %v2591, %v2591
    %v2728 = vpack.c.bf16 %v2655, %v2655
    %v2729 = vpack.c.bf16 %v2719, %v2719
    %v2730 = vld [vmem:[%s9] sm:$0xff]
    %v2731 = vld [vmem:[%s9 + $0x8] sm:$0xf]
    %v2732 = vld [vmem:[%s9 + $0xc] sm:$0xff]
    %v2733 = vld [vmem:[%s9 + $0x14] sm:$0xf]
    %v2734 = vld [vmem:[%s9 + $0x18] sm:$0xff]
    %v2735 = vld [vmem:[%s9 + $0x20] sm:$0xf]
    %v2736 = vld [vmem:[%s9 + $0x24] sm:$0xff]
    %v2737 = vld [vmem:[%s9 + $0x2c] sm:$0xf]
    %v2738 = vld [vmem:[%s9 + $0x30] sm:$0xff]
    %v2739 = vld [vmem:[%s9 + $0x38] sm:$0xf]
    %v2740 = vld [vmem:[%s9 + $0x3c] sm:$0xff]
    %v2741 = vld [vmem:[%s9 + $0x44] sm:$0xf]
    %v2742 = vld [vmem:[%s9 + $0x48] sm:$0xff]
    %v2743 = vld [vmem:[%s9 + $0x50] sm:$0xf]
    %v2744 = vld [vmem:[%s9 + $0x54] sm:$0xff]
    %v2745 = vld [vmem:[%s9 + $0x5c] sm:$0xf]
    %v2746 = vld [vmem:[%s9 + $0x60] sm:$0xff]
    %v2747 = vld [vmem:[%s9 + $0x68] sm:$0xf]
    %v2748 = vld [vmem:[%s9 + $0x6c] sm:$0xff]
    %v2749 = vld [vmem:[%s9 + $0x74] sm:$0xf]
    %v2750 = vld [vmem:[%s9 + $0x78] sm:$0xff]
    %v2751 = vld [vmem:[%s9 + $0x80] sm:$0xf]
    %v2752 = vld [vmem:[%s9 + $0x84] sm:$0xff]
    %v2753 = vld [vmem:[%s9 + $0x8c] sm:$0xf]
    %v2754 = vld [vmem:[%s9 + $0x90] sm:$0xff]
    %v2755 = vld [vmem:[%s9 + $0x98] sm:$0xf]
    %v2756 = vld [vmem:[%s9 + $0x9c] sm:$0xff]
    %v2757 = vld [vmem:[%s9 + $0xa4] sm:$0xf]
    %v2758 = vld [vmem:[%s9 + $0xa8] sm:$0xff]
    %v2759 = vld [vmem:[%s9 + $0xb0] sm:$0xf]
    %v2760 = vld [vmem:[%s9 + $0xb4] sm:$0xff]
    %v2761 = vld [vmem:[%s9 + $0xbc] sm:$0xf]
    %v2762 = vld [vmem:[%s10] sm:$0xff]
    %v2763 = vld [vmem:[%s10 + $0x8] sm:$0xf]
    %v2764 = vld [vmem:[%s10 + $0xc] sm:$0xff]
    %v2765 = vld [vmem:[%s10 + $0x14] sm:$0xf]
    %v2766 = vld [vmem:[%s10 + $0x18] sm:$0xff]
    %v2767 = vld [vmem:[%s10 + $0x20] sm:$0xf]
    %v2768 = vld [vmem:[%s10 + $0x24] sm:$0xff]
    %v2769 = vld [vmem:[%s10 + $0x2c] sm:$0xf]
    %v2770 = vld [vmem:[%s10 + $0x30] sm:$0xff]
    %v2771 = vld [vmem:[%s10 + $0x38] sm:$0xf]
    %v2772 = vld [vmem:[%s10 + $0x3c] sm:$0xff]
    %v2773 = vld [vmem:[%s10 + $0x44] sm:$0xf]
    %v2774 = vld [vmem:[%s10 + $0x48] sm:$0xff]
    %v2775 = vld [vmem:[%s10 + $0x50] sm:$0xf]
    %v2776 = vld [vmem:[%s10 + $0x54] sm:$0xff]
    %v2777 = vld [vmem:[%s10 + $0x5c] sm:$0xf]
    %v2778 = vld [vmem:[%s10 + $0x60] sm:$0xff]
    %v2779 = vld [vmem:[%s10 + $0x68] sm:$0xf]
    %v2780 = vld [vmem:[%s10 + $0x6c] sm:$0xff]
    %v2781 = vld [vmem:[%s10 + $0x74] sm:$0xf]
    %v2782 = vld [vmem:[%s10 + $0x78] sm:$0xff]
    %v2783 = vld [vmem:[%s10 + $0x80] sm:$0xf]
    %v2784 = vld [vmem:[%s10 + $0x84] sm:$0xff]
    %v2785 = vld [vmem:[%s10 + $0x8c] sm:$0xf]
    %v2786 = vld [vmem:[%s10 + $0x90] sm:$0xff]
    %v2787 = vld [vmem:[%s10 + $0x98] sm:$0xf]
    %v2788 = vld [vmem:[%s10 + $0x9c] sm:$0xff]
    %v2789 = vld [vmem:[%s10 + $0xa4] sm:$0xf]
    %v2790 = vld [vmem:[%s10 + $0xa8] sm:$0xff]
    %v2791 = vld [vmem:[%s10 + $0xb0] sm:$0xf]
    %v2792 = vld [vmem:[%s10 + $0xb4] sm:$0xff]
    %v2793 = vld [vmem:[%s10 + $0xbc] sm:$0xf]
    %v2802 = vunpack.c.l.b16 %v2722
    %v2803 = vunpack.c.l.b16 %v2723
    %v2804 = vunpack.c.l.b16 %v2724
    %v2805 = vunpack.c.l.b16 %v2725
    %v2806 = vunpack.c.l.b16 %v2726
    %v2807 = vunpack.c.l.b16 %v2727
    %v2808 = vunpack.c.l.b16 %v2728
    %v2809 = vunpack.c.l.b16 %v2729
    %v2810 = vrot.slane %v2803, 7
    %v2811 = vsel %vm2025, %v2810, %v2802
    %v2812 = vrot.slane %v2804, 6
    %v2813 = vsel %vm2028, %v2812, %v2811
    %v2814 = vrot.slane %v2805, 5
    %v2815 = vsel %vm2031, %v2814, %v2813
    %v2816 = vrot.slane %v2806, 4
    %v2817 = vsel %vm2034, %v2816, %v2815
    %v2818 = vrot.slane %v2807, 3
    %v2819 = vsel %vm2037, %v2818, %v2817
    %v2820 = vrot.slane %v2808, 2
    %v2821 = vsel %vm2040, %v2820, %v2819
    %v2822 = vrot.slane %v2809, 1
    %v2823 = vsel %vm2043, %v2822, %v2821
    %v2824 = vpack.c.b16 %v2823, %v2823
    %v2858 = vunpack.c.l.b16 %v2762
    %v2859 = vunpack.c.h.b16 %v2762
    %v2860 = vunpack.c.l.b16 %v2763
    %v2861 = vunpack.c.l.b16 %v2764
    %v2862 = vunpack.c.h.b16 %v2764
    %v2863 = vunpack.c.l.b16 %v2765
    %v2864 = vunpack.c.l.b16 %v2766
    %v2865 = vunpack.c.h.b16 %v2766
    %v2866 = vunpack.c.l.b16 %v2767
    %v2867 = vunpack.c.l.b16 %v2768
    %v2868 = vunpack.c.h.b16 %v2768
    %v2869 = vunpack.c.l.b16 %v2769
    %v2870 = vunpack.c.l.b16 %v2770
    %v2871 = vunpack.c.h.b16 %v2770
    %v2872 = vunpack.c.l.b16 %v2771
    %v2873 = vunpack.c.l.b16 %v2772
    %v2874 = vunpack.c.h.b16 %v2772
    %v2875 = vunpack.c.l.b16 %v2773
    %v2876 = vunpack.c.l.b16 %v2774
    %v2877 = vunpack.c.h.b16 %v2774
    %v2878 = vunpack.c.l.b16 %v2775
    %v2879 = vunpack.c.l.b16 %v2776
    %v2880 = vunpack.c.h.b16 %v2776
    %v2881 = vunpack.c.l.b16 %v2777
    %v2882 = vunpack.c.l.b16 %v2778
    %v2883 = vunpack.c.h.b16 %v2778
    %v2884 = vunpack.c.l.b16 %v2779
    %v2885 = vunpack.c.l.b16 %v2780
    %v2886 = vunpack.c.h.b16 %v2780
    %v2887 = vunpack.c.l.b16 %v2781
    %v2888 = vunpack.c.l.b16 %v2782
    %v2889 = vunpack.c.h.b16 %v2782
    %v2890 = vunpack.c.l.b16 %v2783
    %v2891 = vunpack.c.l.b16 %v2784
    %v2892 = vunpack.c.h.b16 %v2784
    %v2893 = vunpack.c.l.b16 %v2785
    %v2894 = vunpack.c.l.b16 %v2786
    %v2895 = vunpack.c.h.b16 %v2786
    %v2896 = vunpack.c.l.b16 %v2787
    %v2897 = vunpack.c.l.b16 %v2788
    %v2898 = vunpack.c.h.b16 %v2788
    %v2899 = vunpack.c.l.b16 %v2789
    %v2900 = vunpack.c.l.b16 %v2790
    %v2901 = vunpack.c.h.b16 %v2790
    %v2902 = vunpack.c.l.b16 %v2791
    %v2903 = vunpack.c.l.b16 %v2792
    %v2904 = vunpack.c.h.b16 %v2792
    %v2905 = vunpack.c.l.b16 %v2793
    %v2906 = vpack.c.b16 %v2861, %v2858
    %v2907 = vpack.c.b16 %v2862, %v2859
    %v2908 = vpack.c.b16 %v2863, %v2860
    %v2909 = vpack.c.b16 %v2867, %v2864
    %v2910 = vpack.c.b16 %v2868, %v2865
    %v2911 = vpack.c.b16 %v2869, %v2866
    %v2912 = vpack.c.b16 %v2873, %v2870
    %v2913 = vpack.c.b16 %v2874, %v2871
    %v2914 = vpack.c.b16 %v2875, %v2872
    %v2915 = vpack.c.b16 %v2879, %v2876
    %v2916 = vpack.c.b16 %v2880, %v2877
    %v2917 = vpack.c.b16 %v2881, %v2878
    %v2918 = vpack.c.b16 %v2885, %v2882
    %v2919 = vpack.c.b16 %v2886, %v2883
    %v2920 = vpack.c.b16 %v2887, %v2884
    %v2921 = vpack.c.b16 %v2891, %v2888
    %v2922 = vpack.c.b16 %v2892, %v2889
    %v2923 = vpack.c.b16 %v2893, %v2890
    %v2924 = vpack.c.b16 %v2897, %v2894
    %v2925 = vpack.c.b16 %v2898, %v2895
    %v2926 = vpack.c.b16 %v2899, %v2896
    %v2927 = vpack.c.b16 %v2903, %v2900
    %v2928 = vpack.c.b16 %v2904, %v2901
    %v2929 = vpack.c.b16 %v2905, %v2902
    %2954 = vmatpush.bf16.msra.mxu0 %v2927
    %2955 = vmatpush.bf16.msra.mxu0 %v2924
    %2956 = vmatpush.bf16.msra.mxu0 %v2921
    %2957 = vmatpush.bf16.msra.mxu0 %v2918
    %2958 = vmatpush.bf16.msra.mxu0 %v2915
    %2959 = vmatpush.bf16.msra.mxu0 %v2912
    %2960 = vmatpush.bf16.msra.mxu0 %v2909
    %2961 = vmatpush.bf16.msra.mxu0 %v2906
    %2962 = vmatmul.bf16.gmra.mxu0 %v2824
    %v2963 = vpop.f32.mrf.mxu0
    %v2964 = vadd.f32 0.0, %v2963
    %v2965 = vpop.f32.mrf.mxu0
    %2966 = vdwg.mxu0
    %2967 = vmatpush.bf16.msra.mxu0 %v2928
    %2968 = vmatpush.bf16.msra.mxu0 %v2925
    %2969 = vmatpush.bf16.msra.mxu0 %v2922
    %2970 = vmatpush.bf16.msra.mxu0 %v2919
    %2971 = vmatpush.bf16.msra.mxu0 %v2916
    %2972 = vmatpush.bf16.msra.mxu0 %v2913
    %2973 = vmatpush.bf16.msra.mxu0 %v2910
    %2974 = vmatpush.bf16.msra.mxu0 %v2907
    %2975 = vmatmul.bf16.gmra.mxu0 %v2824
    %v2976 = vpop.f32.mrf.mxu0
    %v2977 = vadd.f32 0.0, %v2976
    %v2978 = vpop.f32.mrf.mxu0
    %2979 = vdwg.mxu0
    %2980 = vmatpush.bf16.msra.mxu0 %v2929
    %2981 = vmatpush.bf16.msra.mxu0 %v2926
    %2982 = vmatpush.bf16.msra.mxu0 %v2923
    %2983 = vmatpush.bf16.msra.mxu0 %v2920
    %2984 = vmatpush.bf16.msra.mxu0 %v2917
    %2985 = vmatpush.bf16.msra.mxu0 %v2914
    %2986 = vmatpush.bf16.msra.mxu0 %v2911
    %2987 = vmatpush.bf16.msra.mxu0 %v2908
    %2988 = vmatmul.bf16.gmra.mxu0 %v2824
    %v2989 = vpop.f32.mrf.mxu0
    %v2990 = vadd.f32 0.0, %v2989
    %v2991 = vpop.f32.mrf.mxu0
    %2992 = vdwg.mxu0
    %v3025 = vunpack.c.l.b16 %v2730
    %v3026 = vunpack.c.h.b16 %v2730
    %v3027 = vunpack.c.l.b16 %v2731
    %v3028 = vunpack.c.l.b16 %v2732
    %v3029 = vunpack.c.h.b16 %v2732
    %v3030 = vunpack.c.l.b16 %v2733
    %v3031 = vunpack.c.l.b16 %v2734
    %v3032 = vunpack.c.h.b16 %v2734
    %v3033 = vunpack.c.l.b16 %v2735
    %v3034 = vunpack.c.l.b16 %v2736
    %v3035 = vunpack.c.h.b16 %v2736
    %v3036 = vunpack.c.l.b16 %v2737
    %v3037 = vunpack.c.l.b16 %v2738
    %v3038 = vunpack.c.h.b16 %v2738
    %v3039 = vunpack.c.l.b16 %v2739
    %v3040 = vunpack.c.l.b16 %v2740
    %v3041 = vunpack.c.h.b16 %v2740
    %v3042 = vunpack.c.l.b16 %v2741
    %v3043 = vunpack.c.l.b16 %v2742
    %v3044 = vunpack.c.h.b16 %v2742
    %v3045 = vunpack.c.l.b16 %v2743
    %v3046 = vunpack.c.l.b16 %v2744
    %v3047 = vunpack.c.h.b16 %v2744
    %v3048 = vunpack.c.l.b16 %v2745
    %v3049 = vunpack.c.l.b16 %v2746
    %v3050 = vunpack.c.h.b16 %v2746
    %v3051 = vunpack.c.l.b16 %v2747
    %v3052 = vunpack.c.l.b16 %v2748
    %v3053 = vunpack.c.h.b16 %v2748
    %v3054 = vunpack.c.l.b16 %v2749
    %v3055 = vunpack.c.l.b16 %v2750
    %v3056 = vunpack.c.h.b16 %v2750
    %v3057 = vunpack.c.l.b16 %v2751
    %v3058 = vunpack.c.l.b16 %v2752
    %v3059 = vunpack.c.h.b16 %v2752
    %v3060 = vunpack.c.l.b16 %v2753
    %v3061 = vunpack.c.l.b16 %v2754
    %v3062 = vunpack.c.h.b16 %v2754
    %v3063 = vunpack.c.l.b16 %v2755
    %v3064 = vunpack.c.l.b16 %v2756
    %v3065 = vunpack.c.h.b16 %v2756
    %v3066 = vunpack.c.l.b16 %v2757
    %v3067 = vunpack.c.l.b16 %v2758
    %v3068 = vunpack.c.h.b16 %v2758
    %v3069 = vunpack.c.l.b16 %v2759
    %v3070 = vunpack.c.l.b16 %v2760
    %v3071 = vunpack.c.h.b16 %v2760
    %v3072 = vunpack.c.l.b16 %v2761
    %v3073 = vpack.c.b16 %v3028, %v3025
    %v3074 = vpack.c.b16 %v3029, %v3026
    %v3075 = vpack.c.b16 %v3030, %v3027
    %v3076 = vpack.c.b16 %v3034, %v3031
    %v3077 = vpack.c.b16 %v3035, %v3032
    %v3078 = vpack.c.b16 %v3036, %v3033
    %v3079 = vpack.c.b16 %v3040, %v3037
    %v3080 = vpack.c.b16 %v3041, %v3038
    %v3081 = vpack.c.b16 %v3042, %v3039
    %v3082 = vpack.c.b16 %v3046, %v3043
    %v3083 = vpack.c.b16 %v3047, %v3044
    %v3084 = vpack.c.b16 %v3048, %v3045
    %v3085 = vpack.c.b16 %v3052, %v3049
    %v3086 = vpack.c.b16 %v3053, %v3050
    %v3087 = vpack.c.b16 %v3054, %v3051
    %v3088 = vpack.c.b16 %v3058, %v3055
    %v3089 = vpack.c.b16 %v3059, %v3056
    %v3090 = vpack.c.b16 %v3060, %v3057
    %v3091 = vpack.c.b16 %v3064, %v3061
    %v3092 = vpack.c.b16 %v3065, %v3062
    %v3093 = vpack.c.b16 %v3066, %v3063
    %v3094 = vpack.c.b16 %v3070, %v3067
    %v3095 = vpack.c.b16 %v3071, %v3068
    %v3096 = vpack.c.b16 %v3072, %v3069
    %3121 = vmatpush.bf16.msra.mxu0 %v3094
    %3122 = vmatpush.bf16.msra.mxu0 %v3091
    %3123 = vmatpush.bf16.msra.mxu0 %v3088
    %3124 = vmatpush.bf16.msra.mxu0 %v3085
    %3125 = vmatpush.bf16.msra.mxu0 %v3082
    %3126 = vmatpush.bf16.msra.mxu0 %v3079
    %3127 = vmatpush.bf16.msra.mxu0 %v3076
    %3128 = vmatpush.bf16.msra.mxu0 %v3073
    %3129 = vmatmul.bf16.gmra.mxu0 %v108
    %v3130 = vpop.f32.mrf.mxu0
    %v3131 = vadd.f32 %v2964, %v3130
    %v3132 = vpop.f32.mrf.mxu0
    %3133 = vdwg.mxu0
    %3134 = vmatpush.bf16.msra.mxu0 %v3095
    %3135 = vmatpush.bf16.msra.mxu0 %v3092
    %3136 = vmatpush.bf16.msra.mxu0 %v3089
    %3137 = vmatpush.bf16.msra.mxu0 %v3086
    %3138 = vmatpush.bf16.msra.mxu0 %v3083
    %3139 = vmatpush.bf16.msra.mxu0 %v3080
    %3140 = vmatpush.bf16.msra.mxu0 %v3077
    %3141 = vmatpush.bf16.msra.mxu0 %v3074
    %3142 = vmatmul.bf16.gmra.mxu0 %v108
    %v3143 = vpop.f32.mrf.mxu0
    %v3144 = vadd.f32 %v2977, %v3143
    %v3145 = vpop.f32.mrf.mxu0
    %3146 = vdwg.mxu0
    %3147 = vmatpush.bf16.msra.mxu0 %v3096
    %3148 = vmatpush.bf16.msra.mxu0 %v3093
    %3149 = vmatpush.bf16.msra.mxu0 %v3090
    %3150 = vmatpush.bf16.msra.mxu0 %v3087
    %3151 = vmatpush.bf16.msra.mxu0 %v3084
    %3152 = vmatpush.bf16.msra.mxu0 %v3081
    %3153 = vmatpush.bf16.msra.mxu0 %v3078
    %3154 = vmatpush.bf16.msra.mxu0 %v3075
    %3155 = vmatmul.bf16.gmra.mxu0 %v108
    %v3156 = vpop.f32.mrf.mxu0
    %v3157 = vadd.f32 %v2990, %v3156
    %v3158 = vpop.f32.mrf.mxu0
    %3159 = vdwg.mxu0
    %v3160 = vld [vmem:[%s11] sm:$0x7]
    %v3162 = vperm.slane %v3160, 0
    %v3163 = vperm.slane %v3160, 1
    %v3164 = vperm.slane %v3160, 2
    %v3168 = vadd.f32 %v3131, %v3162
    %v3169 = vadd.f32 %v3144, %v3163
    %v3170 = vadd.f32 %v3157, %v3164
    %v3171 = vld [vmem:[#allocation3] sm:$0xff]
    %v3172 = vld [vmem:[#allocation3 + $0x8] sm:$0xf]
    %v3173 = vld [vmem:[#allocation3 + $0xc] sm:$0xff]
    %v3174 = vld [vmem:[#allocation3 + $0x14] sm:$0xf]
    %v3175 = vld [vmem:[#allocation3 + $0x18] sm:$0xff]
    %v3176 = vld [vmem:[#allocation3 + $0x20] sm:$0xf]
    %v3177 = vld [vmem:[#allocation3 + $0x24] sm:$0xff]
    %v3178 = vld [vmem:[#allocation3 + $0x2c] sm:$0xf]
    %v3179 = vld [vmem:[#allocation3 + $0x30] sm:$0xff]
    %v3180 = vld [vmem:[#allocation3 + $0x38] sm:$0xf]
    %v3181 = vld [vmem:[#allocation3 + $0x3c] sm:$0xff]
    %v3182 = vld [vmem:[#allocation3 + $0x44] sm:$0xf]
    %v3183 = vld [vmem:[#allocation3 + $0x48] sm:$0xff]
    %v3184 = vld [vmem:[#allocation3 + $0x50] sm:$0xf]
    %v3185 = vld [vmem:[#allocation3 + $0x54] sm:$0xff]
    %v3186 = vld [vmem:[#allocation3 + $0x5c] sm:$0xf]
    %v3187 = vld [vmem:[#allocation3 + $0x60] sm:$0xff]
    %v3188 = vld [vmem:[#allocation3 + $0x68] sm:$0xf]
    %v3189 = vld [vmem:[#allocation3 + $0x6c] sm:$0xff]
    %v3190 = vld [vmem:[#allocation3 + $0x74] sm:$0xf]
    %v3191 = vld [vmem:[#allocation3 + $0x78] sm:$0xff]
    %v3192 = vld [vmem:[#allocation3 + $0x80] sm:$0xf]
    %v3193 = vld [vmem:[#allocation3 + $0x84] sm:$0xff]
    %v3194 = vld [vmem:[#allocation3 + $0x8c] sm:$0xf]
    %v3195 = vld [vmem:[#allocation3 + $0x90] sm:$0xff]
    %v3196 = vld [vmem:[#allocation3 + $0x98] sm:$0xf]
    %v3197 = vld [vmem:[#allocation3 + $0x9c] sm:$0xff]
    %v3198 = vld [vmem:[#allocation3 + $0xa4] sm:$0xf]
    %v3199 = vld [vmem:[#allocation3 + $0xa8] sm:$0xff]
    %v3200 = vld [vmem:[#allocation3 + $0xb0] sm:$0xf]
    %v3201 = vld [vmem:[#allocation3 + $0xb4] sm:$0xff]
    %v3202 = vld [vmem:[#allocation3 + $0xbc] sm:$0xf]
    %v3203 = vld [vmem:[%s13] sm:$0x7]
    %v3205 = vperm.slane %v3203, 0
    %v3206 = vperm.slane %v3203, 1
    %v3207 = vperm.slane %v3203, 2
    %v3243 = vunpack.c.l.b16 %v3171
    %v3244 = vunpack.c.h.b16 %v3171
    %v3245 = vunpack.c.l.b16 %v3172
    %v3246 = vunpack.c.l.b16 %v3173
    %v3247 = vunpack.c.h.b16 %v3173
    %v3248 = vunpack.c.l.b16 %v3174
    %v3249 = vunpack.c.l.b16 %v3175
    %v3250 = vunpack.c.h.b16 %v3175
    %v3251 = vunpack.c.l.b16 %v3176
    %v3252 = vunpack.c.l.b16 %v3177
    %v3253 = vunpack.c.h.b16 %v3177
    %v3254 = vunpack.c.l.b16 %v3178
    %v3255 = vunpack.c.l.b16 %v3179
    %v3256 = vunpack.c.h.b16 %v3179
    %v3257 = vunpack.c.l.b16 %v3180
    %v3258 = vunpack.c.l.b16 %v3181
    %v3259 = vunpack.c.h.b16 %v3181
    %v3260 = vunpack.c.l.b16 %v3182
    %v3261 = vunpack.c.l.b16 %v3183
    %v3262 = vunpack.c.h.b16 %v3183
    %v3263 = vunpack.c.l.b16 %v3184
    %v3264 = vunpack.c.l.b16 %v3185
    %v3265 = vunpack.c.h.b16 %v3185
    %v3266 = vunpack.c.l.b16 %v3186
    %v3267 = vunpack.c.l.b16 %v3187
    %v3268 = vunpack.c.h.b16 %v3187
    %v3269 = vunpack.c.l.b16 %v3188
    %v3270 = vunpack.c.l.b16 %v3189
    %v3271 = vunpack.c.h.b16 %v3189
    %v3272 = vunpack.c.l.b16 %v3190
    %v3273 = vunpack.c.l.b16 %v3191
    %v3274 = vunpack.c.h.b16 %v3191
    %v3275 = vunpack.c.l.b16 %v3192
    %v3276 = vunpack.c.l.b16 %v3193
    %v3277 = vunpack.c.h.b16 %v3193
    %v3278 = vunpack.c.l.b16 %v3194
    %v3279 = vunpack.c.l.b16 %v3195
    %v3280 = vunpack.c.h.b16 %v3195
    %v3281 = vunpack.c.l.b16 %v3196
    %v3282 = vunpack.c.l.b16 %v3197
    %v3283 = vunpack.c.h.b16 %v3197
    %v3284 = vunpack.c.l.b16 %v3198
    %v3285 = vunpack.c.l.b16 %v3199
    %v3286 = vunpack.c.h.b16 %v3199
    %v3287 = vunpack.c.l.b16 %v3200
    %v3288 = vunpack.c.l.b16 %v3201
    %v3289 = vunpack.c.h.b16 %v3201
    %v3290 = vunpack.c.l.b16 %v3202
    %v3291 = vpack.c.b16 %v3246, %v3243
    %v3292 = vpack.c.b16 %v3247, %v3244
    %v3293 = vpack.c.b16 %v3248, %v3245
    %v3294 = vpack.c.b16 %v3252, %v3249
    %v3295 = vpack.c.b16 %v3253, %v3250
    %v3296 = vpack.c.b16 %v3254, %v3251
    %v3297 = vpack.c.b16 %v3258, %v3255
    %v3298 = vpack.c.b16 %v3259, %v3256
    %v3299 = vpack.c.b16 %v3260, %v3257
    %v3300 = vpack.c.b16 %v3264, %v3261
    %v3301 = vpack.c.b16 %v3265, %v3262
    %v3302 = vpack.c.b16 %v3266, %v3263
    %v3303 = vpack.c.b16 %v3270, %v3267
    %v3304 = vpack.c.b16 %v3271, %v3268
    %v3305 = vpack.c.b16 %v3272, %v3269
    %v3306 = vpack.c.b16 %v3276, %v3273
    %v3307 = vpack.c.b16 %v3277, %v3274
    %v3308 = vpack.c.b16 %v3278, %v3275
    %v3309 = vpack.c.b16 %v3282, %v3279
    %v3310 = vpack.c.b16 %v3283, %v3280
    %v3311 = vpack.c.b16 %v3284, %v3281
    %v3312 = vpack.c.b16 %v3288, %v3285
    %v3313 = vpack.c.b16 %v3289, %v3286
    %v3314 = vpack.c.b16 %v3290, %v3287
    %3339 = vmatpush.bf16.msra.mxu0 %v3312
    %3340 = vmatpush.bf16.msra.mxu0 %v3309
    %3341 = vmatpush.bf16.msra.mxu0 %v3306
    %3342 = vmatpush.bf16.msra.mxu0 %v3303
    %3343 = vmatpush.bf16.msra.mxu0 %v3300
    %3344 = vmatpush.bf16.msra.mxu0 %v3297
    %3345 = vmatpush.bf16.msra.mxu0 %v3294
    %3346 = vmatpush.bf16.msra.mxu0 %v3291
    %3347 = vmatmul.bf16.gmra.mxu0 %v110
    %v3348 = vpop.f32.mrf.mxu0
    %v3349 = vadd.f32 %v3205, %v3348
    %v3350 = vpop.f32.mrf.mxu0
    %3351 = vdwg.mxu0
    %3352 = vmatpush.bf16.msra.mxu0 %v3313
    %3353 = vmatpush.bf16.msra.mxu0 %v3310
    %3354 = vmatpush.bf16.msra.mxu0 %v3307
    %3355 = vmatpush.bf16.msra.mxu0 %v3304
    %3356 = vmatpush.bf16.msra.mxu0 %v3301
    %3357 = vmatpush.bf16.msra.mxu0 %v3298
    %3358 = vmatpush.bf16.msra.mxu0 %v3295
    %3359 = vmatpush.bf16.msra.mxu0 %v3292
    %3360 = vmatmul.bf16.gmra.mxu0 %v110
    %v3361 = vpop.f32.mrf.mxu0
    %v3362 = vadd.f32 %v3206, %v3361
    %v3363 = vpop.f32.mrf.mxu0
    %3364 = vdwg.mxu0
    %3365 = vmatpush.bf16.msra.mxu0 %v3314
    %3366 = vmatpush.bf16.msra.mxu0 %v3311
    %3367 = vmatpush.bf16.msra.mxu0 %v3308
    %3368 = vmatpush.bf16.msra.mxu0 %v3305
    %3369 = vmatpush.bf16.msra.mxu0 %v3302
    %3370 = vmatpush.bf16.msra.mxu0 %v3299
    %3371 = vmatpush.bf16.msra.mxu0 %v3296
    %3372 = vmatpush.bf16.msra.mxu0 %v3293
    %3373 = vmatmul.bf16.gmra.mxu0 %v110
    %v3374 = vpop.f32.mrf.mxu0
    %v3375 = vadd.f32 %v3207, %v3374
    %v3376 = vpop.f32.mrf.mxu0
    %3377 = vdwg.mxu0
    %v3378 = vadd.f32 %v3168, %v3349
    %v3379 = vxor.u32 %v3378, 2147483648
    %v3380 = vmul.f32 %v3379, 1.442695
    %v3381 = vpow.pop %v3380
    %v3382 = vadd.f32 %v3381, 1.0
    %v3383 = vrcp.pop %v3382
    %v3384 = vmul.f32 %v3382, %v3383
    %v3385 = vsub.f32 1.0, %v3384
    %v3386 = vmul.f32 %v3383, %v3385
    %v3387 = vadd.f32 %v3383, %v3386
    %vm3388 = vweird.f32 %v3382
    %vm3389 = vweird.f32 %v3383
    %vm3390 = vmor %vm3388, %vm3389
    %v3391 = vsel %vm3390, %v3383, %v3387
    %v3392 = vand.u32 2147483647, %v3382
    %vm3393 = vcmp.eq.f32.partialorder %v3392, 8.507059e+37
    %v3394 = vand.u32 %v3382, 2147483648
    %v3395 = vor.u32 1.1754944e-38, %v3394
    %v3396 = vsel %vm3393, %v3395, %v3391
    %v3397 = vmul.f32 1.0, %v3396
    %v3398 = vadd.f32 %v3169, %v3362
    %v3399 = vxor.u32 %v3398, 2147483648
    %v3400 = vmul.f32 %v3399, 1.442695
    %v3401 = vpow.pop %v3400
    %v3402 = vadd.f32 %v3401, 1.0
    %v3403 = vrcp.pop %v3402
    %v3404 = vmul.f32 %v3402, %v3403
    %v3405 = vsub.f32 1.0, %v3404
    %v3406 = vmul.f32 %v3403, %v3405
    %v3407 = vadd.f32 %v3403, %v3406
    %vm3408 = vweird.f32 %v3402
    %vm3409 = vweird.f32 %v3403
    %vm3410 = vmor %vm3408, %vm3409
    %v3411 = vsel %vm3410, %v3403, %v3407
    %v3412 = vand.u32 2147483647, %v3402
    %vm3413 = vcmp.eq.f32.partialorder %v3412, 8.507059e+37
    %v3414 = vand.u32 %v3402, 2147483648
    %v3415 = vor.u32 1.1754944e-38, %v3414
    %v3416 = vsel %vm3413, %v3415, %v3411
    %v3417 = vmul.f32 1.0, %v3416
    %v3418 = vmul.f32 %v3397, %v3375
    %v3419 = vadd.f32 %v3170, %v3418
    %v3420 = vtanh.pop %v3419
    %v3421 = vsub.f32 1.0, %v3417
    %v3422 = vmul.f32 %v3421, %v3420
    %v3423 = vmul.f32 %v3417, %v109
    %v3424 = vadd.f32 %v3422, %v3423
    %3425 = vst [vmem:[%s18] sm:$0xff] %v3424
    %v3426 = vpack.c.bf16 %v3424, %v3424
    %v3427 = vld [vmem:[#allocation5] sm:$0xf]
    %v3428 = vld [vmem:[#allocation5 + $0x4] sm:$0xf]
    %v3429 = vld [vmem:[#allocation5 + $0x8] sm:$0xf]
    %v3430 = vld [vmem:[#allocation5 + $0xc] sm:$0xf]
    %v3431 = vld [vmem:[#allocation5 + $0x10] sm:$0xf]
    %v3432 = vld [vmem:[#allocation5 + $0x14] sm:$0xf]
    %v3433 = vld [vmem:[#allocation5 + $0x18] sm:$0xf]
    %v3434 = vld [vmem:[#allocation5 + $0x1c] sm:$0xf]
    %v3435 = vld [vmem:[#allocation5 + $0x20] sm:$0xf]
    %v3436 = vld [vmem:[#allocation5 + $0x24] sm:$0xf]
    %v3437 = vld [vmem:[#allocation5 + $0x28] sm:$0xf]
    %v3438 = vld [vmem:[#allocation5 + $0x2c] sm:$0xf]
    %v3439 = vld [vmem:[#allocation5 + $0x30] sm:$0xf]
    %v3440 = vld [vmem:[#allocation5 + $0x34] sm:$0xf]
    %v3441 = vld [vmem:[#allocation5 + $0x38] sm:$0xf]
    %v3442 = vld [vmem:[#allocation5 + $0x3c] sm:$0xf]
    %v3443 = vld [vmem:[#allocation7] sm:$0xf]
    %v3444 = vld [vmem:[#allocation7 + $0x4] sm:$0xf]
    %v3445 = vld [vmem:[#allocation7 + $0x8] sm:$0xf]
    %v3446 = vld [vmem:[#allocation7 + $0xc] sm:$0xf]
    %v3447 = vld [vmem:[#allocation7 + $0x10] sm:$0xf]
    %v3448 = vld [vmem:[#allocation7 + $0x14] sm:$0xf]
    %v3449 = vld [vmem:[#allocation7 + $0x18] sm:$0xf]
    %v3450 = vld [vmem:[#allocation7 + $0x1c] sm:$0xf]
    %v3451 = vld [vmem:[#allocation7 + $0x20] sm:$0xf]
    %v3452 = vld [vmem:[#allocation7 + $0x24] sm:$0xf]
    %v3453 = vld [vmem:[#allocation7 + $0x28] sm:$0xf]
    %v3454 = vld [vmem:[#allocation7 + $0x2c] sm:$0xf]
    %v3455 = vld [vmem:[#allocation7 + $0x30] sm:$0xf]
    %v3456 = vld [vmem:[#allocation7 + $0x34] sm:$0xf]
    %v3457 = vld [vmem:[#allocation7 + $0x38] sm:$0xf]
    %v3458 = vld [vmem:[#allocation7 + $0x3c] sm:$0xf]
    %v3475 = vunpack.c.l.b16 %v3443
    %v3476 = vunpack.c.l.b16 %v3444
    %v3477 = vunpack.c.l.b16 %v3445
    %v3478 = vunpack.c.l.b16 %v3446
    %v3479 = vunpack.c.l.b16 %v3447
    %v3480 = vunpack.c.l.b16 %v3448
    %v3481 = vunpack.c.l.b16 %v3449
    %v3482 = vunpack.c.l.b16 %v3450
    %v3483 = vunpack.c.l.b16 %v3451
    %v3484 = vunpack.c.l.b16 %v3452
    %v3485 = vunpack.c.l.b16 %v3453
    %v3486 = vunpack.c.l.b16 %v3454
    %v3487 = vunpack.c.l.b16 %v3455
    %v3488 = vunpack.c.l.b16 %v3456
    %v3489 = vunpack.c.l.b16 %v3457
    %v3490 = vunpack.c.l.b16 %v3458
    %v3491 = vpack.c.b16 %v3476, %v3475
    %v3492 = vpack.c.b16 %v3478, %v3477
    %v3493 = vpack.c.b16 %v3480, %v3479
    %v3494 = vpack.c.b16 %v3482, %v3481
    %v3495 = vpack.c.b16 %v3484, %v3483
    %v3496 = vpack.c.b16 %v3486, %v3485
    %v3497 = vpack.c.b16 %v3488, %v3487
    %v3498 = vpack.c.b16 %v3490, %v3489
    %3507 = vmatpush.bf16.msra.mxu0 %v3498
    %3508 = vmatpush.bf16.msra.mxu0 %v3497
    %3509 = vmatpush.bf16.msra.mxu0 %v3496
    %3510 = vmatpush.bf16.msra.mxu0 %v3495
    %3511 = vmatpush.bf16.msra.mxu0 %v3494
    %3512 = vmatpush.bf16.msra.mxu0 %v3493
    %3513 = vmatpush.bf16.msra.mxu0 %v3492
    %3514 = vmatpush.bf16.msra.mxu0 %v3491
    %3515 = vmatmul.bf16.gmra.mxu0 %v2824
    %v3516 = vpop.f32.mrf.mxu0
    %v3517 = vadd.f32 0.0, %v3516
    %v3518 = vpop.f32.mrf.mxu0
    %3519 = vdwg.mxu0
    %v3536 = vunpack.c.l.b16 %v3427
    %v3537 = vunpack.c.l.b16 %v3428
    %v3538 = vunpack.c.l.b16 %v3429
    %v3539 = vunpack.c.l.b16 %v3430
    %v3540 = vunpack.c.l.b16 %v3431
    %v3541 = vunpack.c.l.b16 %v3432
    %v3542 = vunpack.c.l.b16 %v3433
    %v3543 = vunpack.c.l.b16 %v3434
    %v3544 = vunpack.c.l.b16 %v3435
    %v3545 = vunpack.c.l.b16 %v3436
    %v3546 = vunpack.c.l.b16 %v3437
    %v3547 = vunpack.c.l.b16 %v3438
    %v3548 = vunpack.c.l.b16 %v3439
    %v3549 = vunpack.c.l.b16 %v3440
    %v3550 = vunpack.c.l.b16 %v3441
    %v3551 = vunpack.c.l.b16 %v3442
    %v3552 = vpack.c.b16 %v3537, %v3536
    %v3553 = vpack.c.b16 %v3539, %v3538
    %v3554 = vpack.c.b16 %v3541, %v3540
    %v3555 = vpack.c.b16 %v3543, %v3542
    %v3556 = vpack.c.b16 %v3545, %v3544
    %v3557 = vpack.c.b16 %v3547, %v3546
    %v3558 = vpack.c.b16 %v3549, %v3548
    %v3559 = vpack.c.b16 %v3551, %v3550
    %3568 = vmatpush.bf16.msra.mxu0 %v3559
    %3569 = vmatpush.bf16.msra.mxu0 %v3558
    %3570 = vmatpush.bf16.msra.mxu0 %v3557
    %3571 = vmatpush.bf16.msra.mxu0 %v3556
    %3572 = vmatpush.bf16.msra.mxu0 %v3555
    %3573 = vmatpush.bf16.msra.mxu0 %v3554
    %3574 = vmatpush.bf16.msra.mxu0 %v3553
    %3575 = vmatpush.bf16.msra.mxu0 %v3552
    %3576 = vmatmul.bf16.gmra.mxu0 %v3426
    %v3577 = vpop.f32.mrf.mxu0
    %v3578 = vadd.f32 %v3517, %v3577
    %v3579 = vpop.f32.mrf.mxu0
    %3580 = vdwg.mxu0
    %v3581 = vld [vmem:[%s16] sm:$0x1]
    %v3583 = vperm.slane %v3581, 0
    %v3585 = vadd.f32 %v3578, %v3583
    %3586 = vmax.xlane.f32.xlu0 %v3585
    %v3587 = vpop.xlane.xlu0 %3586
    %v3588 = vsub.f32 %v3585, %v3587
    %v3589 = vmul.f32 %v3588, 1.442695
    %v3590 = vpow.pop %v3589
    %3591 = vadd.xlane.f32.xlu0 %v3590
    %v3592 = vpop.xlane.xlu0 %3591
    %v3593 = vlog2.pop %v3592
    %v3594 = vmul.f32 %v3593, 0.6931472
    %v3595 = vadd.f32 %v3594, %v3587
    %v3596 = vsub.f32 %v3585, %v3595
    %3597 = vst [vmem:[%s17] sm:$0xff] %v3596
    // Predicated region
    $region82: #{attn_decoder_forward.1} parent=1 // pred_check
      _
    $region83: #{attn_decoder_forward.1} parent=1 // pred_check_branch
      %3599 = sbr.rel (0) target = $region85
    $region84: #{attn_decoder_forward.1} parent=1 // pred_region
      _
    $region85: #{attn_decoder_forward.1} parent=1 // pred_fallthru
      _
    // Predicated region
    $region86: #{attn_decoder_forward.1} parent=1 // pred_check
      _
    $region87: #{attn_decoder_forward.1} parent=1 // pred_check_branch
      %3601 = sbr.rel (0) target = $region89
    $region88: #{attn_decoder_forward.1} parent=1 // pred_region
      _
    $region89: #{attn_decoder_forward.1} parent=1 // pred_fallthru
      _
    // Predicated region
    $region90: #{attn_decoder_forward.1} parent=1 // pred_check
      _
    $region91: #{attn_decoder_forward.1} parent=1 // pred_check_branch
      %3603 = sbr.rel (0) target = $region93
    $region92: #{attn_decoder_forward.1} parent=1 // pred_region
      _
    $region93: #{attn_decoder_forward.1} parent=1 // pred_fallthru
      _
    // Predicated region
    $region94: #{attn_decoder_forward.1} parent=1 // pred_check
      _
    $region95: #{attn_decoder_forward.1} parent=1 // pred_check_branch
      %3605 = sbr.rel (0) target = $region97
    $region96: #{attn_decoder_forward.1} parent=1 // pred_region
      _
    $region97: #{attn_decoder_forward.1} parent=1 // pred_fallthru
      _
    // Predicated region
    $region98: #{attn_decoder_forward.1} parent=1 // pred_check
      _
    $region99: #{attn_decoder_forward.1} parent=1 // pred_check_branch
      %3607 = sbr.rel (0) target = $region101
    $region100: #{attn_decoder_forward.1} parent=1 // pred_region
      _
    $region101: #{attn_decoder_forward.1} parent=1 // pred_fallthru
      _
    // Predicated region
    $region102: #{attn_decoder_forward.1} parent=1 // pred_check
      _
    $region103: #{attn_decoder_forward.1} parent=1 // pred_check_branch
      %3609 = sbr.rel (0) target = $region105
    $region104: #{attn_decoder_forward.1} parent=1 // pred_region
      _
    $region105: #{attn_decoder_forward.1} parent=1 // pred_fallthru
      _
    %3610 = vsyncpa [#allocation4], 1
    %3611 = vsyncpa [#allocation6], 1

</llo_original>
